<compile_context>
chip_gen: v7x
topology: tpu7x:2x2x1
jax: 0.10.0
libtpu: 0.0.40
codegen_flags: <defaults>
</compile_context>

<pallas_src>
import functools

import jax
import jax.numpy as jnp
import numpy as np
from jax import lax
from jax.experimental import pallas as pl
from jax.experimental.pallas import tpu as pltpu

EPS = 1e-5


# ---------------------------------------------------------------------------
# Kernel 1: per-channel BN statistics -> folded scale/shift  (tiled reduction)
# ---------------------------------------------------------------------------
def _bn_stats_kernel(x_ref, gamma_ref, beta_ref, o_ref, acc_ref, *, inv_count):
    @pl.when(pl.program_id(0) == 0)
    def _init():
        acc_ref[...] = jnp.zeros_like(acc_ref)

    x = x_ref[0].astype(jnp.float32)                 # (H, W, C) — f32 accumulation
    s1 = jnp.sum(jnp.sum(x, axis=0), axis=0, keepdims=True)        # (1, C)
    s2 = jnp.sum(jnp.sum(x * x, axis=0), axis=0, keepdims=True)    # (1, C)
    acc_ref[0:1, :] = acc_ref[0:1, :] + s1
    acc_ref[1:2, :] = acc_ref[1:2, :] + s2

    @pl.when(pl.program_id(0) == pl.num_programs(0) - 1)
    def _finalize():
        mean = acc_ref[0:1, :] * inv_count
        var = acc_ref[1:2, :] * inv_count - mean * mean            # biased variance
        scale = gamma_ref[...] * lax.rsqrt(var + EPS)
        o_ref[0:1, :] = scale
        o_ref[1:2, :] = beta_ref[...] - mean * scale


def bn_scale_shift(x, gamma, beta):
    """Training-mode BN folded to per-channel scale/shift: y = x*scale + shift."""
    n, h, w, c = x.shape
    kernel = functools.partial(_bn_stats_kernel, inv_count=1.0 / float(n * h * w))
    return pl.pallas_call(
        kernel,
        grid=(n,),
        in_specs=[
            pl.BlockSpec((1, h, w, c), lambda i: (i, 0, 0, 0)),
            pl.BlockSpec((1, c), lambda i: (0, 0)),
            pl.BlockSpec((1, c), lambda i: (0, 0)),
        ],
        out_specs=pl.BlockSpec((2, c), lambda i: (0, 0)),
        out_shape=jax.ShapeDtypeStruct((2, c), jnp.float32),
        scratch_shapes=[pltpu.VMEM((2, c), jnp.float32)],
        compiler_params=pltpu.CompilerParams(dimension_semantics=("arbitrary",)),
    )(x, gamma.reshape(1, c).astype(jnp.float32),
      beta.reshape(1, c).astype(jnp.float32))


# ---------------------------------------------------------------------------
# Kernel 2: fused  BN(scale/shift)+ReLU  ->  3x3 conv (+ shortcut, + residual)
# ---------------------------------------------------------------------------
def _preact_conv_kernel(*refs, stride, shortcut_mode, add_residual,
                        compute_dtype, orig_hw):
    it = iter(refs)
    x_ref = next(it)                                  # (1, s*s, hp2, wp2, cin) phase-split, zero-padded
    ss_ref = next(it)                                 # (2, cin)  [scale; shift]
    w_ref = next(it)                                  # (3, 3, cin, cout) in compute_dtype
    wsc_ref = next(it) if shortcut_mode == "conv" else None
    res_ref = next(it) if add_residual else None
    o_ref = next(it)                                  # (1, ho, wo, cout)
    sc_ref = next(it) if shortcut_mode is not None else None

    ho, wo, cout = o_ref.shape[1], o_ref.shape[2], o_ref.shape[3]
    cin = x_ref.shape[-1]
    h, w = orig_hw
    hp, wp = h + 2, w + 2                             # zero-padded extent (original coords)
    s = stride

    ss = ss_ref[...]
    scale = ss[0:1, :]                                # (1, cin) broadcasts over (ho, wo, cin)
    shift = ss[1:2, :]

    acc = jnp.zeros((ho * wo, cout), jnp.float32)
    for kh in range(3):                               # 9-tap accumulation: no HBM im2col
        for kw in range(3):
            phase = (kh % s) * s + (kw % s)
            a = x_ref[0, phase, pl.ds(kh // s, ho), pl.ds(kw // s, wo), :]
            a = a.astype(jnp.float32)
            # fused BN (affine) + ReLU on the raw input tile (VPU rides under MXU)
            a = jnp.maximum(a * scale + shift, 0.0)
            # PyTorch pads AFTER bn+relu, so positions mapping into the zero-padding
            # ring must contribute exactly 0 (mask only for taps that can touch it).
            touches_pad = (kh == 0 or kw == 0
                           or kh + s * (ho - 1) == hp - 1
                           or kw + s * (wo - 1) == wp - 1)
            if touches_pad:
                ih = kh + s * lax.broadcasted_iota(jnp.int32, (ho, wo, 1), 0)
                iw = kw + s * lax.broadcasted_iota(jnp.int32, (ho, wo, 1), 1)
                border = (ih == 0) | (ih == hp - 1) | (iw == 0) | (iw == wp - 1)
                a = jnp.where(border, 0.0, a)

            a2 = a.reshape(ho * wo, cin).astype(compute_dtype)
            acc = acc + jnp.dot(a2, w_ref[kh, kw],
                                preferred_element_type=jnp.float32)

            if kh == 1 and kw == 1 and sc_ref is not None:
                # centre tap == relu(bn(x)) sampled at the conv stride, which is
                # exactly the 1x1-shortcut / identity-shortcut input -> share its DMA.
                if shortcut_mode == "conv":
                    sc = jnp.dot(a2, wsc_ref[...],
                                 preferred_element_type=jnp.float32)
                    sc_ref[0] = sc.reshape(ho, wo, sc_ref.shape[3]).astype(sc_ref.dtype)
                else:  # identity shortcut (stride == 1, cin == cout)
                    sc_ref[0] = a.astype(sc_ref.dtype)

    out = acc.reshape(ho, wo, cout)
    if res_ref is not None:                           # fused residual add (conv2 + shortcut)
        out = out + res_ref[0].astype(jnp.float32)
    o_ref[0] = out.astype(o_ref.dtype)


def _phase_layout(x, stride):
    """Zero-pad by 1 (conv padding) and split H/W into `stride` phases so every
    3x3 tap becomes a unit-stride window inside the kernel."""
    n, h, w, c = x.shape
    xp = jnp.pad(x, ((0, 0), (1, 1), (1, 1), (0, 0)))
    hp, wp = h + 2, w + 2
    hp2 = -(-hp // stride)
    wp2 = -(-wp // stride)
    xp = jnp.pad(xp, ((0, 0), (0, hp2 * stride - hp), (0, wp2 * stride - wp), (0, 0)))
    xp = xp.reshape(n, hp2, stride, wp2, stride, c)
    xp = xp.transpose(0, 2, 4, 1, 3, 5).reshape(n, stride * stride, hp2, wp2, c)
    return xp


def fused_preact_conv3x3(x, scale_shift, w, stride, *, shortcut_mode=None,
                         shortcut_w=None, residual=None,
                         compute_dtype=jnp.bfloat16, out_dtype=None):
    """out = conv3x3(relu(x*scale+shift), stride, pad=1)  [+ residual]
    and optionally also returns the (1x1-conv | identity) shortcut of relu(bn(x))."""
    n, h, ww, cin = x.shape
    cout = w.shape[-1]
    ho = (h - 1) // stride + 1
    wo = (ww - 1) // stride + 1
    out_dtype = x.dtype if out_dtype is None else out_dtype

    xph = _phase_layout(x, stride)                    # (n, s*s, hp2, wp2, cin)
    _, nphase, hp2, wp2, _ = xph.shape

    in_specs = [
        pl.BlockSpec((1, nphase, hp2, wp2, cin), lambda i: (i, 0, 0, 0, 0)),
        pl.BlockSpec((2, cin), lambda i: (0, 0)),
        pl.BlockSpec((3, 3, cin, cout), lambda i: (0, 0, 0, 0)),
    ]
    args = [xph, scale_shift, w.astype(compute_dtype)]

    csc = None
    if shortcut_mode == "conv":
        csc = shortcut_w.shape[-1]
        in_specs.append(pl.BlockSpec((cin, csc), lambda i: (0, 0)))
        args.append(shortcut_w.astype(compute_dtype))
    elif shortcut_mode == "identity":
        csc = cin
    if residual is not None:
        in_specs.append(pl.BlockSpec((1, ho, wo, cout), lambda i: (i, 0, 0, 0)))
        args.append(residual)

    out_shapes = [jax.ShapeDtypeStruct((n, ho, wo, cout), out_dtype)]
    out_specs = [pl.BlockSpec((1, ho, wo, cout), lambda i: (i, 0, 0, 0))]
    if shortcut_mode is not None:
        out_shapes.append(jax.ShapeDtypeStruct((n, ho, wo, csc), jnp.float32))
        out_specs.append(pl.BlockSpec((1, ho, wo, csc), lambda i: (i, 0, 0, 0)))

    kernel = functools.partial(
        _preact_conv_kernel, stride=stride, shortcut_mode=shortcut_mode,
        add_residual=residual is not None, compute_dtype=compute_dtype,
        orig_hw=(h, ww))

    multi = len(out_shapes) > 1
    return pl.pallas_call(
        kernel,
        grid=(n,),
        in_specs=in_specs,
        out_specs=tuple(out_specs) if multi else out_specs[0],
        out_shape=tuple(out_shapes) if multi else out_shapes[0],
        compiler_params=pltpu.CompilerParams(dimension_semantics=("parallel",)),
    )(*args)


# ---------------------------------------------------------------------------
# PreActBlock forward (matches the PyTorch module's semantics)
# ---------------------------------------------------------------------------
def preact_block_forward(x_nchw, params, stride, compute_dtype=jnp.bfloat16):
    x = jnp.transpose(x_nchw, (0, 2, 3, 1))          # NCHW -> NHWC
    in_planes = x.shape[-1]

    ss1 = bn_scale_shift(x, params["bn1_gamma"], params["bn1_beta"])
    if "w_shortcut" in params:
        h1, shortcut = fused_preact_conv3x3(
            x, ss1, params["w_conv1"], stride,
            shortcut_mode="conv",
            shortcut_w=params["w_shortcut"].reshape(in_planes, -1),
            compute_dtype=compute_dtype)
    else:
        # identity shortcut (stride == 1, in_planes == planes): shortcut is
        # relu(bn1(x)) itself, emitted from the centre tap of conv1's kernel.
        h1, shortcut = fused_preact_conv3x3(
            x, ss1, params["w_conv1"], stride,
            shortcut_mode="identity",
            compute_dtype=compute_dtype)

    ss2 = bn_scale_shift(h1, params["bn2_gamma"], params["bn2_beta"])
    out = fused_preact_conv3x3(
        h1, ss2, params["w_conv2"], 1,
        residual=shortcut, compute_dtype=compute_dtype)
    return jnp.transpose(out, (0, 3, 1, 2))          # NHWC -> NCHW


# ---------------------------------------------------------------------------
# Pure-JAX reference for verification
# ---------------------------------------------------------------------------
def reference_forward(x_nchw, params, stride):
    x = jnp.transpose(x_nchw, (0, 2, 3, 1))

    def bn_relu_ref(x, g, b):
        m = x.mean(axis=(0, 1, 2), keepdims=True)
        v = ((x - m) ** 2).mean(axis=(0, 1, 2), keepdims=True)
        return jnp.maximum((x - m) / jnp.sqrt(v + EPS) * g + b, 0.0)

    dn = ("NHWC", "HWIO", "NHWC")
    out = bn_relu_ref(x, params["bn1_gamma"], params["bn1_beta"])
    if "w_shortcut" in params:
        shortcut = lax.conv_general_dilated(
            out, params["w_shortcut"], (stride, stride), "VALID", dimension_numbers=dn)
    else:
        shortcut = out
    out = lax.conv_general_dilated(
        out, params["w_conv1"], (stride, stride), ((1, 1), (1, 1)), dimension_numbers=dn)
    out = bn_relu_ref(out, params["bn2_gamma"], params["bn2_beta"])
    out = lax.conv_general_dilated(
        out, params["w_conv2"], (1, 1), ((1, 1), (1, 1)), dimension_numbers=dn)
    out = out + shortcut
    return jnp.transpose(out, (0, 3, 1, 2))


# ---------------------------------------------------------------------------
if __name__ == "__main__":
    key = jax.random.PRNGKey(0)
    ks = jax.random.split(key, 16)

    # --- Case 1: stride-2 block with a 1x1-conv shortcut ------------------
    N, Cin, H, W = 2, 4, 16, 16
    planes = 8
    stride = 2
    x = jax.random.normal(ks[0], (N, Cin, H, W), dtype=jnp.float32)
    params = {
        "bn1_gamma":  1.0 + 0.1 * jax.random.normal(ks[1], (Cin,), dtype=jnp.float32),
        "bn1_beta":   0.1 * jax.random.normal(ks[2], (Cin,), dtype=jnp.float32),
        "w_conv1":    0.2 * jax.random.normal(ks[3], (3, 3, Cin, planes), dtype=jnp.float32),
        "bn2_gamma":  1.0 + 0.1 * jax.random.normal(ks[4], (planes,), dtype=jnp.float32),
        "bn2_beta":   0.1 * jax.random.normal(ks[5], (planes,), dtype=jnp.float32),
        "w_conv2":    0.2 * jax.random.normal(ks[6], (3, 3, planes, planes), dtype=jnp.float32),
        "w_shortcut": 0.2 * jax.random.normal(ks[7], (1, 1, Cin, planes), dtype=jnp.float32),
    }
    ref = reference_forward(x, params, stride)

    fwd_bf16 = jax.jit(functools.partial(preact_block_forward, stride=stride,
                                         compute_dtype=jnp.bfloat16))
    out = jax.block_until_ready(fwd_bf16(x, params))
    assert out.shape == (N, planes, H // stride, W // stride), out.shape
    np.testing.assert_allclose(np.asarray(out), np.asarray(ref), rtol=5e-2, atol=5e-2)

    fwd_f32 = jax.jit(functools.partial(preact_block_forward, stride=stride,
                                        compute_dtype=jnp.float32))
    out32 = jax.block_until_ready(fwd_f32(x, params))
    np.testing.assert_allclose(np.asarray(out32), np.asarray(ref), rtol=1e-2, atol=1e-2)

    # --- Case 2: stride-1 block with identity shortcut --------------------
    N2, C2, H2 = 2, 8, 8
    x2 = jax.random.normal(ks[8], (N2, C2, H2, H2), dtype=jnp.float32)
    params2 = {
        "bn1_gamma": 1.0 + 0.1 * jax.random.normal(ks[9], (C2,), dtype=jnp.float32),
        "bn1_beta":  0.1 * jax.random.normal(ks[10], (C2,), dtype=jnp.float32),
        "w_conv1":   0.2 * jax.random.normal(ks[11], (3, 3, C2, C2), dtype=jnp.float32),
        "bn2_gamma": 1.0 + 0.1 * jax.random.normal(ks[12], (C2,), dtype=jnp.float32),
        "bn2_beta":  0.1 * jax.random.normal(ks[13], (C2,), dtype=jnp.float32),
        "w_conv2":   0.2 * jax.random.normal(ks[14], (3, 3, C2, C2), dtype=jnp.float32),
    }
    ref2 = reference_forward(x2, params2, 1)
    fwd_id = jax.jit(functools.partial(preact_block_forward, stride=1,
                                       compute_dtype=jnp.bfloat16))
    out2 = jax.block_until_ready(fwd_id(x2, params2))
    assert out2.shape == (N2, C2, H2, H2), out2.shape
    np.testing.assert_allclose(np.asarray(out2), np.asarray(ref2), rtol=5e-2, atol=5e-2)

    print("KERNEL_OK")
</pallas_src>

<mosaic_0001>
module attributes {stable_mosaic.version = 11 : i64} {
  func.func @_bn_stats_kernel(%arg0: i32, %arg1: memref<1x16x16x4xf32, #tpu.memory_space<vmem>>, %arg2: memref<1x4xf32, #tpu.memory_space<vmem>>, %arg3: memref<1x4xf32, #tpu.memory_space<vmem>>, %arg4: memref<2x4xf32, #tpu.memory_space<vmem>>, %arg5: memref<2x4xf32, #tpu.memory_space<vmem>>) attributes {dimension_semantics = [#tpu.dimension_semantics<arbitrary>], iteration_bounds = array<i64: 2>, scalar_prefetch = 0 : i64, scratch_operands = 1 : i64, tpu.core_type = #tpu.core_type<tc>, window_params = [{transform_indices = @transform_0, window_bounds = array<i64: 1, 16, 16, 4>}, {pipeline_mode = #tpu.pipeline_mode<synchronous>, transform_indices = @transform_1, window_bounds = array<i64: 1, 4>}, {pipeline_mode = #tpu.pipeline_mode<synchronous>, transform_indices = @transform_2, window_bounds = array<i64: 1, 4>}, {pipeline_mode = #tpu.pipeline_mode<synchronous>, transform_indices = @transform_3, window_bounds = array<i64: 2, 4>}]} {
    %c0_i32 = arith.constant 0 : i32
    %0 = arith.cmpi eq, %arg0, %c0_i32 : i32
    %1 = arith.extui %0 : i1 to i32
    %c0_i32_0 = arith.constant 0 : i32
    %2 = arith.cmpi ne, %1, %c0_i32_0 : i32
    scf.if %2 {
      %cst_15 = arith.constant 0.000000e+00 : f32
      %21 = vector.broadcast %cst_15 : f32 to vector<2x4xf32>
      %c0_16 = arith.constant 0 : index
      %c0_17 = arith.constant 0 : index
      %22 = vector.load %arg5[%c0_16, %c0_17] : memref<2x4xf32, #tpu.memory_space<vmem>>, vector<2x4xf32>
      tpu.vector_store %arg5[%c0_16, %c0_17], %21 {strides = array<i32>} : memref<2x4xf32, #tpu.memory_space<vmem>>, vector<2x4xf32>,
    } else {
    }
    %c0 = arith.constant 0 : index
    %c0_1 = arith.constant 0 : index
    %c0_2 = arith.constant 0 : index
    %c0_3 = arith.constant 0 : index
    %3 = vector.load %arg1[%c0, %c0_1, %c0_2, %c0_3] : memref<1x16x16x4xf32, #tpu.memory_space<vmem>>, vector<1x16x16x4xf32>
    %4 = vector.shape_cast %3 : vector<1x16x16x4xf32> to vector<16x16x4xf32>
    %cst = arith.constant dense<0.000000e+00> : vector<16x4xf32>
    %5 = vector.multi_reduction <add>, %4, %cst [0] : vector<16x16x4xf32> to vector<16x4xf32>
    %cst_4 = arith.constant dense<0.000000e+00> : vector<4xf32>
    %6 = vector.multi_reduction <add>, %5, %cst_4 [0] : vector<16x4xf32> to vector<4xf32>
    %7 = vector.shape_cast %6 : vector<4xf32> to vector<1x4xf32>
    %8 = arith.mulf %4, %4 : vector<16x16x4xf32>
    %cst_5 = arith.constant dense<0.000000e+00> : vector<16x4xf32>
    %9 = vector.multi_reduction <add>, %8, %cst_5 [0] : vector<16x16x4xf32> to vector<16x4xf32>
    %cst_6 = arith.constant dense<0.000000e+00> : vector<4xf32>
    %10 = vector.multi_reduction <add>, %9, %cst_6 [0] : vector<16x4xf32> to vector<4xf32>
    %11 = vector.shape_cast %10 : vector<4xf32> to vector<1x4xf32>
    %c0_7 = arith.constant 0 : index
    %c0_8 = arith.constant 0 : index
    %12 = vector.load %arg5[%c0_7, %c0_8] : memref<2x4xf32, #tpu.memory_space<vmem>>, vector<1x4xf32>
    %13 = arith.addf %12, %7 : vector<1x4xf32>
    %c0_9 = arith.constant 0 : index
    %c0_10 = arith.constant 0 : index
    %14 = vector.load %arg5[%c0_9, %c0_10] : memref<2x4xf32, #tpu.memory_space<vmem>>, vector<1x4xf32>
    tpu.vector_store %arg5[%c0_9, %c0_10], %13 {strides = array<i32>} : memref<2x4xf32, #tpu.memory_space<vmem>>, vector<1x4xf32>,
    %c1 = arith.constant 1 : index
    %c0_11 = arith.constant 0 : index
    %15 = vector.load %arg5[%c1, %c0_11] : memref<2x4xf32, #tpu.memory_space<vmem>>, vector<1x4xf32>
    %16 = arith.addf %15, %11 : vector<1x4xf32>
    %c1_12 = arith.constant 1 : index
    %c0_13 = arith.constant 0 : index
    %17 = vector.load %arg5[%c1_12, %c0_13] : memref<2x4xf32, #tpu.memory_space<vmem>>, vector<1x4xf32>
    tpu.vector_store %arg5[%c1_12, %c0_13], %16 {strides = array<i32>} : memref<2x4xf32, #tpu.memory_space<vmem>>, vector<1x4xf32>,
    %c1_i32 = arith.constant 1 : i32
    %18 = arith.cmpi eq, %arg0, %c1_i32 : i32
    %19 = arith.extui %18 : i1 to i32
    %c0_i32_14 = arith.constant 0 : i32
    %20 = arith.cmpi ne, %19, %c0_i32_14 : i32
    scf.if %20 {
      %c0_15 = arith.constant 0 : index
      %c0_16 = arith.constant 0 : index
      %21 = vector.load %arg5[%c0_15, %c0_16] : memref<2x4xf32, #tpu.memory_space<vmem>>, vector<1x4xf32>
      %cst_17 = arith.constant 0.001953125 : f32
      %22 = vector.broadcast %cst_17 : f32 to vector<1x4xf32>
      %23 = arith.mulf %21, %22 : vector<1x4xf32>
      %c1_18 = arith.constant 1 : index
      %c0_19 = arith.constant 0 : index
      %24 = vector.load %arg5[%c1_18, %c0_19] : memref<2x4xf32, #tpu.memory_space<vmem>>, vector<1x4xf32>
      %cst_20 = arith.constant 0.001953125 : f32
      %25 = vector.broadcast %cst_20 : f32 to vector<1x4xf32>
      %26 = arith.mulf %24, %25 : vector<1x4xf32>
      %27 = arith.mulf %23, %23 : vector<1x4xf32>
      %28 = arith.subf %26, %27 : vector<1x4xf32>
      %c0_21 = arith.constant 0 : index
      %c0_22 = arith.constant 0 : index
      %29 = vector.load %arg2[%c0_21, %c0_22] : memref<1x4xf32, #tpu.memory_space<vmem>>, vector<1x4xf32>
      %cst_23 = arith.constant 9.99999974E-6 : f32
      %30 = vector.broadcast %cst_23 : f32 to vector<1x4xf32>
      %31 = arith.addf %28, %30 : vector<1x4xf32>
      %32 = math.rsqrt %31 : vector<1x4xf32>
      %33 = arith.mulf %29, %32 : vector<1x4xf32>
      %c0_24 = arith.constant 0 : index
      %c0_25 = arith.constant 0 : index
      %34 = vector.load %arg4[%c0_24, %c0_25] : memref<2x4xf32, #tpu.memory_space<vmem>>, vector<1x4xf32>
      tpu.vector_store %arg4[%c0_24, %c0_25], %33 {strides = array<i32>} : memref<2x4xf32, #tpu.memory_space<vmem>>, vector<1x4xf32>,
      %c0_26 = arith.constant 0 : index
      %c0_27 = arith.constant 0 : index
      %35 = vector.load %arg3[%c0_26, %c0_27] : memref<1x4xf32, #tpu.memory_space<vmem>>, vector<1x4xf32>
      %36 = arith.mulf %23, %33 : vector<1x4xf32>
      %37 = arith.subf %35, %36 : vector<1x4xf32>
      %c1_28 = arith.constant 1 : index
      %c0_29 = arith.constant 0 : index
      %38 = vector.load %arg4[%c1_28, %c0_29] : memref<2x4xf32, #tpu.memory_space<vmem>>, vector<1x4xf32>
      tpu.vector_store %arg4[%c1_28, %c0_29], %37 {strides = array<i32>} : memref<2x4xf32, #tpu.memory_space<vmem>>, vector<1x4xf32>,
    } else {
    }
    return
  }
  func.func @transform_0(%arg0: i32) -> (i32, i32, i32, i32) {
    %c0_i32 = arith.constant 0 : i32
    %c0_i32_0 = arith.constant 0 : i32
    %c0_i32_1 = arith.constant 0 : i32
    %c0_i32_2 = arith.constant 0 : i32
    return %arg0, %c0_i32, %c0_i32_0, %c0_i32_1 : i32, i32, i32, i32
  }
  func.func @transform_1(%arg0: i32) -> (i32, i32) {
    %c0_i32 = arith.constant 0 : i32
    %c0_i32_0 = arith.constant 0 : i32
    %c0_i32_1 = arith.constant 0 : i32
    return %c0_i32, %c0_i32_0 : i32, i32
  }
  func.func @transform_2(%arg0: i32) -> (i32, i32) {
    %c0_i32 = arith.constant 0 : i32
    %c0_i32_0 = arith.constant 0 : i32
    %c0_i32_1 = arith.constant 0 : i32
    return %c0_i32, %c0_i32_0 : i32, i32
  }
  func.func @transform_3(%arg0: i32) -> (i32, i32) {
    %c0_i32 = arith.constant 0 : i32
    %c0_i32_0 = arith.constant 0 : i32
    %c0_i32_1 = arith.constant 0 : i32
    return %c0_i32, %c0_i32_0 : i32, i32
  }
}

module attributes {stable_mosaic.version = 11 : i64} {
  func.func @_preact_conv_kernel(%arg0: i32, %arg1: memref<1x4x9x9x4xf32, #tpu.memory_space<vmem>>, %arg2: memref<2x4xf32, #tpu.memory_space<vmem>>, %arg3: memref<3x3x4x8xbf16, #tpu.memory_space<vmem>>, %arg4: memref<4x8xbf16, #tpu.memory_space<vmem>>, %arg5: memref<1x8x8x8xf32, #tpu.memory_space<vmem>>, %arg6: memref<1x8x8x8xf32, #tpu.memory_space<vmem>>) attributes {dimension_semantics = [#tpu.dimension_semantics<parallel>], iteration_bounds = array<i64: 2>, scalar_prefetch = 0 : i64, scratch_operands = 0 : i64, tpu.core_type = #tpu.core_type<tc>, window_params = [{transform_indices = @transform_0, window_bounds = array<i64: 1, 4, 9, 9, 4>}, {pipeline_mode = #tpu.pipeline_mode<synchronous>, transform_indices = @transform_1, window_bounds = array<i64: 2, 4>}, {pipeline_mode = #tpu.pipeline_mode<synchronous>, transform_indices = @transform_2, window_bounds = array<i64: 3, 3, 4, 8>}, {pipeline_mode = #tpu.pipeline_mode<synchronous>, transform_indices = @transform_3, window_bounds = array<i64: 4, 8>}, {transform_indices = @transform_4, window_bounds = array<i64: 1, 8, 8, 8>}, {transform_indices = @transform_5, window_bounds = array<i64: 1, 8, 8, 8>}]} {
    %c0 = arith.constant 0 : index
    %c0_0 = arith.constant 0 : index
    %0 = vector.load %arg2[%c0, %c0_0] : memref<2x4xf32, #tpu.memory_space<vmem>>, vector<2x4xf32>
    %1 = vector.extract_strided_slice %0 {offsets = [0, 0], sizes = [1, 4], strides = [1, 1]} : vector<2x4xf32> to vector<1x4xf32>
    %2 = vector.extract_strided_slice %0 {offsets = [1, 0], sizes = [1, 4], strides = [1, 1]} : vector<2x4xf32> to vector<1x4xf32>
    %cst = arith.constant 0.000000e+00 : f32
    %3 = vector.broadcast %cst : f32 to vector<64x8xf32>
    %c0_1 = arith.constant 0 : index
    %c0_2 = arith.constant 0 : index
    %c0_3 = arith.constant 0 : index
    %c0_4 = arith.constant 0 : index
    %c0_5 = arith.constant 0 : index
    %4 = vector.load %arg1[%c0_1, %c0_2, %c0_3, %c0_4, %c0_5] : memref<1x4x9x9x4xf32, #tpu.memory_space<vmem>>, vector<1x1x8x8x4xf32>
    %5 = vector.shape_cast %4 : vector<1x1x8x8x4xf32> to vector<8x8x4xf32>
    %6 = vector.shape_cast %1 : vector<1x4xf32> to vector<1x1x4xf32>
    %7 = vector.broadcast %6 : vector<1x1x4xf32> to vector<8x8x4xf32>
    %8 = arith.mulf %5, %7 : vector<8x8x4xf32>
    %9 = vector.shape_cast %2 : vector<1x4xf32> to vector<1x1x4xf32>
    %10 = vector.broadcast %9 : vector<1x1x4xf32> to vector<8x8x4xf32>
    %11 = arith.addf %8, %10 : vector<8x8x4xf32>
    %cst_6 = arith.constant 0.000000e+00 : f32
    %12 = vector.broadcast %cst_6 : f32 to vector<8x8x4xf32>
    %13 = arith.maximumf %11, %12 : vector<8x8x4xf32>
    %14 = tpu.iota {dimensions = array<i32: 0>} : vector<8x8x1xi32>
    %c2_i32 = arith.constant 2 : i32
    %15 = vector.broadcast %c2_i32 : i32 to vector<8x8x1xi32>
    %16 = arith.muli %15, %14 : vector<8x8x1xi32>
    %c0_i32 = arith.constant 0 : i32
    %17 = vector.broadcast %c0_i32 : i32 to vector<8x8x1xi32>
    %18 = arith.addi %17, %16 : vector<8x8x1xi32>
    %19 = tpu.iota {dimensions = array<i32: 1>} : vector<8x8x1xi32>
    %c2_i32_7 = arith.constant 2 : i32
    %20 = vector.broadcast %c2_i32_7 : i32 to vector<8x8x1xi32>
    %21 = arith.muli %20, %19 : vector<8x8x1xi32>
    %c0_i32_8 = arith.constant 0 : i32
    %22 = vector.broadcast %c0_i32_8 : i32 to vector<8x8x1xi32>
    %23 = arith.addi %22, %21 : vector<8x8x1xi32>
    %c0_i32_9 = arith.constant 0 : i32
    %24 = vector.broadcast %c0_i32_9 : i32 to vector<8x8x1xi32>
    %25 = arith.cmpi eq, %18, %24 : vector<8x8x1xi32>
    %c17_i32 = arith.constant 17 : i32
    %26 = vector.broadcast %c17_i32 : i32 to vector<8x8x1xi32>
    %27 = arith.cmpi eq, %18, %26 : vector<8x8x1xi32>
    %28 = arith.ori %25, %27 : vector<8x8x1xi1>
    %c0_i32_10 = arith.constant 0 : i32
    %29 = vector.broadcast %c0_i32_10 : i32 to vector<8x8x1xi32>
    %30 = arith.cmpi eq, %23, %29 : vector<8x8x1xi32>
    %31 = arith.ori %28, %30 : vector<8x8x1xi1>
    %c17_i32_11 = arith.constant 17 : i32
    %32 = vector.broadcast %c17_i32_11 : i32 to vector<8x8x1xi32>
    %33 = arith.cmpi eq, %23, %32 : vector<8x8x1xi32>
    %34 = arith.ori %31, %33 : vector<8x8x1xi1>
    %cst_12 = arith.constant 0.000000e+00 : f32
    %35 = vector.shape_cast %34 : vector<8x8x1xi1> to vector<8x8x1xi1>
    %36 = vector.broadcast %35 : vector<8x8x1xi1> to vector<8x8x4xi1>
    %37 = vector.broadcast %cst_12 : f32 to vector<8x8x4xf32>
    %38 = arith.select %36, %37, %13 : vector<8x8x4xi1>, vector<8x8x4xf32>
    %39 = vector.shape_cast %38 : vector<8x8x4xf32> to vector<64x4xf32>
    %40 = arith.truncf %39 : vector<64x4xf32> to vector<64x4xbf16>
    %c0_13 = arith.constant 0 : index
    %c0_14 = arith.constant 0 : index
    %c0_15 = arith.constant 0 : index
    %c0_16 = arith.constant 0 : index
    %41 = vector.load %arg3[%c0_13, %c0_14, %c0_15, %c0_16] : memref<3x3x4x8xbf16, #tpu.memory_space<vmem>>, vector<1x1x4x8xbf16>
    %42 = vector.shape_cast %41 : vector<1x1x4x8xbf16> to vector<4x8xbf16>
    %cst_17 = arith.constant dense<0.000000e+00> : vector<64x8xf32>
    %43 = tpu.matmul %40, %42, %cst_17 {dimension_numbers = #tpu.dot_dimension_numbers<[1], [0], [0], [1], [0, 0, 1, 1], [], []>} : vector<64x4xbf16>, vector<4x8xbf16>, vector<64x8xf32> -> vector<64x8xf32>
    %44 = arith.addf %3, %43 : vector<64x8xf32>
    %c0_18 = arith.constant 0 : index
    %c1 = arith.constant 1 : index
    %c0_19 = arith.constant 0 : index
    %c0_20 = arith.constant 0 : index
    %c0_21 = arith.constant 0 : index
    %45 = vector.load %arg1[%c0_18, %c1, %c0_19, %c0_20, %c0_21] : memref<1x4x9x9x4xf32, #tpu.memory_space<vmem>>, vector<1x1x8x8x4xf32>
    %46 = vector.shape_cast %45 : vector<1x1x8x8x4xf32> to vector<8x8x4xf32>
    %47 = vector.shape_cast %1 : vector<1x4xf32> to vector<1x1x4xf32>
    %48 = vector.broadcast %47 : vector<1x1x4xf32> to vector<8x8x4xf32>
    %49 = arith.mulf %46, %48 : vector<8x8x4xf32>
    %50 = vector.shape_cast %2 : vector<1x4xf32> to vector<1x1x4xf32>
    %51 = vector.broadcast %50 : vector<1x1x4xf32> to vector<8x8x4xf32>
    %52 = arith.addf %49, %51 : vector<8x8x4xf32>
    %cst_22 = arith.constant 0.000000e+00 : f32
    %53 = vector.broadcast %cst_22 : f32 to vector<8x8x4xf32>
    %54 = arith.maximumf %52, %53 : vector<8x8x4xf32>
    %55 = tpu.iota {dimensions = array<i32: 0>} : vector<8x8x1xi32>
    %c2_i32_23 = arith.constant 2 : i32
    %56 = vector.broadcast %c2_i32_23 : i32 to vector<8x8x1xi32>
    %57 = arith.muli %56, %55 : vector<8x8x1xi32>
    %c0_i32_24 = arith.constant 0 : i32
    %58 = vector.broadcast %c0_i32_24 : i32 to vector<8x8x1xi32>
    %59 = arith.addi %58, %57 : vector<8x8x1xi32>
    %60 = tpu.iota {dimensions = array<i32: 1>} : vector<8x8x1xi32>
    %c2_i32_25 = arith.constant 2 : i32
    %61 = vector.broadcast %c2_i32_25 : i32 to vector<8x8x1xi32>
    %62 = arith.muli %61, %60 : vector<8x8x1xi32>
    %c1_i32 = arith.constant 1 : i32
    %63 = vector.broadcast %c1_i32 : i32 to vector<8x8x1xi32>
    %64 = arith.addi %63, %62 : vector<8x8x1xi32>
    %c0_i32_26 = arith.constant 0 : i32
    %65 = vector.broadcast %c0_i32_26 : i32 to vector<8x8x1xi32>
    %66 = arith.cmpi eq, %59, %65 : vector<8x8x1xi32>
    %c17_i32_27 = arith.constant 17 : i32
    %67 = vector.broadcast %c17_i32_27 : i32 to vector<8x8x1xi32>
    %68 = arith.cmpi eq, %59, %67 : vector<8x8x1xi32>
    %69 = arith.ori %66, %68 : vector<8x8x1xi1>
    %c0_i32_28 = arith.constant 0 : i32
    %70 = vector.broadcast %c0_i32_28 : i32 to vector<8x8x1xi32>
    %71 = arith.cmpi eq, %64, %70 : vector<8x8x1xi32>
    %72 = arith.ori %69, %71 : vector<8x8x1xi1>
    %c17_i32_29 = arith.constant 17 : i32
    %73 = vector.broadcast %c17_i32_29 : i32 to vector<8x8x1xi32>
    %74 = arith.cmpi eq, %64, %73 : vector<8x8x1xi32>
    %75 = arith.ori %72, %74 : vector<8x8x1xi1>
    %cst_30 = arith.constant 0.000000e+00 : f32
    %76 = vector.shape_cast %75 : vector<8x8x1xi1> to vector<8x8x1xi1>
    %77 = vector.broadcast %76 : vector<8x8x1xi1> to vector<8x8x4xi1>
    %78 = vector.broadcast %cst_30 : f32 to vector<8x8x4xf32>
    %79 = arith.select %77, %78, %54 : vector<8x8x4xi1>, vector<8x8x4xf32>
    %80 = vector.shape_cast %79 : vector<8x8x4xf32> to vector<64x4xf32>
    %81 = arith.truncf %80 : vector<64x4xf32> to vector<64x4xbf16>
    %c0_31 = arith.constant 0 : index
    %c1_32 = arith.constant 1 : index
    %c0_33 = arith.constant 0 : index
    %c0_34 = arith.constant 0 : index
    %82 = vector.load %arg3[%c0_31, %c1_32, %c0_33, %c0_34] : memref<3x3x4x8xbf16, #tpu.memory_space<vmem>>, vector<1x1x4x8xbf16>
    %83 = vector.shape_cast %82 : vector<1x1x4x8xbf16> to vector<4x8xbf16>
    %cst_35 = arith.constant dense<0.000000e+00> : vector<64x8xf32>
    %84 = tpu.matmul %81, %83, %cst_35 {dimension_numbers = #tpu.dot_dimension_numbers<[1], [0], [0], [1], [0, 0, 1, 1], [], []>} : vector<64x4xbf16>, vector<4x8xbf16>, vector<64x8xf32> -> vector<64x8xf32>
    %85 = arith.addf %44, %84 : vector<64x8xf32>
    %c0_36 = arith.constant 0 : index
    %c0_37 = arith.constant 0 : index
    %c0_38 = arith.constant 0 : index
    %c1_39 = arith.constant 1 : index
    %c0_40 = arith.constant 0 : index
    %86 = vector.load %arg1[%c0_36, %c0_37, %c0_38, %c1_39, %c0_40] : memref<1x4x9x9x4xf32, #tpu.memory_space<vmem>>, vector<1x1x8x8x4xf32>
    %87 = vector.shape_cast %86 : vector<1x1x8x8x4xf32> to vector<8x8x4xf32>
    %88 = vector.shape_cast %1 : vector<1x4xf32> to vector<1x1x4xf32>
    %89 = vector.broadcast %88 : vector<1x1x4xf32> to vector<8x8x4xf32>
    %90 = arith.mulf %87, %89 : vector<8x8x4xf32>
    %91 = vector.shape_cast %2 : vector<1x4xf32> to vector<1x1x4xf32>
    %92 = vector.broadcast %91 : vector<1x1x4xf32> to vector<8x8x4xf32>
    %93 = arith.addf %90, %92 : vector<8x8x4xf32>
    %cst_41 = arith.constant 0.000000e+00 : f32
    %94 = vector.broadcast %cst_41 : f32 to vector<8x8x4xf32>
    %95 = arith.maximumf %93, %94 : vector<8x8x4xf32>
    %96 = tpu.iota {dimensions = array<i32: 0>} : vector<8x8x1xi32>
    %c2_i32_42 = arith.constant 2 : i32
    %97 = vector.broadcast %c2_i32_42 : i32 to vector<8x8x1xi32>
    %98 = arith.muli %97, %96 : vector<8x8x1xi32>
    %c0_i32_43 = arith.constant 0 : i32
    %99 = vector.broadcast %c0_i32_43 : i32 to vector<8x8x1xi32>
    %100 = arith.addi %99, %98 : vector<8x8x1xi32>
    %101 = tpu.iota {dimensions = array<i32: 1>} : vector<8x8x1xi32>
    %c2_i32_44 = arith.constant 2 : i32
    %102 = vector.broadcast %c2_i32_44 : i32 to vector<8x8x1xi32>
    %103 = arith.muli %102, %101 : vector<8x8x1xi32>
    %c2_i32_45 = arith.constant 2 : i32
    %104 = vector.broadcast %c2_i32_45 : i32 to vector<8x8x1xi32>
    %105 = arith.addi %104, %103 : vector<8x8x1xi32>
    %c0_i32_46 = arith.constant 0 : i32
    %106 = vector.broadcast %c0_i32_46 : i32 to vector<8x8x1xi32>
    %107 = arith.cmpi eq, %100, %106 : vector<8x8x1xi32>
    %c17_i32_47 = arith.constant 17 : i32
    %108 = vector.broadcast %c17_i32_47 : i32 to vector<8x8x1xi32>
    %109 = arith.cmpi eq, %100, %108 : vector<8x8x1xi32>
    %110 = arith.ori %107, %109 : vector<8x8x1xi1>
    %c0_i32_48 = arith.constant 0 : i32
    %111 = vector.broadcast %c0_i32_48 : i32 to vector<8x8x1xi32>
    %112 = arith.cmpi eq, %105, %111 : vector<8x8x1xi32>
    %113 = arith.ori %110, %112 : vector<8x8x1xi1>
    %c17_i32_49 = arith.constant 17 : i32
    %114 = vector.broadcast %c17_i32_49 : i32 to vector<8x8x1xi32>
    %115 = arith.cmpi eq, %105, %114 : vector<8x8x1xi32>
    %116 = arith.ori %113, %115 : vector<8x8x1xi1>
    %cst_50 = arith.constant 0.000000e+00 : f32
    %117 = vector.shape_cast %116 : vector<8x8x1xi1> to vector<8x8x1xi1>
    %118 = vector.broadcast %117 : vector<8x8x1xi1> to vector<8x8x4xi1>
    %119 = vector.broadcast %cst_50 : f32 to vector<8x8x4xf32>
    %120 = arith.select %118, %119, %95 : vector<8x8x4xi1>, vector<8x8x4xf32>
    %121 = vector.shape_cast %120 : vector<8x8x4xf32> to vector<64x4xf32>
    %122 = arith.truncf %121 : vector<64x4xf32> to vector<64x4xbf16>
    %c0_51 = arith.constant 0 : index
    %c2 = arith.constant 2 : index
    %c0_52 = arith.constant 0 : index
    %c0_53 = arith.constant 0 : index
    %123 = vector.load %arg3[%c0_51, %c2, %c0_52, %c0_53] : memref<3x3x4x8xbf16, #tpu.memory_space<vmem>>, vector<1x1x4x8xbf16>
    %124 = vector.shape_cast %123 : vector<1x1x4x8xbf16> to vector<4x8xbf16>
    %cst_54 = arith.constant dense<0.000000e+00> : vector<64x8xf32>
    %125 = tpu.matmul %122, %124, %cst_54 {dimension_numbers = #tpu.dot_dimension_numbers<[1], [0], [0], [1], [0, 0, 1, 1], [], []>} : vector<64x4xbf16>, vector<4x8xbf16>, vector<64x8xf32> -> vector<64x8xf32>
    %126 = arith.addf %85, %125 : vector<64x8xf32>
    %c0_55 = arith.constant 0 : index
    %c2_56 = arith.constant 2 : index
    %c0_57 = arith.constant 0 : index
    %c0_58 = arith.constant 0 : index
    %c0_59 = arith.constant 0 : index
    %127 = vector.load %arg1[%c0_55, %c2_56, %c0_57, %c0_58, %c0_59] : memref<1x4x9x9x4xf32, #tpu.memory_space<vmem>>, vector<1x1x8x8x4xf32>
    %128 = vector.shape_cast %127 : vector<1x1x8x8x4xf32> to vector<8x8x4xf32>
    %129 = vector.shape_cast %1 : vector<1x4xf32> to vector<1x1x4xf32>
    %130 = vector.broadcast %129 : vector<1x1x4xf32> to vector<8x8x4xf32>
    %131 = arith.mulf %128, %130 : vector<8x8x4xf32>
    %132 = vector.shape_cast %2 : vector<1x4xf32> to vector<1x1x4xf32>
    %133 = vector.broadcast %132 : vector<1x1x4xf32> to vector<8x8x4xf32>
    %134 = arith.addf %131, %133 : vector<8x8x4xf32>
    %cst_60 = arith.constant 0.000000e+00 : f32
    %135 = vector.broadcast %cst_60 : f32 to vector<8x8x4xf32>
    %136 = arith.maximumf %134, %135 : vector<8x8x4xf32>
    %137 = tpu.iota {dimensions = array<i32: 0>} : vector<8x8x1xi32>
    %c2_i32_61 = arith.constant 2 : i32
    %138 = vector.broadcast %c2_i32_61 : i32 to vector<8x8x1xi32>
    %139 = arith.muli %138, %137 : vector<8x8x1xi32>
    %c1_i32_62 = arith.constant 1 : i32
    %140 = vector.broadcast %c1_i32_62 : i32 to vector<8x8x1xi32>
    %141 = arith.addi %140, %139 : vector<8x8x1xi32>
    %142 = tpu.iota {dimensions = array<i32: 1>} : vector<8x8x1xi32>
    %c2_i32_63 = arith.constant 2 : i32
    %143 = vector.broadcast %c2_i32_63 : i32 to vector<8x8x1xi32>
    %144 = arith.muli %143, %142 : vector<8x8x1xi32>
    %c0_i32_64 = arith.constant 0 : i32
    %145 = vector.broadcast %c0_i32_64 : i32 to vector<8x8x1xi32>
    %146 = arith.addi %145, %144 : vector<8x8x1xi32>
    %c0_i32_65 = arith.constant 0 : i32
    %147 = vector.broadcast %c0_i32_65 : i32 to vector<8x8x1xi32>
    %148 = arith.cmpi eq, %141, %147 : vector<8x8x1xi32>
    %c17_i32_66 = arith.constant 17 : i32
    %149 = vector.broadcast %c17_i32_66 : i32 to vector<8x8x1xi32>
    %150 = arith.cmpi eq, %141, %149 : vector<8x8x1xi32>
    %151 = arith.ori %148, %150 : vector<8x8x1xi1>
    %c0_i32_67 = arith.constant 0 : i32
    %152 = vector.broadcast %c0_i32_67 : i32 to vector<8x8x1xi32>
    %153 = arith.cmpi eq, %146, %152 : vector<8x8x1xi32>
    %154 = arith.ori %151, %153 : vector<8x8x1xi1>
    %c17_i32_68 = arith.constant 17 : i32
    %155 = vector.broadcast %c17_i32_68 : i32 to vector<8x8x1xi32>
    %156 = arith.cmpi eq, %146, %155 : vector<8x8x1xi32>
    %157 = arith.ori %154, %156 : vector<8x8x1xi1>
    %cst_69 = arith.constant 0.000000e+00 : f32
    %158 = vector.shape_cast %157 : vector<8x8x1xi1> to vector<8x8x1xi1>
    %159 = vector.broadcast %158 : vector<8x8x1xi1> to vector<8x8x4xi1>
    %160 = vector.broadcast %cst_69 : f32 to vector<8x8x4xf32>
    %161 = arith.select %159, %160, %136 : vector<8x8x4xi1>, vector<8x8x4xf32>
    %162 = vector.shape_cast %161 : vector<8x8x4xf32> to vector<64x4xf32>
    %163 = arith.truncf %162 : vector<64x4xf32> to vector<64x4xbf16>
    %c1_70 = arith.constant 1 : index
    %c0_71 = arith.constant 0 : index
    %c0_72 = arith.constant 0 : index
    %c0_73 = arith.constant 0 : index
    %164 = vector.load %arg3[%c1_70, %c0_71, %c0_72, %c0_73] : memref<3x3x4x8xbf16, #tpu.memory_space<vmem>>, vector<1x1x4x8xbf16>
    %165 = vector.shape_cast %164 : vector<1x1x4x8xbf16> to vector<4x8xbf16>
    %cst_74 = arith.constant dense<0.000000e+00> : vector<64x8xf32>
    %166 = tpu.matmul %163, %165, %cst_74 {dimension_numbers = #tpu.dot_dimension_numbers<[1], [0], [0], [1], [0, 0, 1, 1], [], []>} : vector<64x4xbf16>, vector<4x8xbf16>, vector<64x8xf32> -> vector<64x8xf32>
    %167 = arith.addf %126, %166 : vector<64x8xf32>
    %c0_75 = arith.constant 0 : index
    %c3 = arith.constant 3 : index
    %c0_76 = arith.constant 0 : index
    %c0_77 = arith.constant 0 : index
    %c0_78 = arith.constant 0 : index
    %168 = vector.load %arg1[%c0_75, %c3, %c0_76, %c0_77, %c0_78] : memref<1x4x9x9x4xf32, #tpu.memory_space<vmem>>, vector<1x1x8x8x4xf32>
    %169 = vector.shape_cast %168 : vector<1x1x8x8x4xf32> to vector<8x8x4xf32>
    %170 = vector.shape_cast %1 : vector<1x4xf32> to vector<1x1x4xf32>
    %171 = vector.broadcast %170 : vector<1x1x4xf32> to vector<8x8x4xf32>
    %172 = arith.mulf %169, %171 : vector<8x8x4xf32>
    %173 = vector.shape_cast %2 : vector<1x4xf32> to vector<1x1x4xf32>
    %174 = vector.broadcast %173 : vector<1x1x4xf32> to vector<8x8x4xf32>
    %175 = arith.addf %172, %174 : vector<8x8x4xf32>
    %cst_79 = arith.constant 0.000000e+00 : f32
    %176 = vector.broadcast %cst_79 : f32 to vector<8x8x4xf32>
    %177 = arith.maximumf %175, %176 : vector<8x8x4xf32>
    %178 = vector.shape_cast %177 : vector<8x8x4xf32> to vector<64x4xf32>
    %179 = arith.truncf %178 : vector<64x4xf32> to vector<64x4xbf16>
    %c1_80 = arith.constant 1 : index
    %c1_81 = arith.constant 1 : index
    %c0_82 = arith.constant 0 : index
    %c0_83 = arith.constant 0 : index
    %180 = vector.load %arg3[%c1_80, %c1_81, %c0_82, %c0_83] : memref<3x3x4x8xbf16, #tpu.memory_space<vmem>>, vector<1x1x4x8xbf16>
    %181 = vector.shape_cast %180 : vector<1x1x4x8xbf16> to vector<4x8xbf16>
    %cst_84 = arith.constant dense<0.000000e+00> : vector<64x8xf32>
    %182 = tpu.matmul %179, %181, %cst_84 {dimension_numbers = #tpu.dot_dimension_numbers<[1], [0], [0], [1], [0, 0, 1, 1], [], []>} : vector<64x4xbf16>, vector<4x8xbf16>, vector<64x8xf32> -> vector<64x8xf32>
    %183 = arith.addf %167, %182 : vector<64x8xf32>
    %c0_85 = arith.constant 0 : index
    %c0_86 = arith.constant 0 : index
    %184 = vector.load %arg4[%c0_85, %c0_86] : memref<4x8xbf16, #tpu.memory_space<vmem>>, vector<4x8xbf16>
    %cst_87 = arith.constant dense<0.000000e+00> : vector<64x8xf32>
    %185 = tpu.matmul %179, %184, %cst_87 {dimension_numbers = #tpu.dot_dimension_numbers<[1], [0], [0], [1], [0, 0, 1, 1], [], []>} : vector<64x4xbf16>, vector<4x8xbf16>, vector<64x8xf32> -> vector<64x8xf32>
    %186 = vector.shape_cast %185 : vector<64x8xf32> to vector<8x8x8xf32>
    %c0_88 = arith.constant 0 : index
    %c0_89 = arith.constant 0 : index
    %c0_90 = arith.constant 0 : index
    %c0_91 = arith.constant 0 : index
    %187 = vector.load %arg6[%c0_88, %c0_89, %c0_90, %c0_91] : memref<1x8x8x8xf32, #tpu.memory_space<vmem>>, vector<1x8x8x8xf32>
    %188 = vector.shape_cast %187 : vector<1x8x8x8xf32> to vector<8x8x8xf32>
    %189 = vector.shape_cast %186 : vector<8x8x8xf32> to vector<1x8x8x8xf32>
    tpu.vector_store %arg6[%c0_88, %c0_89, %c0_90, %c0_91], %189 {strides = array<i32>} : memref<1x8x8x8xf32, #tpu.memory_space<vmem>>, vector<1x8x8x8xf32>,
    %c0_92 = arith.constant 0 : index
    %c2_93 = arith.constant 2 : index
    %c0_94 = arith.constant 0 : index
    %c1_95 = arith.constant 1 : index
    %c0_96 = arith.constant 0 : index
    %190 = vector.load %arg1[%c0_92, %c2_93, %c0_94, %c1_95, %c0_96] : memref<1x4x9x9x4xf32, #tpu.memory_space<vmem>>, vector<1x1x8x8x4xf32>
    %191 = vector.shape_cast %190 : vector<1x1x8x8x4xf32> to vector<8x8x4xf32>
    %192 = vector.shape_cast %1 : vector<1x4xf32> to vector<1x1x4xf32>
    %193 = vector.broadcast %192 : vector<1x1x4xf32> to vector<8x8x4xf32>
    %194 = arith.mulf %191, %193 : vector<8x8x4xf32>
    %195 = vector.shape_cast %2 : vector<1x4xf32> to vector<1x1x4xf32>
    %196 = vector.broadcast %195 : vector<1x1x4xf32> to vector<8x8x4xf32>
    %197 = arith.addf %194, %196 : vector<8x8x4xf32>
    %cst_97 = arith.constant 0.000000e+00 : f32
    %198 = vector.broadcast %cst_97 : f32 to vector<8x8x4xf32>
    %199 = arith.maximumf %197, %198 : vector<8x8x4xf32>
    %200 = vector.shape_cast %199 : vector<8x8x4xf32> to vector<64x4xf32>
    %201 = arith.truncf %200 : vector<64x4xf32> to vector<64x4xbf16>
    %c1_98 = arith.constant 1 : index
    %c2_99 = arith.constant 2 : index
    %c0_100 = arith.constant 0 : index
    %c0_101 = arith.constant 0 : index
    %202 = vector.load %arg3[%c1_98, %c2_99, %c0_100, %c0_101] : memref<3x3x4x8xbf16, #tpu.memory_space<vmem>>, vector<1x1x4x8xbf16>
    %203 = vector.shape_cast %202 : vector<1x1x4x8xbf16> to vector<4x8xbf16>
    %cst_102 = arith.constant dense<0.000000e+00> : vector<64x8xf32>
    %204 = tpu.matmul %201, %203, %cst_102 {dimension_numbers = #tpu.dot_dimension_numbers<[1], [0], [0], [1], [0, 0, 1, 1], [], []>} : vector<64x4xbf16>, vector<4x8xbf16>, vector<64x8xf32> -> vector<64x8xf32>
    %205 = arith.addf %183, %204 : vector<64x8xf32>
    %c0_103 = arith.constant 0 : index
    %c0_104 = arith.constant 0 : index
    %c1_105 = arith.constant 1 : index
    %c0_106 = arith.constant 0 : index
    %c0_107 = arith.constant 0 : index
    %206 = vector.load %arg1[%c0_103, %c0_104, %c1_105, %c0_106, %c0_107] : memref<1x4x9x9x4xf32, #tpu.memory_space<vmem>>, vector<1x1x8x8x4xf32>
    %207 = vector.shape_cast %206 : vector<1x1x8x8x4xf32> to vector<8x8x4xf32>
    %208 = vector.shape_cast %1 : vector<1x4xf32> to vector<1x1x4xf32>
    %209 = vector.broadcast %208 : vector<1x1x4xf32> to vector<8x8x4xf32>
    %210 = arith.mulf %207, %209 : vector<8x8x4xf32>
    %211 = vector.shape_cast %2 : vector<1x4xf32> to vector<1x1x4xf32>
    %212 = vector.broadcast %211 : vector<1x1x4xf32> to vector<8x8x4xf32>
    %213 = arith.addf %210, %212 : vector<8x8x4xf32>
    %cst_108 = arith.constant 0.000000e+00 : f32
    %214 = vector.broadcast %cst_108 : f32 to vector<8x8x4xf32>
    %215 = arith.maximumf %213, %214 : vector<8x8x4xf32>
    %216 = tpu.iota {dimensions = array<i32: 0>} : vector<8x8x1xi32>
    %c2_i32_109 = arith.constant 2 : i32
    %217 = vector.broadcast %c2_i32_109 : i32 to vector<8x8x1xi32>
    %218 = arith.muli %217, %216 : vector<8x8x1xi32>
    %c2_i32_110 = arith.constant 2 : i32
    %219 = vector.broadcast %c2_i32_110 : i32 to vector<8x8x1xi32>
    %220 = arith.addi %219, %218 : vector<8x8x1xi32>
    %221 = tpu.iota {dimensions = array<i32: 1>} : vector<8x8x1xi32>
    %c2_i32_111 = arith.constant 2 : i32
    %222 = vector.broadcast %c2_i32_111 : i32 to vector<8x8x1xi32>
    %223 = arith.muli %222, %221 : vector<8x8x1xi32>
    %c0_i32_112 = arith.constant 0 : i32
    %224 = vector.broadcast %c0_i32_112 : i32 to vector<8x8x1xi32>
    %225 = arith.addi %224, %223 : vector<8x8x1xi32>
    %c0_i32_113 = arith.constant 0 : i32
    %226 = vector.broadcast %c0_i32_113 : i32 to vector<8x8x1xi32>
    %227 = arith.cmpi eq, %220, %226 : vector<8x8x1xi32>
    %c17_i32_114 = arith.constant 17 : i32
    %228 = vector.broadcast %c17_i32_114 : i32 to vector<8x8x1xi32>
    %229 = arith.cmpi eq, %220, %228 : vector<8x8x1xi32>
    %230 = arith.ori %227, %229 : vector<8x8x1xi1>
    %c0_i32_115 = arith.constant 0 : i32
    %231 = vector.broadcast %c0_i32_115 : i32 to vector<8x8x1xi32>
    %232 = arith.cmpi eq, %225, %231 : vector<8x8x1xi32>
    %233 = arith.ori %230, %232 : vector<8x8x1xi1>
    %c17_i32_116 = arith.constant 17 : i32
    %234 = vector.broadcast %c17_i32_116 : i32 to vector<8x8x1xi32>
    %235 = arith.cmpi eq, %225, %234 : vector<8x8x1xi32>
    %236 = arith.ori %233, %235 : vector<8x8x1xi1>
    %cst_117 = arith.constant 0.000000e+00 : f32
    %237 = vector.shape_cast %236 : vector<8x8x1xi1> to vector<8x8x1xi1>
    %238 = vector.broadcast %237 : vector<8x8x1xi1> to vector<8x8x4xi1>
    %239 = vector.broadcast %cst_117 : f32 to vector<8x8x4xf32>
    %240 = arith.select %238, %239, %215 : vector<8x8x4xi1>, vector<8x8x4xf32>
    %241 = vector.shape_cast %240 : vector<8x8x4xf32> to vector<64x4xf32>
    %242 = arith.truncf %241 : vector<64x4xf32> to vector<64x4xbf16>
    %c2_118 = arith.constant 2 : index
    %c0_119 = arith.constant 0 : index
    %c0_120 = arith.constant 0 : index
    %c0_121 = arith.constant 0 : index
    %243 = vector.load %arg3[%c2_118, %c0_119, %c0_120, %c0_121] : memref<3x3x4x8xbf16, #tpu.memory_space<vmem>>, vector<1x1x4x8xbf16>
    %244 = vector.shape_cast %243 : vector<1x1x4x8xbf16> to vector<4x8xbf16>
    %cst_122 = arith.constant dense<0.000000e+00> : vector<64x8xf32>
    %245 = tpu.matmul %242, %244, %cst_122 {dimension_numbers = #tpu.dot_dimension_numbers<[1], [0], [0], [1], [0, 0, 1, 1], [], []>} : vector<64x4xbf16>, vector<4x8xbf16>, vector<64x8xf32> -> vector<64x8xf32>
    %246 = arith.addf %205, %245 : vector<64x8xf32>
    %c0_123 = arith.constant 0 : index
    %c1_124 = arith.constant 1 : index
    %c1_125 = arith.constant 1 : index
    %c0_126 = arith.constant 0 : index
    %c0_127 = arith.constant 0 : index
    %247 = vector.load %arg1[%c0_123, %c1_124, %c1_125, %c0_126, %c0_127] : memref<1x4x9x9x4xf32, #tpu.memory_space<vmem>>, vector<1x1x8x8x4xf32>
    %248 = vector.shape_cast %247 : vector<1x1x8x8x4xf32> to vector<8x8x4xf32>
    %249 = vector.shape_cast %1 : vector<1x4xf32> to vector<1x1x4xf32>
    %250 = vector.broadcast %249 : vector<1x1x4xf32> to vector<8x8x4xf32>
    %251 = arith.mulf %248, %250 : vector<8x8x4xf32>
    %252 = vector.shape_cast %2 : vector<1x4xf32> to vector<1x1x4xf32>
    %253 = vector.broadcast %252 : vector<1x1x4xf32> to vector<8x8x4xf32>
    %254 = arith.addf %251, %253 : vector<8x8x4xf32>
    %cst_128 = arith.constant 0.000000e+00 : f32
    %255 = vector.broadcast %cst_128 : f32 to vector<8x8x4xf32>
    %256 = arith.maximumf %254, %255 : vector<8x8x4xf32>
    %257 = vector.shape_cast %256 : vector<8x8x4xf32> to vector<64x4xf32>
    %258 = arith.truncf %257 : vector<64x4xf32> to vector<64x4xbf16>
    %c2_129 = arith.constant 2 : index
    %c1_130 = arith.constant 1 : index
    %c0_131 = arith.constant 0 : index
    %c0_132 = arith.constant 0 : index
    %259 = vector.load %arg3[%c2_129, %c1_130, %c0_131, %c0_132] : memref<3x3x4x8xbf16, #tpu.memory_space<vmem>>, vector<1x1x4x8xbf16>
    %260 = vector.shape_cast %259 : vector<1x1x4x8xbf16> to vector<4x8xbf16>
    %cst_133 = arith.constant dense<0.000000e+00> : vector<64x8xf32>
    %261 = tpu.matmul %258, %260, %cst_133 {dimension_numbers = #tpu.dot_dimension_numbers<[1], [0], [0], [1], [0, 0, 1, 1], [], []>} : vector<64x4xbf16>, vector<4x8xbf16>, vector<64x8xf32> -> vector<64x8xf32>
    %262 = arith.addf %246, %261 : vector<64x8xf32>
    %c0_134 = arith.constant 0 : index
    %c0_135 = arith.constant 0 : index
    %c1_136 = arith.constant 1 : index
    %c1_137 = arith.constant 1 : index
    %c0_138 = arith.constant 0 : index
    %263 = vector.load %arg1[%c0_134, %c0_135, %c1_136, %c1_137, %c0_138] : memref<1x4x9x9x4xf32, #tpu.memory_space<vmem>>, vector<1x1x8x8x4xf32>
    %264 = vector.shape_cast %263 : vector<1x1x8x8x4xf32> to vector<8x8x4xf32>
    %265 = vector.shape_cast %1 : vector<1x4xf32> to vector<1x1x4xf32>
    %266 = vector.broadcast %265 : vector<1x1x4xf32> to vector<8x8x4xf32>
    %267 = arith.mulf %264, %266 : vector<8x8x4xf32>
    %268 = vector.shape_cast %2 : vector<1x4xf32> to vector<1x1x4xf32>
    %269 = vector.broadcast %268 : vector<1x1x4xf32> to vector<8x8x4xf32>
    %270 = arith.addf %267, %269 : vector<8x8x4xf32>
    %cst_139 = arith.constant 0.000000e+00 : f32
    %271 = vector.broadcast %cst_139 : f32 to vector<8x8x4xf32>
    %272 = arith.maximumf %270, %271 : vector<8x8x4xf32>
    %273 = vector.shape_cast %272 : vector<8x8x4xf32> to vector<64x4xf32>
    %274 = arith.truncf %273 : vector<64x4xf32> to vector<64x4xbf16>
    %c2_140 = arith.constant 2 : index
    %c2_141 = arith.constant 2 : index
    %c0_142 = arith.constant 0 : index
    %c0_143 = arith.constant 0 : index
    %275 = vector.load %arg3[%c2_140, %c2_141, %c0_142, %c0_143] : memref<3x3x4x8xbf16, #tpu.memory_space<vmem>>, vector<1x1x4x8xbf16>
    %276 = vector.shape_cast %275 : vector<1x1x4x8xbf16> to vector<4x8xbf16>
    %cst_144 = arith.constant dense<0.000000e+00> : vector<64x8xf32>
    %277 = tpu.matmul %274, %276, %cst_144 {dimension_numbers = #tpu.dot_dimension_numbers<[1], [0], [0], [1], [0, 0, 1, 1], [], []>} : vector<64x4xbf16>, vector<4x8xbf16>, vector<64x8xf32> -> vector<64x8xf32>
    %278 = arith.addf %262, %277 : vector<64x8xf32>
    %279 = vector.shape_cast %278 : vector<64x8xf32> to vector<8x8x8xf32>
    %c0_145 = arith.constant 0 : index
    %c0_146 = arith.constant 0 : index
    %c0_147 = arith.constant 0 : index
    %c0_148 = arith.constant 0 : index
    %280 = vector.load %arg5[%c0_145, %c0_146, %c0_147, %c0_148] : memref<1x8x8x8xf32, #tpu.memory_space<vmem>>, vector<1x8x8x8xf32>
    %281 = vector.shape_cast %280 : vector<1x8x8x8xf32> to vector<8x8x8xf32>
    %282 = vector.shape_cast %279 : vector<8x8x8xf32> to vector<1x8x8x8xf32>
    tpu.vector_store %arg5[%c0_145, %c0_146, %c0_147, %c0_148], %282 {strides = array<i32>} : memref<1x8x8x8xf32, #tpu.memory_space<vmem>>, vector<1x8x8x8xf32>,
    return
  }
  func.func @transform_0(%arg0: i32) -> (i32, i32, i32, i32, i32) {
    %c0_i32 = arith.constant 0 : i32
    %c0_i32_0 = arith.constant 0 : i32
    %c0_i32_1 = arith.constant 0 : i32
    %c0_i32_2 = arith.constant 0 : i32
    %c0_i32_3 = arith.constant 0 : i32
    return %arg0, %c0_i32, %c0_i32_0, %c0_i32_1, %c0_i32_2 : i32, i32, i32, i32, i32
  }
  func.func @transform_1(%arg0: i32) -> (i32, i32) {
    %c0_i32 = arith.constant 0 : i32
    %c0_i32_0 = arith.constant 0 : i32
    %c0_i32_1 = arith.constant 0 : i32
    return %c0_i32, %c0_i32_0 : i32, i32
  }
  func.func @transform_2(%arg0: i32) -> (i32, i32, i32, i32) {
    %c0_i32 = arith.constant 0 : i32
    %c0_i32_0 = arith.constant 0 : i32
    %c0_i32_1 = arith.constant 0 : i32
    %c0_i32_2 = arith.constant 0 : i32
    %c0_i32_3 = arith.constant 0 : i32
    return %c0_i32, %c0_i32_0, %c0_i32_1, %c0_i32_2 : i32, i32, i32, i32
  }
  func.func @transform_3(%arg0: i32) -> (i32, i32) {
    %c0_i32 = arith.constant 0 : i32
    %c0_i32_0 = arith.constant 0 : i32
    %c0_i32_1 = arith.constant 0 : i32
    return %c0_i32, %c0_i32_0 : i32, i32
  }
  func.func @transform_4(%arg0: i32) -> (i32, i32, i32, i32) {
    %c0_i32 = arith.constant 0 : i32
    %c0_i32_0 = arith.constant 0 : i32
    %c0_i32_1 = arith.constant 0 : i32
    %c0_i32_2 = arith.constant 0 : i32
    return %arg0, %c0_i32, %c0_i32_0, %c0_i32_1 : i32, i32, i32, i32
  }
  func.func @transform_5(%arg0: i32) -> (i32, i32, i32, i32) {
    %c0_i32 = arith.constant 0 : i32
    %c0_i32_0 = arith.constant 0 : i32
    %c0_i32_1 = arith.constant 0 : i32
    %c0_i32_2 = arith.constant 0 : i32
    return %arg0, %c0_i32, %c0_i32_0, %c0_i32_1 : i32, i32, i32, i32
  }
}

module attributes {stable_mosaic.version = 11 : i64} {
  func.func @_bn_stats_kernel(%arg0: i32, %arg1: memref<1x8x8x8xf32, #tpu.memory_space<vmem>>, %arg2: memref<1x8xf32, #tpu.memory_space<vmem>>, %arg3: memref<1x8xf32, #tpu.memory_space<vmem>>, %arg4: memref<2x8xf32, #tpu.memory_space<vmem>>, %arg5: memref<2x8xf32, #tpu.memory_space<vmem>>) attributes {dimension_semantics = [#tpu.dimension_semantics<arbitrary>], iteration_bounds = array<i64: 2>, scalar_prefetch = 0 : i64, scratch_operands = 1 : i64, tpu.core_type = #tpu.core_type<tc>, window_params = [{transform_indices = @transform_0, window_bounds = array<i64: 1, 8, 8, 8>}, {pipeline_mode = #tpu.pipeline_mode<synchronous>, transform_indices = @transform_1, window_bounds = array<i64: 1, 8>}, {pipeline_mode = #tpu.pipeline_mode<synchronous>, transform_indices = @transform_2, window_bounds = array<i64: 1, 8>}, {pipeline_mode = #tpu.pipeline_mode<synchronous>, transform_indices = @transform_3, window_bounds = array<i64: 2, 8>}]} {
    %c0_i32 = arith.constant 0 : i32
    %0 = arith.cmpi eq, %arg0, %c0_i32 : i32
    %1 = arith.extui %0 : i1 to i32
    %c0_i32_0 = arith.constant 0 : i32
    %2 = arith.cmpi ne, %1, %c0_i32_0 : i32
    scf.if %2 {
      %cst_15 = arith.constant 0.000000e+00 : f32
      %21 = vector.broadcast %cst_15 : f32 to vector<2x8xf32>
      %c0_16 = arith.constant 0 : index
      %c0_17 = arith.constant 0 : index
      %22 = vector.load %arg5[%c0_16, %c0_17] : memref<2x8xf32, #tpu.memory_space<vmem>>, vector<2x8xf32>
      tpu.vector_store %arg5[%c0_16, %c0_17], %21 {strides = array<i32>} : memref<2x8xf32, #tpu.memory_space<vmem>>, vector<2x8xf32>,
    } else {
    }
    %c0 = arith.constant 0 : index
    %c0_1 = arith.constant 0 : index
    %c0_2 = arith.constant 0 : index
    %c0_3 = arith.constant 0 : index
    %3 = vector.load %arg1[%c0, %c0_1, %c0_2, %c0_3] : memref<1x8x8x8xf32, #tpu.memory_space<vmem>>, vector<1x8x8x8xf32>
    %4 = vector.shape_cast %3 : vector<1x8x8x8xf32> to vector<8x8x8xf32>
    %cst = arith.constant dense<0.000000e+00> : vector<8x8xf32>
    %5 = vector.multi_reduction <add>, %4, %cst [0] : vector<8x8x8xf32> to vector<8x8xf32>
    %cst_4 = arith.constant dense<0.000000e+00> : vector<8xf32>
    %6 = vector.multi_reduction <add>, %5, %cst_4 [0] : vector<8x8xf32> to vector<8xf32>
    %7 = vector.shape_cast %6 : vector<8xf32> to vector<1x8xf32>
    %8 = arith.mulf %4, %4 : vector<8x8x8xf32>
    %cst_5 = arith.constant dense<0.000000e+00> : vector<8x8xf32>
    %9 = vector.multi_reduction <add>, %8, %cst_5 [0] : vector<8x8x8xf32> to vector<8x8xf32>
    %cst_6 = arith.constant dense<0.000000e+00> : vector<8xf32>
    %10 = vector.multi_reduction <add>, %9, %cst_6 [0] : vector<8x8xf32> to vector<8xf32>
    %11 = vector.shape_cast %10 : vector<8xf32> to vector<1x8xf32>
    %c0_7 = arith.constant 0 : index
    %c0_8 = arith.constant 0 : index
    %12 = vector.load %arg5[%c0_7, %c0_8] : memref<2x8xf32, #tpu.memory_space<vmem>>, vector<1x8xf32>
    %13 = arith.addf %12, %7 : vector<1x8xf32>
    %c0_9 = arith.constant 0 : index
    %c0_10 = arith.constant 0 : index
    %14 = vector.load %arg5[%c0_9, %c0_10] : memref<2x8xf32, #tpu.memory_space<vmem>>, vector<1x8xf32>
    tpu.vector_store %arg5[%c0_9, %c0_10], %13 {strides = array<i32>} : memref<2x8xf32, #tpu.memory_space<vmem>>, vector<1x8xf32>,
    %c1 = arith.constant 1 : index
    %c0_11 = arith.constant 0 : index
    %15 = vector.load %arg5[%c1, %c0_11] : memref<2x8xf32, #tpu.memory_space<vmem>>, vector<1x8xf32>
    %16 = arith.addf %15, %11 : vector<1x8xf32>
    %c1_12 = arith.constant 1 : index
    %c0_13 = arith.constant 0 : index
    %17 = vector.load %arg5[%c1_12, %c0_13] : memref<2x8xf32, #tpu.memory_space<vmem>>, vector<1x8xf32>
    tpu.vector_store %arg5[%c1_12, %c0_13], %16 {strides = array<i32>} : memref<2x8xf32, #tpu.memory_space<vmem>>, vector<1x8xf32>,
    %c1_i32 = arith.constant 1 : i32
    %18 = arith.cmpi eq, %arg0, %c1_i32 : i32
    %19 = arith.extui %18 : i1 to i32
    %c0_i32_14 = arith.constant 0 : i32
    %20 = arith.cmpi ne, %19, %c0_i32_14 : i32
    scf.if %20 {
      %c0_15 = arith.constant 0 : index
      %c0_16 = arith.constant 0 : index
      %21 = vector.load %arg5[%c0_15, %c0_16] : memref<2x8xf32, #tpu.memory_space<vmem>>, vector<1x8xf32>
      %cst_17 = arith.constant 7.812500e-03 : f32
      %22 = vector.broadcast %cst_17 : f32 to vector<1x8xf32>
      %23 = arith.mulf %21, %22 : vector<1x8xf32>
      %c1_18 = arith.constant 1 : index
      %c0_19 = arith.constant 0 : index
      %24 = vector.load %arg5[%c1_18, %c0_19] : memref<2x8xf32, #tpu.memory_space<vmem>>, vector<1x8xf32>
      %cst_20 = arith.constant 7.812500e-03 : f32
      %25 = vector.broadcast %cst_20 : f32 to vector<1x8xf32>
      %26 = arith.mulf %24, %25 : vector<1x8xf32>
      %27 = arith.mulf %23, %23 : vector<1x8xf32>
      %28 = arith.subf %26, %27 : vector<1x8xf32>
      %c0_21 = arith.constant 0 : index
      %c0_22 = arith.constant 0 : index
      %29 = vector.load %arg2[%c0_21, %c0_22] : memref<1x8xf32, #tpu.memory_space<vmem>>, vector<1x8xf32>
      %cst_23 = arith.constant 9.99999974E-6 : f32
      %30 = vector.broadcast %cst_23 : f32 to vector<1x8xf32>
      %31 = arith.addf %28, %30 : vector<1x8xf32>
      %32 = math.rsqrt %31 : vector<1x8xf32>
      %33 = arith.mulf %29, %32 : vector<1x8xf32>
      %c0_24 = arith.constant 0 : index
      %c0_25 = arith.constant 0 : index
      %34 = vector.load %arg4[%c0_24, %c0_25] : memref<2x8xf32, #tpu.memory_space<vmem>>, vector<1x8xf32>
      tpu.vector_store %arg4[%c0_24, %c0_25], %33 {strides = array<i32>} : memref<2x8xf32, #tpu.memory_space<vmem>>, vector<1x8xf32>,
      %c0_26 = arith.constant 0 : index
      %c0_27 = arith.constant 0 : index
      %35 = vector.load %arg3[%c0_26, %c0_27] : memref<1x8xf32, #tpu.memory_space<vmem>>, vector<1x8xf32>
      %36 = arith.mulf %23, %33 : vector<1x8xf32>
      %37 = arith.subf %35, %36 : vector<1x8xf32>
      %c1_28 = arith.constant 1 : index
      %c0_29 = arith.constant 0 : index
      %38 = vector.load %arg4[%c1_28, %c0_29] : memref<2x8xf32, #tpu.memory_space<vmem>>, vector<1x8xf32>
      tpu.vector_store %arg4[%c1_28, %c0_29], %37 {strides = array<i32>} : memref<2x8xf32, #tpu.memory_space<vmem>>, vector<1x8xf32>,
    } else {
    }
    return
  }
  func.func @transform_0(%arg0: i32) -> (i32, i32, i32, i32) {
    %c0_i32 = arith.constant 0 : i32
    %c0_i32_0 = arith.constant 0 : i32
    %c0_i32_1 = arith.constant 0 : i32
    %c0_i32_2 = arith.constant 0 : i32
    return %arg0, %c0_i32, %c0_i32_0, %c0_i32_1 : i32, i32, i32, i32
  }
  func.func @transform_1(%arg0: i32) -> (i32, i32) {
    %c0_i32 = arith.constant 0 : i32
    %c0_i32_0 = arith.constant 0 : i32
    %c0_i32_1 = arith.constant 0 : i32
    return %c0_i32, %c0_i32_0 : i32, i32
  }
  func.func @transform_2(%arg0: i32) -> (i32, i32) {
    %c0_i32 = arith.constant 0 : i32
    %c0_i32_0 = arith.constant 0 : i32
    %c0_i32_1 = arith.constant 0 : i32
    return %c0_i32, %c0_i32_0 : i32, i32
  }
  func.func @transform_3(%arg0: i32) -> (i32, i32) {
    %c0_i32 = arith.constant 0 : i32
    %c0_i32_0 = arith.constant 0 : i32
    %c0_i32_1 = arith.constant 0 : i32
    return %c0_i32, %c0_i32_0 : i32, i32
  }
}

module attributes {stable_mosaic.version = 11 : i64} {
  func.func @_preact_conv_kernel(%arg0: i32, %arg1: memref<1x1x10x10x8xf32, #tpu.memory_space<vmem>>, %arg2: memref<2x8xf32, #tpu.memory_space<vmem>>, %arg3: memref<3x3x8x8xbf16, #tpu.memory_space<vmem>>, %arg4: memref<1x8x8x8xf32, #tpu.memory_space<vmem>>, %arg5: memref<1x8x8x8xf32, #tpu.memory_space<vmem>>) attributes {dimension_semantics = [#tpu.dimension_semantics<parallel>], iteration_bounds = array<i64: 2>, scalar_prefetch = 0 : i64, scratch_operands = 0 : i64, tpu.core_type = #tpu.core_type<tc>, window_params = [{transform_indices = @transform_0, window_bounds = array<i64: 1, 1, 10, 10, 8>}, {pipeline_mode = #tpu.pipeline_mode<synchronous>, transform_indices = @transform_1, window_bounds = array<i64: 2, 8>}, {pipeline_mode = #tpu.pipeline_mode<synchronous>, transform_indices = @transform_2, window_bounds = array<i64: 3, 3, 8, 8>}, {transform_indices = @transform_3, window_bounds = array<i64: 1, 8, 8, 8>}, {transform_indices = @transform_4, window_bounds = array<i64: 1, 8, 8, 8>}]} {
    %c0 = arith.constant 0 : index
    %c0_0 = arith.constant 0 : index
    %0 = vector.load %arg2[%c0, %c0_0] : memref<2x8xf32, #tpu.memory_space<vmem>>, vector<2x8xf32>
    %1 = vector.extract_strided_slice %0 {offsets = [0, 0], sizes = [1, 8], strides = [1, 1]} : vector<2x8xf32> to vector<1x8xf32>
    %2 = vector.extract_strided_slice %0 {offsets = [1, 0], sizes = [1, 8], strides = [1, 1]} : vector<2x8xf32> to vector<1x8xf32>
    %cst = arith.constant 0.000000e+00 : f32
    %3 = vector.broadcast %cst : f32 to vector<64x8xf32>
    %c0_1 = arith.constant 0 : index
    %c0_2 = arith.constant 0 : index
    %c0_3 = arith.constant 0 : index
    %c0_4 = arith.constant 0 : index
    %c0_5 = arith.constant 0 : index
    %4 = vector.load %arg1[%c0_1, %c0_2, %c0_3, %c0_4, %c0_5] : memref<1x1x10x10x8xf32, #tpu.memory_space<vmem>>, vector<1x1x8x8x8xf32>
    %5 = vector.shape_cast %4 : vector<1x1x8x8x8xf32> to vector<8x8x8xf32>
    %6 = vector.shape_cast %1 : vector<1x8xf32> to vector<1x1x8xf32>
    %7 = vector.broadcast %6 : vector<1x1x8xf32> to vector<8x8x8xf32>
    %8 = arith.mulf %5, %7 : vector<8x8x8xf32>
    %9 = vector.shape_cast %2 : vector<1x8xf32> to vector<1x1x8xf32>
    %10 = vector.broadcast %9 : vector<1x1x8xf32> to vector<8x8x8xf32>
    %11 = arith.addf %8, %10 : vector<8x8x8xf32>
    %cst_6 = arith.constant 0.000000e+00 : f32
    %12 = vector.broadcast %cst_6 : f32 to vector<8x8x8xf32>
    %13 = arith.maximumf %11, %12 : vector<8x8x8xf32>
    %14 = tpu.iota {dimensions = array<i32: 0>} : vector<8x8x1xi32>
    %c1_i32 = arith.constant 1 : i32
    %15 = vector.broadcast %c1_i32 : i32 to vector<8x8x1xi32>
    %16 = arith.muli %15, %14 : vector<8x8x1xi32>
    %c0_i32 = arith.constant 0 : i32
    %17 = vector.broadcast %c0_i32 : i32 to vector<8x8x1xi32>
    %18 = arith.addi %17, %16 : vector<8x8x1xi32>
    %19 = tpu.iota {dimensions = array<i32: 1>} : vector<8x8x1xi32>
    %c1_i32_7 = arith.constant 1 : i32
    %20 = vector.broadcast %c1_i32_7 : i32 to vector<8x8x1xi32>
    %21 = arith.muli %20, %19 : vector<8x8x1xi32>
    %c0_i32_8 = arith.constant 0 : i32
    %22 = vector.broadcast %c0_i32_8 : i32 to vector<8x8x1xi32>
    %23 = arith.addi %22, %21 : vector<8x8x1xi32>
    %c0_i32_9 = arith.constant 0 : i32
    %24 = vector.broadcast %c0_i32_9 : i32 to vector<8x8x1xi32>
    %25 = arith.cmpi eq, %18, %24 : vector<8x8x1xi32>
    %c9_i32 = arith.constant 9 : i32
    %26 = vector.broadcast %c9_i32 : i32 to vector<8x8x1xi32>
    %27 = arith.cmpi eq, %18, %26 : vector<8x8x1xi32>
    %28 = arith.ori %25, %27 : vector<8x8x1xi1>
    %c0_i32_10 = arith.constant 0 : i32
    %29 = vector.broadcast %c0_i32_10 : i32 to vector<8x8x1xi32>
    %30 = arith.cmpi eq, %23, %29 : vector<8x8x1xi32>
    %31 = arith.ori %28, %30 : vector<8x8x1xi1>
    %c9_i32_11 = arith.constant 9 : i32
    %32 = vector.broadcast %c9_i32_11 : i32 to vector<8x8x1xi32>
    %33 = arith.cmpi eq, %23, %32 : vector<8x8x1xi32>
    %34 = arith.ori %31, %33 : vector<8x8x1xi1>
    %cst_12 = arith.constant 0.000000e+00 : f32
    %35 = vector.shape_cast %34 : vector<8x8x1xi1> to vector<8x8x1xi1>
    %36 = vector.broadcast %35 : vector<8x8x1xi1> to vector<8x8x8xi1>
    %37 = vector.broadcast %cst_12 : f32 to vector<8x8x8xf32>
    %38 = arith.select %36, %37, %13 : vector<8x8x8xi1>, vector<8x8x8xf32>
    %39 = vector.shape_cast %38 : vector<8x8x8xf32> to vector<64x8xf32>
    %40 = arith.truncf %39 : vector<64x8xf32> to vector<64x8xbf16>
    %c0_13 = arith.constant 0 : index
    %c0_14 = arith.constant 0 : index
    %c0_15 = arith.constant 0 : index
    %c0_16 = arith.constant 0 : index
    %41 = vector.load %arg3[%c0_13, %c0_14, %c0_15, %c0_16] : memref<3x3x8x8xbf16, #tpu.memory_space<vmem>>, vector<1x1x8x8xbf16>
    %42 = vector.shape_cast %41 : vector<1x1x8x8xbf16> to vector<8x8xbf16>
    %cst_17 = arith.constant dense<0.000000e+00> : vector<64x8xf32>
    %43 = tpu.matmul %40, %42, %cst_17 {dimension_numbers = #tpu.dot_dimension_numbers<[1], [0], [0], [1], [0, 0, 1, 1], [], []>} : vector<64x8xbf16>, vector<8x8xbf16>, vector<64x8xf32> -> vector<64x8xf32>
    %44 = arith.addf %3, %43 : vector<64x8xf32>
    %c0_18 = arith.constant 0 : index
    %c0_19 = arith.constant 0 : index
    %c0_20 = arith.constant 0 : index
    %c1 = arith.constant 1 : index
    %c0_21 = arith.constant 0 : index
    %45 = vector.load %arg1[%c0_18, %c0_19, %c0_20, %c1, %c0_21] : memref<1x1x10x10x8xf32, #tpu.memory_space<vmem>>, vector<1x1x8x8x8xf32>
    %46 = vector.shape_cast %45 : vector<1x1x8x8x8xf32> to vector<8x8x8xf32>
    %47 = vector.shape_cast %1 : vector<1x8xf32> to vector<1x1x8xf32>
    %48 = vector.broadcast %47 : vector<1x1x8xf32> to vector<8x8x8xf32>
    %49 = arith.mulf %46, %48 : vector<8x8x8xf32>
    %50 = vector.shape_cast %2 : vector<1x8xf32> to vector<1x1x8xf32>
    %51 = vector.broadcast %50 : vector<1x1x8xf32> to vector<8x8x8xf32>
    %52 = arith.addf %49, %51 : vector<8x8x8xf32>
    %cst_22 = arith.constant 0.000000e+00 : f32
    %53 = vector.broadcast %cst_22 : f32 to vector<8x8x8xf32>
    %54 = arith.maximumf %52, %53 : vector<8x8x8xf32>
    %55 = tpu.iota {dimensions = array<i32: 0>} : vector<8x8x1xi32>
    %c1_i32_23 = arith.constant 1 : i32
    %56 = vector.broadcast %c1_i32_23 : i32 to vector<8x8x1xi32>
    %57 = arith.muli %56, %55 : vector<8x8x1xi32>
    %c0_i32_24 = arith.constant 0 : i32
    %58 = vector.broadcast %c0_i32_24 : i32 to vector<8x8x1xi32>
    %59 = arith.addi %58, %57 : vector<8x8x1xi32>
    %60 = tpu.iota {dimensions = array<i32: 1>} : vector<8x8x1xi32>
    %c1_i32_25 = arith.constant 1 : i32
    %61 = vector.broadcast %c1_i32_25 : i32 to vector<8x8x1xi32>
    %62 = arith.muli %61, %60 : vector<8x8x1xi32>
    %c1_i32_26 = arith.constant 1 : i32
    %63 = vector.broadcast %c1_i32_26 : i32 to vector<8x8x1xi32>
    %64 = arith.addi %63, %62 : vector<8x8x1xi32>
    %c0_i32_27 = arith.constant 0 : i32
    %65 = vector.broadcast %c0_i32_27 : i32 to vector<8x8x1xi32>
    %66 = arith.cmpi eq, %59, %65 : vector<8x8x1xi32>
    %c9_i32_28 = arith.constant 9 : i32
    %67 = vector.broadcast %c9_i32_28 : i32 to vector<8x8x1xi32>
    %68 = arith.cmpi eq, %59, %67 : vector<8x8x1xi32>
    %69 = arith.ori %66, %68 : vector<8x8x1xi1>
    %c0_i32_29 = arith.constant 0 : i32
    %70 = vector.broadcast %c0_i32_29 : i32 to vector<8x8x1xi32>
    %71 = arith.cmpi eq, %64, %70 : vector<8x8x1xi32>
    %72 = arith.ori %69, %71 : vector<8x8x1xi1>
    %c9_i32_30 = arith.constant 9 : i32
    %73 = vector.broadcast %c9_i32_30 : i32 to vector<8x8x1xi32>
    %74 = arith.cmpi eq, %64, %73 : vector<8x8x1xi32>
    %75 = arith.ori %72, %74 : vector<8x8x1xi1>
    %cst_31 = arith.constant 0.000000e+00 : f32
    %76 = vector.shape_cast %75 : vector<8x8x1xi1> to vector<8x8x1xi1>
    %77 = vector.broadcast %76 : vector<8x8x1xi1> to vector<8x8x8xi1>
    %78 = vector.broadcast %cst_31 : f32 to vector<8x8x8xf32>
    %79 = arith.select %77, %78, %54 : vector<8x8x8xi1>, vector<8x8x8xf32>
    %80 = vector.shape_cast %79 : vector<8x8x8xf32> to vector<64x8xf32>
    %81 = arith.truncf %80 : vector<64x8xf32> to vector<64x8xbf16>
    %c0_32 = arith.constant 0 : index
    %c1_33 = arith.constant 1 : index
    %c0_34 = arith.constant 0 : index
    %c0_35 = arith.constant 0 : index
    %82 = vector.load %arg3[%c0_32, %c1_33, %c0_34, %c0_35] : memref<3x3x8x8xbf16, #tpu.memory_space<vmem>>, vector<1x1x8x8xbf16>
    %83 = vector.shape_cast %82 : vector<1x1x8x8xbf16> to vector<8x8xbf16>
    %cst_36 = arith.constant dense<0.000000e+00> : vector<64x8xf32>
    %84 = tpu.matmul %81, %83, %cst_36 {dimension_numbers = #tpu.dot_dimension_numbers<[1], [0], [0], [1], [0, 0, 1, 1], [], []>} : vector<64x8xbf16>, vector<8x8xbf16>, vector<64x8xf32> -> vector<64x8xf32>
    %85 = arith.addf %44, %84 : vector<64x8xf32>
    %c0_37 = arith.constant 0 : index
    %c0_38 = arith.constant 0 : index
    %c0_39 = arith.constant 0 : index
    %c2 = arith.constant 2 : index
    %c0_40 = arith.constant 0 : index
    %86 = vector.load %arg1[%c0_37, %c0_38, %c0_39, %c2, %c0_40] : memref<1x1x10x10x8xf32, #tpu.memory_space<vmem>>, vector<1x1x8x8x8xf32>
    %87 = vector.shape_cast %86 : vector<1x1x8x8x8xf32> to vector<8x8x8xf32>
    %88 = vector.shape_cast %1 : vector<1x8xf32> to vector<1x1x8xf32>
    %89 = vector.broadcast %88 : vector<1x1x8xf32> to vector<8x8x8xf32>
    %90 = arith.mulf %87, %89 : vector<8x8x8xf32>
    %91 = vector.shape_cast %2 : vector<1x8xf32> to vector<1x1x8xf32>
    %92 = vector.broadcast %91 : vector<1x1x8xf32> to vector<8x8x8xf32>
    %93 = arith.addf %90, %92 : vector<8x8x8xf32>
    %cst_41 = arith.constant 0.000000e+00 : f32
    %94 = vector.broadcast %cst_41 : f32 to vector<8x8x8xf32>
    %95 = arith.maximumf %93, %94 : vector<8x8x8xf32>
    %96 = tpu.iota {dimensions = array<i32: 0>} : vector<8x8x1xi32>
    %c1_i32_42 = arith.constant 1 : i32
    %97 = vector.broadcast %c1_i32_42 : i32 to vector<8x8x1xi32>
    %98 = arith.muli %97, %96 : vector<8x8x1xi32>
    %c0_i32_43 = arith.constant 0 : i32
    %99 = vector.broadcast %c0_i32_43 : i32 to vector<8x8x1xi32>
    %100 = arith.addi %99, %98 : vector<8x8x1xi32>
    %101 = tpu.iota {dimensions = array<i32: 1>} : vector<8x8x1xi32>
    %c1_i32_44 = arith.constant 1 : i32
    %102 = vector.broadcast %c1_i32_44 : i32 to vector<8x8x1xi32>
    %103 = arith.muli %102, %101 : vector<8x8x1xi32>
    %c2_i32 = arith.constant 2 : i32
    %104 = vector.broadcast %c2_i32 : i32 to vector<8x8x1xi32>
    %105 = arith.addi %104, %103 : vector<8x8x1xi32>
    %c0_i32_45 = arith.constant 0 : i32
    %106 = vector.broadcast %c0_i32_45 : i32 to vector<8x8x1xi32>
    %107 = arith.cmpi eq, %100, %106 : vector<8x8x1xi32>
    %c9_i32_46 = arith.constant 9 : i32
    %108 = vector.broadcast %c9_i32_46 : i32 to vector<8x8x1xi32>
    %109 = arith.cmpi eq, %100, %108 : vector<8x8x1xi32>
    %110 = arith.ori %107, %109 : vector<8x8x1xi1>
    %c0_i32_47 = arith.constant 0 : i32
    %111 = vector.broadcast %c0_i32_47 : i32 to vector<8x8x1xi32>
    %112 = arith.cmpi eq, %105, %111 : vector<8x8x1xi32>
    %113 = arith.ori %110, %112 : vector<8x8x1xi1>
    %c9_i32_48 = arith.constant 9 : i32
    %114 = vector.broadcast %c9_i32_48 : i32 to vector<8x8x1xi32>
    %115 = arith.cmpi eq, %105, %114 : vector<8x8x1xi32>
    %116 = arith.ori %113, %115 : vector<8x8x1xi1>
    %cst_49 = arith.constant 0.000000e+00 : f32
    %117 = vector.shape_cast %116 : vector<8x8x1xi1> to vector<8x8x1xi1>
    %118 = vector.broadcast %117 : vector<8x8x1xi1> to vector<8x8x8xi1>
    %119 = vector.broadcast %cst_49 : f32 to vector<8x8x8xf32>
    %120 = arith.select %118, %119, %95 : vector<8x8x8xi1>, vector<8x8x8xf32>
    %121 = vector.shape_cast %120 : vector<8x8x8xf32> to vector<64x8xf32>
    %122 = arith.truncf %121 : vector<64x8xf32> to vector<64x8xbf16>
    %c0_50 = arith.constant 0 : index
    %c2_51 = arith.constant 2 : index
    %c0_52 = arith.constant 0 : index
    %c0_53 = arith.constant 0 : index
    %123 = vector.load %arg3[%c0_50, %c2_51, %c0_52, %c0_53] : memref<3x3x8x8xbf16, #tpu.memory_space<vmem>>, vector<1x1x8x8xbf16>
    %124 = vector.shape_cast %123 : vector<1x1x8x8xbf16> to vector<8x8xbf16>
    %cst_54 = arith.constant dense<0.000000e+00> : vector<64x8xf32>
    %125 = tpu.matmul %122, %124, %cst_54 {dimension_numbers = #tpu.dot_dimension_numbers<[1], [0], [0], [1], [0, 0, 1, 1], [], []>} : vector<64x8xbf16>, vector<8x8xbf16>, vector<64x8xf32> -> vector<64x8xf32>
    %126 = arith.addf %85, %125 : vector<64x8xf32>
    %c0_55 = arith.constant 0 : index
    %c0_56 = arith.constant 0 : index
    %c1_57 = arith.constant 1 : index
    %c0_58 = arith.constant 0 : index
    %c0_59 = arith.constant 0 : index
    %127 = vector.load %arg1[%c0_55, %c0_56, %c1_57, %c0_58, %c0_59] : memref<1x1x10x10x8xf32, #tpu.memory_space<vmem>>, vector<1x1x8x8x8xf32>
    %128 = vector.shape_cast %127 : vector<1x1x8x8x8xf32> to vector<8x8x8xf32>
    %129 = vector.shape_cast %1 : vector<1x8xf32> to vector<1x1x8xf32>
    %130 = vector.broadcast %129 : vector<1x1x8xf32> to vector<8x8x8xf32>
    %131 = arith.mulf %128, %130 : vector<8x8x8xf32>
    %132 = vector.shape_cast %2 : vector<1x8xf32> to vector<1x1x8xf32>
    %133 = vector.broadcast %132 : vector<1x1x8xf32> to vector<8x8x8xf32>
    %134 = arith.addf %131, %133 : vector<8x8x8xf32>
    %cst_60 = arith.constant 0.000000e+00 : f32
    %135 = vector.broadcast %cst_60 : f32 to vector<8x8x8xf32>
    %136 = arith.maximumf %134, %135 : vector<8x8x8xf32>
    %137 = tpu.iota {dimensions = array<i32: 0>} : vector<8x8x1xi32>
    %c1_i32_61 = arith.constant 1 : i32
    %138 = vector.broadcast %c1_i32_61 : i32 to vector<8x8x1xi32>
    %139 = arith.muli %138, %137 : vector<8x8x1xi32>
    %c1_i32_62 = arith.constant 1 : i32
    %140 = vector.broadcast %c1_i32_62 : i32 to vector<8x8x1xi32>
    %141 = arith.addi %140, %139 : vector<8x8x1xi32>
    %142 = tpu.iota {dimensions = array<i32: 1>} : vector<8x8x1xi32>
    %c1_i32_63 = arith.constant 1 : i32
    %143 = vector.broadcast %c1_i32_63 : i32 to vector<8x8x1xi32>
    %144 = arith.muli %143, %142 : vector<8x8x1xi32>
    %c0_i32_64 = arith.constant 0 : i32
    %145 = vector.broadcast %c0_i32_64 : i32 to vector<8x8x1xi32>
    %146 = arith.addi %145, %144 : vector<8x8x1xi32>
    %c0_i32_65 = arith.constant 0 : i32
    %147 = vector.broadcast %c0_i32_65 : i32 to vector<8x8x1xi32>
    %148 = arith.cmpi eq, %141, %147 : vector<8x8x1xi32>
    %c9_i32_66 = arith.constant 9 : i32
    %149 = vector.broadcast %c9_i32_66 : i32 to vector<8x8x1xi32>
    %150 = arith.cmpi eq, %141, %149 : vector<8x8x1xi32>
    %151 = arith.ori %148, %150 : vector<8x8x1xi1>
    %c0_i32_67 = arith.constant 0 : i32
    %152 = vector.broadcast %c0_i32_67 : i32 to vector<8x8x1xi32>
    %153 = arith.cmpi eq, %146, %152 : vector<8x8x1xi32>
    %154 = arith.ori %151, %153 : vector<8x8x1xi1>
    %c9_i32_68 = arith.constant 9 : i32
    %155 = vector.broadcast %c9_i32_68 : i32 to vector<8x8x1xi32>
    %156 = arith.cmpi eq, %146, %155 : vector<8x8x1xi32>
    %157 = arith.ori %154, %156 : vector<8x8x1xi1>
    %cst_69 = arith.constant 0.000000e+00 : f32
    %158 = vector.shape_cast %157 : vector<8x8x1xi1> to vector<8x8x1xi1>
    %159 = vector.broadcast %158 : vector<8x8x1xi1> to vector<8x8x8xi1>
    %160 = vector.broadcast %cst_69 : f32 to vector<8x8x8xf32>
    %161 = arith.select %159, %160, %136 : vector<8x8x8xi1>, vector<8x8x8xf32>
    %162 = vector.shape_cast %161 : vector<8x8x8xf32> to vector<64x8xf32>
    %163 = arith.truncf %162 : vector<64x8xf32> to vector<64x8xbf16>
    %c1_70 = arith.constant 1 : index
    %c0_71 = arith.constant 0 : index
    %c0_72 = arith.constant 0 : index
    %c0_73 = arith.constant 0 : index
    %164 = vector.load %arg3[%c1_70, %c0_71, %c0_72, %c0_73] : memref<3x3x8x8xbf16, #tpu.memory_space<vmem>>, vector<1x1x8x8xbf16>
    %165 = vector.shape_cast %164 : vector<1x1x8x8xbf16> to vector<8x8xbf16>
    %cst_74 = arith.constant dense<0.000000e+00> : vector<64x8xf32>
    %166 = tpu.matmul %163, %165, %cst_74 {dimension_numbers = #tpu.dot_dimension_numbers<[1], [0], [0], [1], [0, 0, 1, 1], [], []>} : vector<64x8xbf16>, vector<8x8xbf16>, vector<64x8xf32> -> vector<64x8xf32>
    %167 = arith.addf %126, %166 : vector<64x8xf32>
    %c0_75 = arith.constant 0 : index
    %c0_76 = arith.constant 0 : index
    %c1_77 = arith.constant 1 : index
    %c1_78 = arith.constant 1 : index
    %c0_79 = arith.constant 0 : index
    %168 = vector.load %arg1[%c0_75, %c0_76, %c1_77, %c1_78, %c0_79] : memref<1x1x10x10x8xf32, #tpu.memory_space<vmem>>, vector<1x1x8x8x8xf32>
    %169 = vector.shape_cast %168 : vector<1x1x8x8x8xf32> to vector<8x8x8xf32>
    %170 = vector.shape_cast %1 : vector<1x8xf32> to vector<1x1x8xf32>
    %171 = vector.broadcast %170 : vector<1x1x8xf32> to vector<8x8x8xf32>
    %172 = arith.mulf %169, %171 : vector<8x8x8xf32>
    %173 = vector.shape_cast %2 : vector<1x8xf32> to vector<1x1x8xf32>
    %174 = vector.broadcast %173 : vector<1x1x8xf32> to vector<8x8x8xf32>
    %175 = arith.addf %172, %174 : vector<8x8x8xf32>
    %cst_80 = arith.constant 0.000000e+00 : f32
    %176 = vector.broadcast %cst_80 : f32 to vector<8x8x8xf32>
    %177 = arith.maximumf %175, %176 : vector<8x8x8xf32>
    %178 = vector.shape_cast %177 : vector<8x8x8xf32> to vector<64x8xf32>
    %179 = arith.truncf %178 : vector<64x8xf32> to vector<64x8xbf16>
    %c1_81 = arith.constant 1 : index
    %c1_82 = arith.constant 1 : index
    %c0_83 = arith.constant 0 : index
    %c0_84 = arith.constant 0 : index
    %180 = vector.load %arg3[%c1_81, %c1_82, %c0_83, %c0_84] : memref<3x3x8x8xbf16, #tpu.memory_space<vmem>>, vector<1x1x8x8xbf16>
    %181 = vector.shape_cast %180 : vector<1x1x8x8xbf16> to vector<8x8xbf16>
    %cst_85 = arith.constant dense<0.000000e+00> : vector<64x8xf32>
    %182 = tpu.matmul %179, %181, %cst_85 {dimension_numbers = #tpu.dot_dimension_numbers<[1], [0], [0], [1], [0, 0, 1, 1], [], []>} : vector<64x8xbf16>, vector<8x8xbf16>, vector<64x8xf32> -> vector<64x8xf32>
    %183 = arith.addf %167, %182 : vector<64x8xf32>
    %c0_86 = arith.constant 0 : index
    %c0_87 = arith.constant 0 : index
    %c1_88 = arith.constant 1 : index
    %c2_89 = arith.constant 2 : index
    %c0_90 = arith.constant 0 : index
    %184 = vector.load %arg1[%c0_86, %c0_87, %c1_88, %c2_89, %c0_90] : memref<1x1x10x10x8xf32, #tpu.memory_space<vmem>>, vector<1x1x8x8x8xf32>
    %185 = vector.shape_cast %184 : vector<1x1x8x8x8xf32> to vector<8x8x8xf32>
    %186 = vector.shape_cast %1 : vector<1x8xf32> to vector<1x1x8xf32>
    %187 = vector.broadcast %186 : vector<1x1x8xf32> to vector<8x8x8xf32>
    %188 = arith.mulf %185, %187 : vector<8x8x8xf32>
    %189 = vector.shape_cast %2 : vector<1x8xf32> to vector<1x1x8xf32>
    %190 = vector.broadcast %189 : vector<1x1x8xf32> to vector<8x8x8xf32>
    %191 = arith.addf %188, %190 : vector<8x8x8xf32>
    %cst_91 = arith.constant 0.000000e+00 : f32
    %192 = vector.broadcast %cst_91 : f32 to vector<8x8x8xf32>
    %193 = arith.maximumf %191, %192 : vector<8x8x8xf32>
    %194 = tpu.iota {dimensions = array<i32: 0>} : vector<8x8x1xi32>
    %c1_i32_92 = arith.constant 1 : i32
    %195 = vector.broadcast %c1_i32_92 : i32 to vector<8x8x1xi32>
    %196 = arith.muli %195, %194 : vector<8x8x1xi32>
    %c1_i32_93 = arith.constant 1 : i32
    %197 = vector.broadcast %c1_i32_93 : i32 to vector<8x8x1xi32>
    %198 = arith.addi %197, %196 : vector<8x8x1xi32>
    %199 = tpu.iota {dimensions = array<i32: 1>} : vector<8x8x1xi32>
    %c1_i32_94 = arith.constant 1 : i32
    %200 = vector.broadcast %c1_i32_94 : i32 to vector<8x8x1xi32>
    %201 = arith.muli %200, %199 : vector<8x8x1xi32>
    %c2_i32_95 = arith.constant 2 : i32
    %202 = vector.broadcast %c2_i32_95 : i32 to vector<8x8x1xi32>
    %203 = arith.addi %202, %201 : vector<8x8x1xi32>
    %c0_i32_96 = arith.constant 0 : i32
    %204 = vector.broadcast %c0_i32_96 : i32 to vector<8x8x1xi32>
    %205 = arith.cmpi eq, %198, %204 : vector<8x8x1xi32>
    %c9_i32_97 = arith.constant 9 : i32
    %206 = vector.broadcast %c9_i32_97 : i32 to vector<8x8x1xi32>
    %207 = arith.cmpi eq, %198, %206 : vector<8x8x1xi32>
    %208 = arith.ori %205, %207 : vector<8x8x1xi1>
    %c0_i32_98 = arith.constant 0 : i32
    %209 = vector.broadcast %c0_i32_98 : i32 to vector<8x8x1xi32>
    %210 = arith.cmpi eq, %203, %209 : vector<8x8x1xi32>
    %211 = arith.ori %208, %210 : vector<8x8x1xi1>
    %c9_i32_99 = arith.constant 9 : i32
    %212 = vector.broadcast %c9_i32_99 : i32 to vector<8x8x1xi32>
    %213 = arith.cmpi eq, %203, %212 : vector<8x8x1xi32>
    %214 = arith.ori %211, %213 : vector<8x8x1xi1>
    %cst_100 = arith.constant 0.000000e+00 : f32
    %215 = vector.shape_cast %214 : vector<8x8x1xi1> to vector<8x8x1xi1>
    %216 = vector.broadcast %215 : vector<8x8x1xi1> to vector<8x8x8xi1>
    %217 = vector.broadcast %cst_100 : f32 to vector<8x8x8xf32>
    %218 = arith.select %216, %217, %193 : vector<8x8x8xi1>, vector<8x8x8xf32>
    %219 = vector.shape_cast %218 : vector<8x8x8xf32> to vector<64x8xf32>
    %220 = arith.truncf %219 : vector<64x8xf32> to vector<64x8xbf16>
    %c1_101 = arith.constant 1 : index
    %c2_102 = arith.constant 2 : index
    %c0_103 = arith.constant 0 : index
    %c0_104 = arith.constant 0 : index
    %221 = vector.load %arg3[%c1_101, %c2_102, %c0_103, %c0_104] : memref<3x3x8x8xbf16, #tpu.memory_space<vmem>>, vector<1x1x8x8xbf16>
    %222 = vector.shape_cast %221 : vector<1x1x8x8xbf16> to vector<8x8xbf16>
    %cst_105 = arith.constant dense<0.000000e+00> : vector<64x8xf32>
    %223 = tpu.matmul %220, %222, %cst_105 {dimension_numbers = #tpu.dot_dimension_numbers<[1], [0], [0], [1], [0, 0, 1, 1], [], []>} : vector<64x8xbf16>, vector<8x8xbf16>, vector<64x8xf32> -> vector<64x8xf32>
    %224 = arith.addf %183, %223 : vector<64x8xf32>
    %c0_106 = arith.constant 0 : index
    %c0_107 = arith.constant 0 : index
    %c2_108 = arith.constant 2 : index
    %c0_109 = arith.constant 0 : index
    %c0_110 = arith.constant 0 : index
    %225 = vector.load %arg1[%c0_106, %c0_107, %c2_108, %c0_109, %c0_110] : memref<1x1x10x10x8xf32, #tpu.memory_space<vmem>>, vector<1x1x8x8x8xf32>
    %226 = vector.shape_cast %225 : vector<1x1x8x8x8xf32> to vector<8x8x8xf32>
    %227 = vector.shape_cast %1 : vector<1x8xf32> to vector<1x1x8xf32>
    %228 = vector.broadcast %227 : vector<1x1x8xf32> to vector<8x8x8xf32>
    %229 = arith.mulf %226, %228 : vector<8x8x8xf32>
    %230 = vector.shape_cast %2 : vector<1x8xf32> to vector<1x1x8xf32>
    %231 = vector.broadcast %230 : vector<1x1x8xf32> to vector<8x8x8xf32>
    %232 = arith.addf %229, %231 : vector<8x8x8xf32>
    %cst_111 = arith.constant 0.000000e+00 : f32
    %233 = vector.broadcast %cst_111 : f32 to vector<8x8x8xf32>
    %234 = arith.maximumf %232, %233 : vector<8x8x8xf32>
    %235 = tpu.iota {dimensions = array<i32: 0>} : vector<8x8x1xi32>
    %c1_i32_112 = arith.constant 1 : i32
    %236 = vector.broadcast %c1_i32_112 : i32 to vector<8x8x1xi32>
    %237 = arith.muli %236, %235 : vector<8x8x1xi32>
    %c2_i32_113 = arith.constant 2 : i32
    %238 = vector.broadcast %c2_i32_113 : i32 to vector<8x8x1xi32>
    %239 = arith.addi %238, %237 : vector<8x8x1xi32>
    %240 = tpu.iota {dimensions = array<i32: 1>} : vector<8x8x1xi32>
    %c1_i32_114 = arith.constant 1 : i32
    %241 = vector.broadcast %c1_i32_114 : i32 to vector<8x8x1xi32>
    %242 = arith.muli %241, %240 : vector<8x8x1xi32>
    %c0_i32_115 = arith.constant 0 : i32
    %243 = vector.broadcast %c0_i32_115 : i32 to vector<8x8x1xi32>
    %244 = arith.addi %243, %242 : vector<8x8x1xi32>
    %c0_i32_116 = arith.constant 0 : i32
    %245 = vector.broadcast %c0_i32_116 : i32 to vector<8x8x1xi32>
    %246 = arith.cmpi eq, %239, %245 : vector<8x8x1xi32>
    %c9_i32_117 = arith.constant 9 : i32
    %247 = vector.broadcast %c9_i32_117 : i32 to vector<8x8x1xi32>
    %248 = arith.cmpi eq, %239, %247 : vector<8x8x1xi32>
    %249 = arith.ori %246, %248 : vector<8x8x1xi1>
    %c0_i32_118 = arith.constant 0 : i32
    %250 = vector.broadcast %c0_i32_118 : i32 to vector<8x8x1xi32>
    %251 = arith.cmpi eq, %244, %250 : vector<8x8x1xi32>
    %252 = arith.ori %249, %251 : vector<8x8x1xi1>
    %c9_i32_119 = arith.constant 9 : i32
    %253 = vector.broadcast %c9_i32_119 : i32 to vector<8x8x1xi32>
    %254 = arith.cmpi eq, %244, %253 : vector<8x8x1xi32>
    %255 = arith.ori %252, %254 : vector<8x8x1xi1>
    %cst_120 = arith.constant 0.000000e+00 : f32
    %256 = vector.shape_cast %255 : vector<8x8x1xi1> to vector<8x8x1xi1>
    %257 = vector.broadcast %256 : vector<8x8x1xi1> to vector<8x8x8xi1>
    %258 = vector.broadcast %cst_120 : f32 to vector<8x8x8xf32>
    %259 = arith.select %257, %258, %234 : vector<8x8x8xi1>, vector<8x8x8xf32>
    %260 = vector.shape_cast %259 : vector<8x8x8xf32> to vector<64x8xf32>
    %261 = arith.truncf %260 : vector<64x8xf32> to vector<64x8xbf16>
    %c2_121 = arith.constant 2 : index
    %c0_122 = arith.constant 0 : index
    %c0_123 = arith.constant 0 : index
    %c0_124 = arith.constant 0 : index
    %262 = vector.load %arg3[%c2_121, %c0_122, %c0_123, %c0_124] : memref<3x3x8x8xbf16, #tpu.memory_space<vmem>>, vector<1x1x8x8xbf16>
    %263 = vector.shape_cast %262 : vector<1x1x8x8xbf16> to vector<8x8xbf16>
    %cst_125 = arith.constant dense<0.000000e+00> : vector<64x8xf32>
    %264 = tpu.matmul %261, %263, %cst_125 {dimension_numbers = #tpu.dot_dimension_numbers<[1], [0], [0], [1], [0, 0, 1, 1], [], []>} : vector<64x8xbf16>, vector<8x8xbf16>, vector<64x8xf32> -> vector<64x8xf32>
    %265 = arith.addf %224, %264 : vector<64x8xf32>
    %c0_126 = arith.constant 0 : index
    %c0_127 = arith.constant 0 : index
    %c2_128 = arith.constant 2 : index
    %c1_129 = arith.constant 1 : index
    %c0_130 = arith.constant 0 : index
    %266 = vector.load %arg1[%c0_126, %c0_127, %c2_128, %c1_129, %c0_130] : memref<1x1x10x10x8xf32, #tpu.memory_space<vmem>>, vector<1x1x8x8x8xf32>
    %267 = vector.shape_cast %266 : vector<1x1x8x8x8xf32> to vector<8x8x8xf32>
    %268 = vector.shape_cast %1 : vector<1x8xf32> to vector<1x1x8xf32>
    %269 = vector.broadcast %268 : vector<1x1x8xf32> to vector<8x8x8xf32>
    %270 = arith.mulf %267, %269 : vector<8x8x8xf32>
    %271 = vector.shape_cast %2 : vector<1x8xf32> to vector<1x1x8xf32>
    %272 = vector.broadcast %271 : vector<1x1x8xf32> to vector<8x8x8xf32>
    %273 = arith.addf %270, %272 : vector<8x8x8xf32>
    %cst_131 = arith.constant 0.000000e+00 : f32
    %274 = vector.broadcast %cst_131 : f32 to vector<8x8x8xf32>
    %275 = arith.maximumf %273, %274 : vector<8x8x8xf32>
    %276 = tpu.iota {dimensions = array<i32: 0>} : vector<8x8x1xi32>
    %c1_i32_132 = arith.constant 1 : i32
    %277 = vector.broadcast %c1_i32_132 : i32 to vector<8x8x1xi32>
    %278 = arith.muli %277, %276 : vector<8x8x1xi32>
    %c2_i32_133 = arith.constant 2 : i32
    %279 = vector.broadcast %c2_i32_133 : i32 to vector<8x8x1xi32>
    %280 = arith.addi %279, %278 : vector<8x8x1xi32>
    %281 = tpu.iota {dimensions = array<i32: 1>} : vector<8x8x1xi32>
    %c1_i32_134 = arith.constant 1 : i32
    %282 = vector.broadcast %c1_i32_134 : i32 to vector<8x8x1xi32>
    %283 = arith.muli %282, %281 : vector<8x8x1xi32>
    %c1_i32_135 = arith.constant 1 : i32
    %284 = vector.broadcast %c1_i32_135 : i32 to vector<8x8x1xi32>
    %285 = arith.addi %284, %283 : vector<8x8x1xi32>
    %c0_i32_136 = arith.constant 0 : i32
    %286 = vector.broadcast %c0_i32_136 : i32 to vector<8x8x1xi32>
    %287 = arith.cmpi eq, %280, %286 : vector<8x8x1xi32>
    %c9_i32_137 = arith.constant 9 : i32
    %288 = vector.broadcast %c9_i32_137 : i32 to vector<8x8x1xi32>
    %289 = arith.cmpi eq, %280, %288 : vector<8x8x1xi32>
    %290 = arith.ori %287, %289 : vector<8x8x1xi1>
    %c0_i32_138 = arith.constant 0 : i32
    %291 = vector.broadcast %c0_i32_138 : i32 to vector<8x8x1xi32>
    %292 = arith.cmpi eq, %285, %291 : vector<8x8x1xi32>
    %293 = arith.ori %290, %292 : vector<8x8x1xi1>
    %c9_i32_139 = arith.constant 9 : i32
    %294 = vector.broadcast %c9_i32_139 : i32 to vector<8x8x1xi32>
    %295 = arith.cmpi eq, %285, %294 : vector<8x8x1xi32>
    %296 = arith.ori %293, %295 : vector<8x8x1xi1>
    %cst_140 = arith.constant 0.000000e+00 : f32
    %297 = vector.shape_cast %296 : vector<8x8x1xi1> to vector<8x8x1xi1>
    %298 = vector.broadcast %297 : vector<8x8x1xi1> to vector<8x8x8xi1>
    %299 = vector.broadcast %cst_140 : f32 to vector<8x8x8xf32>
    %300 = arith.select %298, %299, %275 : vector<8x8x8xi1>, vector<8x8x8xf32>
    %301 = vector.shape_cast %300 : vector<8x8x8xf32> to vector<64x8xf32>
    %302 = arith.truncf %301 : vector<64x8xf32> to vector<64x8xbf16>
    %c2_141 = arith.constant 2 : index
    %c1_142 = arith.constant 1 : index
    %c0_143 = arith.constant 0 : index
    %c0_144 = arith.constant 0 : index
    %303 = vector.load %arg3[%c2_141, %c1_142, %c0_143, %c0_144] : memref<3x3x8x8xbf16, #tpu.memory_space<vmem>>, vector<1x1x8x8xbf16>
    %304 = vector.shape_cast %303 : vector<1x1x8x8xbf16> to vector<8x8xbf16>
    %cst_145 = arith.constant dense<0.000000e+00> : vector<64x8xf32>
    %305 = tpu.matmul %302, %304, %cst_145 {dimension_numbers = #tpu.dot_dimension_numbers<[1], [0], [0], [1], [0, 0, 1, 1], [], []>} : vector<64x8xbf16>, vector<8x8xbf16>, vector<64x8xf32> -> vector<64x8xf32>
    %306 = arith.addf %265, %305 : vector<64x8xf32>
    %c0_146 = arith.constant 0 : index
    %c0_147 = arith.constant 0 : index
    %c2_148 = arith.constant 2 : index
    %c2_149 = arith.constant 2 : index
    %c0_150 = arith.constant 0 : index
    %307 = vector.load %arg1[%c0_146, %c0_147, %c2_148, %c2_149, %c0_150] : memref<1x1x10x10x8xf32, #tpu.memory_space<vmem>>, vector<1x1x8x8x8xf32>
    %308 = vector.shape_cast %307 : vector<1x1x8x8x8xf32> to vector<8x8x8xf32>
    %309 = vector.shape_cast %1 : vector<1x8xf32> to vector<1x1x8xf32>
    %310 = vector.broadcast %309 : vector<1x1x8xf32> to vector<8x8x8xf32>
    %311 = arith.mulf %308, %310 : vector<8x8x8xf32>
    %312 = vector.shape_cast %2 : vector<1x8xf32> to vector<1x1x8xf32>
    %313 = vector.broadcast %312 : vector<1x1x8xf32> to vector<8x8x8xf32>
    %314 = arith.addf %311, %313 : vector<8x8x8xf32>
    %cst_151 = arith.constant 0.000000e+00 : f32
    %315 = vector.broadcast %cst_151 : f32 to vector<8x8x8xf32>
    %316 = arith.maximumf %314, %315 : vector<8x8x8xf32>
    %317 = tpu.iota {dimensions = array<i32: 0>} : vector<8x8x1xi32>
    %c1_i32_152 = arith.constant 1 : i32
    %318 = vector.broadcast %c1_i32_152 : i32 to vector<8x8x1xi32>
    %319 = arith.muli %318, %317 : vector<8x8x1xi32>
    %c2_i32_153 = arith.constant 2 : i32
    %320 = vector.broadcast %c2_i32_153 : i32 to vector<8x8x1xi32>
    %321 = arith.addi %320, %319 : vector<8x8x1xi32>
    %322 = tpu.iota {dimensions = array<i32: 1>} : vector<8x8x1xi32>
    %c1_i32_154 = arith.constant 1 : i32
    %323 = vector.broadcast %c1_i32_154 : i32 to vector<8x8x1xi32>
    %324 = arith.muli %323, %322 : vector<8x8x1xi32>
    %c2_i32_155 = arith.constant 2 : i32
    %325 = vector.broadcast %c2_i32_155 : i32 to vector<8x8x1xi32>
    %326 = arith.addi %325, %324 : vector<8x8x1xi32>
    %c0_i32_156 = arith.constant 0 : i32
    %327 = vector.broadcast %c0_i32_156 : i32 to vector<8x8x1xi32>
    %328 = arith.cmpi eq, %321, %327 : vector<8x8x1xi32>
    %c9_i32_157 = arith.constant 9 : i32
    %329 = vector.broadcast %c9_i32_157 : i32 to vector<8x8x1xi32>
    %330 = arith.cmpi eq, %321, %329 : vector<8x8x1xi32>
    %331 = arith.ori %328, %330 : vector<8x8x1xi1>
    %c0_i32_158 = arith.constant 0 : i32
    %332 = vector.broadcast %c0_i32_158 : i32 to vector<8x8x1xi32>
    %333 = arith.cmpi eq, %326, %332 : vector<8x8x1xi32>
    %334 = arith.ori %331, %333 : vector<8x8x1xi1>
    %c9_i32_159 = arith.constant 9 : i32
    %335 = vector.broadcast %c9_i32_159 : i32 to vector<8x8x1xi32>
    %336 = arith.cmpi eq, %326, %335 : vector<8x8x1xi32>
    %337 = arith.ori %334, %336 : vector<8x8x1xi1>
    %cst_160 = arith.constant 0.000000e+00 : f32
    %338 = vector.shape_cast %337 : vector<8x8x1xi1> to vector<8x8x1xi1>
    %339 = vector.broadcast %338 : vector<8x8x1xi1> to vector<8x8x8xi1>
    %340 = vector.broadcast %cst_160 : f32 to vector<8x8x8xf32>
    %341 = arith.select %339, %340, %316 : vector<8x8x8xi1>, vector<8x8x8xf32>
    %342 = vector.shape_cast %341 : vector<8x8x8xf32> to vector<64x8xf32>
    %343 = arith.truncf %342 : vector<64x8xf32> to vector<64x8xbf16>
    %c2_161 = arith.constant 2 : index
    %c2_162 = arith.constant 2 : index
    %c0_163 = arith.constant 0 : index
    %c0_164 = arith.constant 0 : index
    %344 = vector.load %arg3[%c2_161, %c2_162, %c0_163, %c0_164] : memref<3x3x8x8xbf16, #tpu.memory_space<vmem>>, vector<1x1x8x8xbf16>
    %345 = vector.shape_cast %344 : vector<1x1x8x8xbf16> to vector<8x8xbf16>
    %cst_165 = arith.constant dense<0.000000e+00> : vector<64x8xf32>
    %346 = tpu.matmul %343, %345, %cst_165 {dimension_numbers = #tpu.dot_dimension_numbers<[1], [0], [0], [1], [0, 0, 1, 1], [], []>} : vector<64x8xbf16>, vector<8x8xbf16>, vector<64x8xf32> -> vector<64x8xf32>
    %347 = arith.addf %306, %346 : vector<64x8xf32>
    %348 = vector.shape_cast %347 : vector<64x8xf32> to vector<8x8x8xf32>
    %c0_166 = arith.constant 0 : index
    %c0_167 = arith.constant 0 : index
    %c0_168 = arith.constant 0 : index
    %c0_169 = arith.constant 0 : index
    %349 = vector.load %arg4[%c0_166, %c0_167, %c0_168, %c0_169] : memref<1x8x8x8xf32, #tpu.memory_space<vmem>>, vector<1x8x8x8xf32>
    %350 = vector.shape_cast %349 : vector<1x8x8x8xf32> to vector<8x8x8xf32>
    %351 = arith.addf %348, %350 : vector<8x8x8xf32>
    %c0_170 = arith.constant 0 : index
    %c0_171 = arith.constant 0 : index
    %c0_172 = arith.constant 0 : index
    %c0_173 = arith.constant 0 : index
    %352 = vector.load %arg5[%c0_170, %c0_171, %c0_172, %c0_173] : memref<1x8x8x8xf32, #tpu.memory_space<vmem>>, vector<1x8x8x8xf32>
    %353 = vector.shape_cast %352 : vector<1x8x8x8xf32> to vector<8x8x8xf32>
    %354 = vector.shape_cast %351 : vector<8x8x8xf32> to vector<1x8x8x8xf32>
    tpu.vector_store %arg5[%c0_170, %c0_171, %c0_172, %c0_173], %354 {strides = array<i32>} : memref<1x8x8x8xf32, #tpu.memory_space<vmem>>, vector<1x8x8x8xf32>,
    return
  }
  func.func @transform_0(%arg0: i32) -> (i32, i32, i32, i32, i32) {
    %c0_i32 = arith.constant 0 : i32
    %c0_i32_0 = arith.constant 0 : i32
    %c0_i32_1 = arith.constant 0 : i32
    %c0_i32_2 = arith.constant 0 : i32
    %c0_i32_3 = arith.constant 0 : i32
    return %arg0, %c0_i32, %c0_i32_0, %c0_i32_1, %c0_i32_2 : i32, i32, i32, i32, i32
  }
  func.func @transform_1(%arg0: i32) -> (i32, i32) {
    %c0_i32 = arith.constant 0 : i32
    %c0_i32_0 = arith.constant 0 : i32
    %c0_i32_1 = arith.constant 0 : i32
    return %c0_i32, %c0_i32_0 : i32, i32
  }
  func.func @transform_2(%arg0: i32) -> (i32, i32, i32, i32) {
    %c0_i32 = arith.constant 0 : i32
    %c0_i32_0 = arith.constant 0 : i32
    %c0_i32_1 = arith.constant 0 : i32
    %c0_i32_2 = arith.constant 0 : i32
    %c0_i32_3 = arith.constant 0 : i32
    return %c0_i32, %c0_i32_0, %c0_i32_1, %c0_i32_2 : i32, i32, i32, i32
  }
  func.func @transform_3(%arg0: i32) -> (i32, i32, i32, i32) {
    %c0_i32 = arith.constant 0 : i32
    %c0_i32_0 = arith.constant 0 : i32
    %c0_i32_1 = arith.constant 0 : i32
    %c0_i32_2 = arith.constant 0 : i32
    return %arg0, %c0_i32, %c0_i32_0, %c0_i32_1 : i32, i32, i32, i32
  }
  func.func @transform_4(%arg0: i32) -> (i32, i32, i32, i32) {
    %c0_i32 = arith.constant 0 : i32
    %c0_i32_0 = arith.constant 0 : i32
    %c0_i32_1 = arith.constant 0 : i32
    %c0_i32_2 = arith.constant 0 : i32
    return %arg0, %c0_i32, %c0_i32_0, %c0_i32_1 : i32, i32, i32, i32
  }
}

</mosaic_0001>

<llo_original>
// kernel: preact_block_forward.6
$region0: #{preact_block_forward.6}
  #allocation0 [shape = 'u32[]', space=smem, size = 0x4, offset = 0x4, fixed_abs, tag = 'smem constant byte address 0x4 - core index']
  #allocation1 [shape = 'u32[144,128]{1,0:T(1,128)}', space=vmem, size = 0x12000, scoped, tag = 'internal scratch']
  #allocation2 [shape = 'f32[2,8]{1,0:T(2,128)}', space=vmem, size = 0x400, scoped, tag = 'scratch operand']
  %s0 = inlined_call_operand.vmem [shape: f32[2,8,8,8], index: 0, kind: input, shape index: {}]
  %s1 = inlined_call_operand.vmem [shape: f32[1,8], index: 1, kind: input, shape index: {}]
  %s2 = inlined_call_operand.vmem [shape: f32[1,8], index: 2, kind: input, shape index: {}]
  %s3 = inlined_call_operand.vmem [shape: f32[2,8], index: 3, kind: output, shape index: {}]
  %s4 = sld [smem:[#allocation0]]
  $region53: #{preact_block_forward.6} parent=0
    _
  %s6 = ssub.s32 1, %s4
  %s7 = scalar_select 0, %s6, %s4
  loop: start=0, step=1, limit=4
  $region2: #{preact_block_forward.6} parent=0 // loop_pre_header
    _
  $region3: #{preact_block_forward.6} parent=0 // loop_header
    %s9 = sphi 0, %s13
    %p10 = scmp.ge.s32.totalorder %s9, 4
    %s19 = sphi 0, %s21
    %s22 = sphi 0, %s19
    %s23 = sphi 0, %s22
    %s39 = sphi 0, %s23
    %s43 = sphi 0, %s43
    %s45 = sphi 0, %s43
    %s46 = sphi 0, %s45
    %s60 = sphi 0, %s46
    %s64 = sphi 0, %s64
    %s66 = sphi 0, %s64
    %s67 = sphi 0, %s66
    %s81 = sphi 0, %s67
    %s85 = sphi 0, %s85
    %s87 = sphi 0, %s85
    %s88 = sphi 0, %s87
    %s102 = sphi 0, %s88
  $region4: #{preact_block_forward.6} parent=0 // loop_header_branch
    %12 = sbr.rel (%p10) target = $region8
  $region5: #{preact_block_forward.6} parent=0 // loop_body
    %s14 = ssub.s32 %s9, 1
    %s15 = ssub.s32 %s9, 2
    %s16 = sadd.s32 %s9, 1
    %s17 = ssub.s32 %s9, %s16
    %p18 = scmp.eq.s32.totalorder %s17, 0
    %s20 = sadd.s32 %s19, 1
    %s21 = scalar_select %p18, %s19, %s20
    %p24 = pneg %p18
    %p25 = scmp.eq.s32.totalorder %s9, 1
    %p26 = por %p24, %p25
    %p27 = scmp.ne.s32.totalorder %s19, %s22
    %p28 = scmp.eq.s32.totalorder %s9, 0
    %p29 = por %p27, %p28
    %p30 = scmp.ne.s32.totalorder %s19, %s22
    %p31 = scmp.eq.s32.totalorder %s14, 1
    %p32 = por %p30, %p31
    %p33 = scmp.ne.s32.totalorder %s22, %s23
    %p34 = scmp.eq.s32.totalorder %s14, 0
    %p35 = por %p33, %p34
    %p36 = scmp.ne.s32.totalorder %s22, %s23
    %p37 = scmp.eq.s32.totalorder %s15, 1
    %p38 = por %p36, %p37
    %p40 = scmp.ne.s32.totalorder %s23, %s39
    %p41 = scmp.eq.s32.totalorder %s15, 0
    %p42 = por %p40, %p41
    %s44 = sadd.s32 %s43, 1
    %p47 = scmp.eq.s32.totalorder %s9, 1
    %p48 = scmp.ne.s32.totalorder %s43, %s45
    %p49 = scmp.eq.s32.totalorder %s9, 0
    %p50 = por %p48, %p49
    %p51 = scmp.ne.s32.totalorder %s43, %s45
    %p52 = scmp.eq.s32.totalorder %s14, 1
    %p53 = por %p51, %p52
    %p54 = scmp.ne.s32.totalorder %s45, %s46
    %p55 = scmp.eq.s32.totalorder %s14, 0
    %p56 = por %p54, %p55
    %p57 = scmp.ne.s32.totalorder %s45, %s46
    %p58 = scmp.eq.s32.totalorder %s15, 1
    %p59 = por %p57, %p58
    %p61 = scmp.ne.s32.totalorder %s46, %s60
    %p62 = scmp.eq.s32.totalorder %s15, 0
    %p63 = por %p61, %p62
    %s65 = sadd.s32 %s64, 1
    %p68 = scmp.eq.s32.totalorder %s9, 1
    %p69 = scmp.ne.s32.totalorder %s64, %s66
    %p70 = scmp.eq.s32.totalorder %s9, 0
    %p71 = por %p69, %p70
    %p72 = scmp.ne.s32.totalorder %s64, %s66
    %p73 = scmp.eq.s32.totalorder %s14, 1
    %p74 = por %p72, %p73
    %p75 = scmp.ne.s32.totalorder %s66, %s67
    %p76 = scmp.eq.s32.totalorder %s14, 0
    %p77 = por %p75, %p76
    %p78 = scmp.ne.s32.totalorder %s66, %s67
    %p79 = scmp.eq.s32.totalorder %s15, 1
    %p80 = por %p78, %p79
    %p82 = scmp.ne.s32.totalorder %s67, %s81
    %p83 = scmp.eq.s32.totalorder %s15, 0
    %p84 = por %p82, %p83
    %s86 = sadd.s32 %s85, 1
    %p89 = scmp.eq.s32.totalorder %s9, 1
    %p90 = scmp.ne.s32.totalorder %s85, %s87
    %p91 = scmp.eq.s32.totalorder %s9, 0
    %p92 = por %p90, %p91
    %p93 = scmp.ne.s32.totalorder %s85, %s87
    %p94 = scmp.eq.s32.totalorder %s14, 1
    %p95 = por %p93, %p94
    %p96 = scmp.ne.s32.totalorder %s87, %s88
    %p97 = scmp.eq.s32.totalorder %s14, 0
    %p98 = por %p96, %p97
    %p99 = scmp.ne.s32.totalorder %s87, %s88
    %p100 = scmp.eq.s32.totalorder %s15, 1
    %p101 = por %p99, %p100
    %p103 = scmp.ne.s32.totalorder %s88, %s102
    %p104 = scmp.eq.s32.totalorder %s15, 0
    %p105 = por %p103, %p104
    %p106 = scmp.le.s32.totalorder 1, %s9
    %p107 = scmp.lt.s32.totalorder %s9, 3
    %p108 = pnand %p106, %p107
    %p109 = pneg %p108
    // Predicated region
    $region9: #{preact_block_forward.6} parent=5 // pred_check
      _
    $region10: #{preact_block_forward.6} parent=5 // pred_check_branch
      %111 = sbr.rel (%p108) target = $region12
    $region11: #{preact_block_forward.6} parent=5 // pred_region
      %s112 = ssub.s32 %s9, 1
      // Predicated region
      $region13: #{preact_block_forward.6} parent=11 // pred_check
        %p113 = pneg %p56
      $region14: #{preact_block_forward.6} parent=11 // pred_check_branch
        %115 = sbr.rel (%p113) target = $region16
      $region15: #{preact_block_forward.6} parent=11 // pred_region
        _
      $region16: #{preact_block_forward.6} parent=11 // pred_fallthru
        _
      // Predicated region
      $region17: #{preact_block_forward.6} parent=11 // pred_check
        %p116 = pneg %p77
      $region18: #{preact_block_forward.6} parent=11 // pred_check_branch
        %118 = sbr.rel (%p116) target = $region20
      $region19: #{preact_block_forward.6} parent=11 // pred_region
        _
      $region20: #{preact_block_forward.6} parent=11 // pred_fallthru
        _
    $region12: #{preact_block_forward.6} parent=5 // pred_fallthru
      _
    %p119 = scmp.lt.s32.totalorder %s9, 2
    // Predicated region
    $region21: #{preact_block_forward.6} parent=5 // pred_check
      %p120 = pneg %p119
    $region22: #{preact_block_forward.6} parent=5 // pred_check_branch
      %122 = sbr.rel (%p120) target = $region24
    $region23: #{preact_block_forward.6} parent=5 // pred_region
      // Predicated region
      $region25: #{preact_block_forward.6} parent=23 // pred_check
        %p123 = pneg %p29
      $region26: #{preact_block_forward.6} parent=23 // pred_check_branch
        %125 = sbr.rel (%p123) target = $region28
      $region27: #{preact_block_forward.6} parent=23 // pred_region
        %p126 = scmp.lt.s32.totalorder %s9, 1
        %s127 = scalar_select %p126, %s9, 1
        %s128 = smul.addr %s127, 8
        %s129 = smul.addr %s128, 8
        %s130 = scalar_lea.vmem %s0, %s129
      $region28: #{preact_block_forward.6} parent=23 // pred_fallthru
        _
    $region24: #{preact_block_forward.6} parent=5 // pred_fallthru
      _
    %p131 = scmp.le.s32.totalorder 1, %s9
    %p132 = scmp.lt.s32.totalorder %s9, 3
    %p133 = pnand %p131, %p132
    %p134 = pneg %p133
    // Predicated region
    $region29: #{preact_block_forward.6} parent=5 // pred_check
      _
    $region30: #{preact_block_forward.6} parent=5 // pred_check_branch
      %136 = sbr.rel (%p133) target = $region32
    $region31: #{preact_block_forward.6} parent=5 // pred_region
      %s137 = ssub.s32 %s9, 1
      %p138 = scmp.lt.s32.totalorder %s14, 1
      %s139 = scalar_select %p138, %s14, 1
      %s140 = smul.addr %s139, 8
      %s141 = smul.addr %s140, 8
      %s142 = scalar_lea.vmem %s0, %s141
      %p143 = pneg %p35
      %p144 = pneg %p32
      %p145 = pneg %p56
      %p146 = pneg %p53
      %p147 = pneg %p77
      %p148 = pneg %p74
      %p149 = pneg %p98
      %p150 = pneg %p95
      %p151 = scmp.lt.s32.totalorder %s14, 1
      %s152 = scalar_select %p151, %s14, 1
      %s153 = smul.addr %s152, 8
      %s154 = smul.addr %s153, 8
      %s155 = scalar_lea.vmem %s0, %s154
      %p156 = scmp.eq.s32.totalorder %s14, 0
      // Predicated region
      $region33: #{preact_block_forward.6} parent=31 // pred_check
        %p157 = pneg %p156
      $region34: #{preact_block_forward.6} parent=31 // pred_check_branch
        %159 = sbr.rel (%p157) target = $region36
      $region35: #{preact_block_forward.6} parent=31 // pred_region
        %vm160 = vcmask 58368
        %161 = vst.msk [vmem:[#allocation2] sm:$0x3] %vm160, 0.0
      $region36: #{preact_block_forward.6} parent=31 // pred_fallthru
        _
      %v162 = vld [vmem:[%s155] sm:$0xff]
      %v163 = vld [vmem:[%s155 + $0x8] sm:$0xff]
      %v164 = vld [vmem:[%s155 + $0x10] sm:$0xff]
      %v165 = vld [vmem:[%s155 + $0x18] sm:$0xff]
      %v166 = vld [vmem:[%s155 + $0x20] sm:$0xff]
      %v167 = vld [vmem:[%s155 + $0x28] sm:$0xff]
      %v168 = vld [vmem:[%s155 + $0x30] sm:$0xff]
      %v169 = vld [vmem:[%s155 + $0x38] sm:$0xff]
      %vm170 = vcmask 64512
      %v171 = vsel %vm170, %v162, 0.0
      %v172 = vsel %vm170, %v163, 0.0
      %v173 = vadd.f32 %v171, %v172
      %v174 = vsel %vm170, %v164, 0.0
      %v175 = vadd.f32 %v173, %v174
      %v176 = vsel %vm170, %v165, 0.0
      %v177 = vadd.f32 %v175, %v176
      %v178 = vsel %vm170, %v166, 0.0
      %v179 = vadd.f32 %v177, %v178
      %v180 = vsel %vm170, %v167, 0.0
      %v181 = vadd.f32 %v179, %v180
      %v182 = vsel %vm170, %v168, 0.0
      %v183 = vadd.f32 %v181, %v182
      %v184 = vsel %vm170, %v169, 0.0
      %v185 = vadd.f32 %v183, %v184
      %v186 = vsel %vm170, %v185, 0.0
      %v187 = vrot.slane %v186, 4
      %v188 = vadd.f32 %v186, %v187
      %v189 = vrot.slane %v188, 2
      %v190 = vadd.f32 %v188, %v189
      %v191 = vrot.slane %v190, 1
      %v192 = vadd.f32 %v190, %v191
      %v193 = vmul.f32 %v162, %v162
      %v194 = vmul.f32 %v163, %v163
      %v195 = vmul.f32 %v164, %v164
      %v196 = vmul.f32 %v165, %v165
      %v197 = vmul.f32 %v166, %v166
      %v198 = vmul.f32 %v167, %v167
      %v199 = vmul.f32 %v168, %v168
      %v200 = vmul.f32 %v169, %v169
      %v201 = vsel %vm170, %v193, 0.0
      %v202 = vsel %vm170, %v194, 0.0
      %v203 = vadd.f32 %v201, %v202
      %v204 = vsel %vm170, %v195, 0.0
      %v205 = vadd.f32 %v203, %v204
      %v206 = vsel %vm170, %v196, 0.0
      %v207 = vadd.f32 %v205, %v206
      %v208 = vsel %vm170, %v197, 0.0
      %v209 = vadd.f32 %v207, %v208
      %v210 = vsel %vm170, %v198, 0.0
      %v211 = vadd.f32 %v209, %v210
      %v212 = vsel %vm170, %v199, 0.0
      %v213 = vadd.f32 %v211, %v212
      %v214 = vsel %vm170, %v200, 0.0
      %v215 = vadd.f32 %v213, %v214
      %v216 = vsel %vm170, %v215, 0.0
      %v217 = vrot.slane %v216, 4
      %v218 = vadd.f32 %v216, %v217
      %v219 = vrot.slane %v218, 2
      %v220 = vadd.f32 %v218, %v219
      %v221 = vrot.slane %v220, 1
      %v222 = vadd.f32 %v220, %v221
      %v223 = vld [vmem:[#allocation2] sm:$0x1]
      %v224 = vadd.f32 %v223, %v192
      %vm225 = vcmask 57344
      %226 = vst.msk [vmem:[#allocation2] sm:$0x1] %vm225, %v224
      %v227 = vld [vmem:[#allocation2 + $0x1] sm:$0x1]
      %v228 = vadd.f32 %v227, %v222
      %229 = vst.msk [vmem:[#allocation2 + $0x1] sm:$0x1] %vm225, %v228
      %p230 = scmp.eq.s32.totalorder %s14, 1
      // Predicated region
      $region37: #{preact_block_forward.6} parent=31 // pred_check
        %p231 = pneg %p230
      $region38: #{preact_block_forward.6} parent=31 // pred_check_branch
        %233 = sbr.rel (%p231) target = $region40
      $region39: #{preact_block_forward.6} parent=31 // pred_region
        %v234 = vld [vmem:[#allocation2] sm:$0x1]
        %v235 = vmul.f32 %v234, 0.0078125
        %v236 = vld [vmem:[#allocation2 + $0x1] sm:$0x1]
        %v237 = vmul.f32 %v236, 0.0078125
        %v238 = vmul.f32 %v235, %v235
        %v239 = vsub.f32 %v237, %v238
        %v240 = vld [vmem:[%s1] sm:$0x1]
        %v241 = vadd.f32 %v239, 1e-05
        %v242 = vrsqrt.pop %v241
        %v243 = vmul.f32 %v240, %v242
        %244 = vst.msk [vmem:[%s3] sm:$0x1] %vm225, %v243
        %v245 = vld [vmem:[%s2] sm:$0x1]
        %v246 = vmul.f32 %v235, %v243
        %v247 = vsub.f32 %v245, %v246
        %248 = vst.msk [vmem:[%s3 + $0x1] sm:$0x1] %vm225, %v247
      $region40: #{preact_block_forward.6} parent=31 // pred_fallthru
        _
      // Predicated region
      $region41: #{preact_block_forward.6} parent=31 // pred_check
        %p249 = pneg %p95
      $region42: #{preact_block_forward.6} parent=31 // pred_check_branch
        %251 = sbr.rel (%p249) target = $region44
      $region43: #{preact_block_forward.6} parent=31 // pred_region
        _
      $region44: #{preact_block_forward.6} parent=31 // pred_fallthru
        _
      // Predicated region
      $region45: #{preact_block_forward.6} parent=31 // pred_check
        %p252 = pneg %p95
      $region46: #{preact_block_forward.6} parent=31 // pred_check_branch
        %254 = sbr.rel (%p252) target = $region48
      $region47: #{preact_block_forward.6} parent=31 // pred_region
        _
      $region48: #{preact_block_forward.6} parent=31 // pred_fallthru
        _
    $region32: #{preact_block_forward.6} parent=5 // pred_fallthru
      _
    %p255 = scmp.le.s32.totalorder 2, %s9
    // Predicated region
    $region49: #{preact_block_forward.6} parent=5 // pred_check
      %p256 = pneg %p255
    $region50: #{preact_block_forward.6} parent=5 // pred_check_branch
      %258 = sbr.rel (%p256) target = $region52
    $region51: #{preact_block_forward.6} parent=5 // pred_region
      %s259 = ssub.s32 %s9, 2
    $region52: #{preact_block_forward.6} parent=5 // pred_fallthru
      _
  $region6: #{preact_block_forward.6} parent=0 // loop_footer
    %s13 = sadd.s32 1, %s9
  $region7: #{preact_block_forward.6} parent=0 // loop_footer_branch
    %8 = sbr.rel target = $region3
  $region8: #{preact_block_forward.6} parent=0 // loop_exit
    _

// kernel: preact_block_forward.4
$region0: #{preact_block_forward.4}
  #allocation0 [shape = 'u32[]', space=smem, size = 0x4, offset = 0x4, fixed_abs, tag = 'smem constant byte address 0x4 - core index']
  #allocation1 [shape = 'u32[144,128]{1,0:T(1,128)}', space=vmem, size = 0x12000, scoped, tag = 'internal scratch']
  #allocation2 [shape = 'f32[2,4]{1,0:T(2,128)}', space=vmem, size = 0x400, scoped, tag = 'scratch operand']
  %s0 = inlined_call_operand.vmem [shape: f32[2,16,16,4], index: 0, kind: input, shape index: {}]
  %s1 = inlined_call_operand.vmem [shape: f32[1,4], index: 1, kind: input, shape index: {}]
  %s2 = inlined_call_operand.vmem [shape: f32[1,4], index: 2, kind: input, shape index: {}]
  %s3 = inlined_call_operand.vmem [shape: f32[2,4], index: 3, kind: output, shape index: {}]
  %s4 = sld [smem:[#allocation0]]
  $region53: #{preact_block_forward.4} parent=0
    _
  %s6 = ssub.s32 1, %s4
  %s7 = scalar_select 0, %s6, %s4
  loop: start=0, step=1, limit=4
  $region2: #{preact_block_forward.4} parent=0 // loop_pre_header
    _
  $region3: #{preact_block_forward.4} parent=0 // loop_header
    %s9 = sphi 0, %s13
    %p10 = scmp.ge.s32.totalorder %s9, 4
    %s19 = sphi 0, %s21
    %s22 = sphi 0, %s19
    %s23 = sphi 0, %s22
    %s39 = sphi 0, %s23
    %s43 = sphi 0, %s43
    %s45 = sphi 0, %s43
    %s46 = sphi 0, %s45
    %s60 = sphi 0, %s46
    %s64 = sphi 0, %s64
    %s66 = sphi 0, %s64
    %s67 = sphi 0, %s66
    %s81 = sphi 0, %s67
    %s85 = sphi 0, %s85
    %s87 = sphi 0, %s85
    %s88 = sphi 0, %s87
    %s102 = sphi 0, %s88
  $region4: #{preact_block_forward.4} parent=0 // loop_header_branch
    %12 = sbr.rel (%p10) target = $region8
  $region5: #{preact_block_forward.4} parent=0 // loop_body
    %s14 = ssub.s32 %s9, 1
    %s15 = ssub.s32 %s9, 2
    %s16 = sadd.s32 %s9, 1
    %s17 = ssub.s32 %s9, %s16
    %p18 = scmp.eq.s32.totalorder %s17, 0
    %s20 = sadd.s32 %s19, 1
    %s21 = scalar_select %p18, %s19, %s20
    %p24 = pneg %p18
    %p25 = scmp.eq.s32.totalorder %s9, 1
    %p26 = por %p24, %p25
    %p27 = scmp.ne.s32.totalorder %s19, %s22
    %p28 = scmp.eq.s32.totalorder %s9, 0
    %p29 = por %p27, %p28
    %p30 = scmp.ne.s32.totalorder %s19, %s22
    %p31 = scmp.eq.s32.totalorder %s14, 1
    %p32 = por %p30, %p31
    %p33 = scmp.ne.s32.totalorder %s22, %s23
    %p34 = scmp.eq.s32.totalorder %s14, 0
    %p35 = por %p33, %p34
    %p36 = scmp.ne.s32.totalorder %s22, %s23
    %p37 = scmp.eq.s32.totalorder %s15, 1
    %p38 = por %p36, %p37
    %p40 = scmp.ne.s32.totalorder %s23, %s39
    %p41 = scmp.eq.s32.totalorder %s15, 0
    %p42 = por %p40, %p41
    %s44 = sadd.s32 %s43, 1
    %p47 = scmp.eq.s32.totalorder %s9, 1
    %p48 = scmp.ne.s32.totalorder %s43, %s45
    %p49 = scmp.eq.s32.totalorder %s9, 0
    %p50 = por %p48, %p49
    %p51 = scmp.ne.s32.totalorder %s43, %s45
    %p52 = scmp.eq.s32.totalorder %s14, 1
    %p53 = por %p51, %p52
    %p54 = scmp.ne.s32.totalorder %s45, %s46
    %p55 = scmp.eq.s32.totalorder %s14, 0
    %p56 = por %p54, %p55
    %p57 = scmp.ne.s32.totalorder %s45, %s46
    %p58 = scmp.eq.s32.totalorder %s15, 1
    %p59 = por %p57, %p58
    %p61 = scmp.ne.s32.totalorder %s46, %s60
    %p62 = scmp.eq.s32.totalorder %s15, 0
    %p63 = por %p61, %p62
    %s65 = sadd.s32 %s64, 1
    %p68 = scmp.eq.s32.totalorder %s9, 1
    %p69 = scmp.ne.s32.totalorder %s64, %s66
    %p70 = scmp.eq.s32.totalorder %s9, 0
    %p71 = por %p69, %p70
    %p72 = scmp.ne.s32.totalorder %s64, %s66
    %p73 = scmp.eq.s32.totalorder %s14, 1
    %p74 = por %p72, %p73
    %p75 = scmp.ne.s32.totalorder %s66, %s67
    %p76 = scmp.eq.s32.totalorder %s14, 0
    %p77 = por %p75, %p76
    %p78 = scmp.ne.s32.totalorder %s66, %s67
    %p79 = scmp.eq.s32.totalorder %s15, 1
    %p80 = por %p78, %p79
    %p82 = scmp.ne.s32.totalorder %s67, %s81
    %p83 = scmp.eq.s32.totalorder %s15, 0
    %p84 = por %p82, %p83
    %s86 = sadd.s32 %s85, 1
    %p89 = scmp.eq.s32.totalorder %s9, 1
    %p90 = scmp.ne.s32.totalorder %s85, %s87
    %p91 = scmp.eq.s32.totalorder %s9, 0
    %p92 = por %p90, %p91
    %p93 = scmp.ne.s32.totalorder %s85, %s87
    %p94 = scmp.eq.s32.totalorder %s14, 1
    %p95 = por %p93, %p94
    %p96 = scmp.ne.s32.totalorder %s87, %s88
    %p97 = scmp.eq.s32.totalorder %s14, 0
    %p98 = por %p96, %p97
    %p99 = scmp.ne.s32.totalorder %s87, %s88
    %p100 = scmp.eq.s32.totalorder %s15, 1
    %p101 = por %p99, %p100
    %p103 = scmp.ne.s32.totalorder %s88, %s102
    %p104 = scmp.eq.s32.totalorder %s15, 0
    %p105 = por %p103, %p104
    %p106 = scmp.le.s32.totalorder 1, %s9
    %p107 = scmp.lt.s32.totalorder %s9, 3
    %p108 = pnand %p106, %p107
    %p109 = pneg %p108
    // Predicated region
    $region9: #{preact_block_forward.4} parent=5 // pred_check
      _
    $region10: #{preact_block_forward.4} parent=5 // pred_check_branch
      %111 = sbr.rel (%p108) target = $region12
    $region11: #{preact_block_forward.4} parent=5 // pred_region
      %s112 = ssub.s32 %s9, 1
      // Predicated region
      $region13: #{preact_block_forward.4} parent=11 // pred_check
        %p113 = pneg %p56
      $region14: #{preact_block_forward.4} parent=11 // pred_check_branch
        %115 = sbr.rel (%p113) target = $region16
      $region15: #{preact_block_forward.4} parent=11 // pred_region
        _
      $region16: #{preact_block_forward.4} parent=11 // pred_fallthru
        _
      // Predicated region
      $region17: #{preact_block_forward.4} parent=11 // pred_check
        %p116 = pneg %p77
      $region18: #{preact_block_forward.4} parent=11 // pred_check_branch
        %118 = sbr.rel (%p116) target = $region20
      $region19: #{preact_block_forward.4} parent=11 // pred_region
        _
      $region20: #{preact_block_forward.4} parent=11 // pred_fallthru
        _
    $region12: #{preact_block_forward.4} parent=5 // pred_fallthru
      _
    %p119 = scmp.lt.s32.totalorder %s9, 2
    // Predicated region
    $region21: #{preact_block_forward.4} parent=5 // pred_check
      %p120 = pneg %p119
    $region22: #{preact_block_forward.4} parent=5 // pred_check_branch
      %122 = sbr.rel (%p120) target = $region24
    $region23: #{preact_block_forward.4} parent=5 // pred_region
      // Predicated region
      $region25: #{preact_block_forward.4} parent=23 // pred_check
        %p123 = pneg %p29
      $region26: #{preact_block_forward.4} parent=23 // pred_check_branch
        %125 = sbr.rel (%p123) target = $region28
      $region27: #{preact_block_forward.4} parent=23 // pred_region
        %p126 = scmp.lt.s32.totalorder %s9, 1
        %s127 = scalar_select %p126, %s9, 1
        %s128 = smul.addr %s127, 32
        %s129 = smul.addr %s128, 8
        %s130 = scalar_lea.vmem %s0, %s129
      $region28: #{preact_block_forward.4} parent=23 // pred_fallthru
        _
    $region24: #{preact_block_forward.4} parent=5 // pred_fallthru
      _
    %p131 = scmp.le.s32.totalorder 1, %s9
    %p132 = scmp.lt.s32.totalorder %s9, 3
    %p133 = pnand %p131, %p132
    %p134 = pneg %p133
    // Predicated region
    $region29: #{preact_block_forward.4} parent=5 // pred_check
      _
    $region30: #{preact_block_forward.4} parent=5 // pred_check_branch
      %136 = sbr.rel (%p133) target = $region32
    $region31: #{preact_block_forward.4} parent=5 // pred_region
      %s137 = ssub.s32 %s9, 1
      %p138 = scmp.lt.s32.totalorder %s14, 1
      %s139 = scalar_select %p138, %s14, 1
      %s140 = smul.addr %s139, 32
      %s141 = smul.addr %s140, 8
      %s142 = scalar_lea.vmem %s0, %s141
      %p143 = pneg %p35
      %p144 = pneg %p32
      %p145 = pneg %p56
      %p146 = pneg %p53
      %p147 = pneg %p77
      %p148 = pneg %p74
      %p149 = pneg %p98
      %p150 = pneg %p95
      %p151 = scmp.lt.s32.totalorder %s14, 1
      %s152 = scalar_select %p151, %s14, 1
      %s153 = smul.addr %s152, 32
      %s154 = smul.addr %s153, 8
      %s155 = scalar_lea.vmem %s0, %s154
      %p156 = scmp.eq.s32.totalorder %s14, 0
      // Predicated region
      $region33: #{preact_block_forward.4} parent=31 // pred_check
        %p157 = pneg %p156
      $region34: #{preact_block_forward.4} parent=31 // pred_check_branch
        %159 = sbr.rel (%p157) target = $region36
      $region35: #{preact_block_forward.4} parent=31 // pred_region
        %vm160 = vcmask 25600
        %161 = vst.msk [vmem:[#allocation2] sm:$0x3] %vm160, 0.0
      $region36: #{preact_block_forward.4} parent=31 // pred_fallthru
        _
      %v162 = vld [vmem:[%s155] sm:$0xff]
      %v163 = vld [vmem:[%s155 + $0x8] sm:$0xff]
      %v164 = vld [vmem:[%s155 + $0x10] sm:$0xff]
      %v165 = vld [vmem:[%s155 + $0x18] sm:$0xff]
      %v166 = vld [vmem:[%s155 + $0x20] sm:$0xff]
      %v167 = vld [vmem:[%s155 + $0x28] sm:$0xff]
      %v168 = vld [vmem:[%s155 + $0x30] sm:$0xff]
      %v169 = vld [vmem:[%s155 + $0x38] sm:$0xff]
      %v170 = vld [vmem:[%s155 + $0x40] sm:$0xff]
      %v171 = vld [vmem:[%s155 + $0x48] sm:$0xff]
      %v172 = vld [vmem:[%s155 + $0x50] sm:$0xff]
      %v173 = vld [vmem:[%s155 + $0x58] sm:$0xff]
      %v174 = vld [vmem:[%s155 + $0x60] sm:$0xff]
      %v175 = vld [vmem:[%s155 + $0x68] sm:$0xff]
      %v176 = vld [vmem:[%s155 + $0x70] sm:$0xff]
      %v177 = vld [vmem:[%s155 + $0x78] sm:$0xff]
      %v178 = vld [vmem:[%s155 + $0x80] sm:$0xff]
      %v179 = vld [vmem:[%s155 + $0x88] sm:$0xff]
      %v180 = vld [vmem:[%s155 + $0x90] sm:$0xff]
      %v181 = vld [vmem:[%s155 + $0x98] sm:$0xff]
      %v182 = vld [vmem:[%s155 + $0xa0] sm:$0xff]
      %v183 = vld [vmem:[%s155 + $0xa8] sm:$0xff]
      %v184 = vld [vmem:[%s155 + $0xb0] sm:$0xff]
      %v185 = vld [vmem:[%s155 + $0xb8] sm:$0xff]
      %v186 = vld [vmem:[%s155 + $0xc0] sm:$0xff]
      %v187 = vld [vmem:[%s155 + $0xc8] sm:$0xff]
      %v188 = vld [vmem:[%s155 + $0xd0] sm:$0xff]
      %v189 = vld [vmem:[%s155 + $0xd8] sm:$0xff]
      %v190 = vld [vmem:[%s155 + $0xe0] sm:$0xff]
      %v191 = vld [vmem:[%s155 + $0xe8] sm:$0xff]
      %v192 = vld [vmem:[%s155 + $0xf0] sm:$0xff]
      %v193 = vld [vmem:[%s155 + $0xf8] sm:$0xff]
      %vm194 = vcmask 31744
      %v195 = vsel %vm194, %v162, 0.0
      %v196 = vsel %vm194, %v164, 0.0
      %v197 = vadd.f32 %v195, %v196
      %v198 = vsel %vm194, %v166, 0.0
      %v199 = vadd.f32 %v197, %v198
      %v200 = vsel %vm194, %v168, 0.0
      %v201 = vadd.f32 %v199, %v200
      %v202 = vsel %vm194, %v170, 0.0
      %v203 = vadd.f32 %v201, %v202
      %v204 = vsel %vm194, %v172, 0.0
      %v205 = vadd.f32 %v203, %v204
      %v206 = vsel %vm194, %v174, 0.0
      %v207 = vadd.f32 %v205, %v206
      %v208 = vsel %vm194, %v176, 0.0
      %v209 = vadd.f32 %v207, %v208
      %v210 = vsel %vm194, %v178, 0.0
      %v211 = vadd.f32 %v209, %v210
      %v212 = vsel %vm194, %v180, 0.0
      %v213 = vadd.f32 %v211, %v212
      %v214 = vsel %vm194, %v182, 0.0
      %v215 = vadd.f32 %v213, %v214
      %v216 = vsel %vm194, %v184, 0.0
      %v217 = vadd.f32 %v215, %v216
      %v218 = vsel %vm194, %v186, 0.0
      %v219 = vadd.f32 %v217, %v218
      %v220 = vsel %vm194, %v188, 0.0
      %v221 = vadd.f32 %v219, %v220
      %v222 = vsel %vm194, %v190, 0.0
      %v223 = vadd.f32 %v221, %v222
      %v224 = vsel %vm194, %v192, 0.0
      %v225 = vadd.f32 %v223, %v224
      %v226 = vsel %vm194, %v163, 0.0
      %v227 = vsel %vm194, %v165, 0.0
      %v228 = vadd.f32 %v226, %v227
      %v229 = vsel %vm194, %v167, 0.0
      %v230 = vadd.f32 %v228, %v229
      %v231 = vsel %vm194, %v169, 0.0
      %v232 = vadd.f32 %v230, %v231
      %v233 = vsel %vm194, %v171, 0.0
      %v234 = vadd.f32 %v232, %v233
      %v235 = vsel %vm194, %v173, 0.0
      %v236 = vadd.f32 %v234, %v235
      %v237 = vsel %vm194, %v175, 0.0
      %v238 = vadd.f32 %v236, %v237
      %v239 = vsel %vm194, %v177, 0.0
      %v240 = vadd.f32 %v238, %v239
      %v241 = vsel %vm194, %v179, 0.0
      %v242 = vadd.f32 %v240, %v241
      %v243 = vsel %vm194, %v181, 0.0
      %v244 = vadd.f32 %v242, %v243
      %v245 = vsel %vm194, %v183, 0.0
      %v246 = vadd.f32 %v244, %v245
      %v247 = vsel %vm194, %v185, 0.0
      %v248 = vadd.f32 %v246, %v247
      %v249 = vsel %vm194, %v187, 0.0
      %v250 = vadd.f32 %v248, %v249
      %v251 = vsel %vm194, %v189, 0.0
      %v252 = vadd.f32 %v250, %v251
      %v253 = vsel %vm194, %v191, 0.0
      %v254 = vadd.f32 %v252, %v253
      %v255 = vsel %vm194, %v193, 0.0
      %v256 = vadd.f32 %v254, %v255
      %v257 = vsel %vm194, %v225, 0.0
      %v258 = vsel %vm194, %v256, 0.0
      %v259 = vadd.f32 %v257, %v258
      %v260 = vrot.slane %v259, 4
      %v261 = vadd.f32 %v259, %v260
      %v262 = vrot.slane %v261, 2
      %v263 = vadd.f32 %v261, %v262
      %v264 = vrot.slane %v263, 1
      %v265 = vadd.f32 %v263, %v264
      %v266 = vmul.f32 %v162, %v162
      %v267 = vmul.f32 %v163, %v163
      %v268 = vmul.f32 %v164, %v164
      %v269 = vmul.f32 %v165, %v165
      %v270 = vmul.f32 %v166, %v166
      %v271 = vmul.f32 %v167, %v167
      %v272 = vmul.f32 %v168, %v168
      %v273 = vmul.f32 %v169, %v169
      %v274 = vmul.f32 %v170, %v170
      %v275 = vmul.f32 %v171, %v171
      %v276 = vmul.f32 %v172, %v172
      %v277 = vmul.f32 %v173, %v173
      %v278 = vmul.f32 %v174, %v174
      %v279 = vmul.f32 %v175, %v175
      %v280 = vmul.f32 %v176, %v176
      %v281 = vmul.f32 %v177, %v177
      %v282 = vmul.f32 %v178, %v178
      %v283 = vmul.f32 %v179, %v179
      %v284 = vmul.f32 %v180, %v180
      %v285 = vmul.f32 %v181, %v181
      %v286 = vmul.f32 %v182, %v182
      %v287 = vmul.f32 %v183, %v183
      %v288 = vmul.f32 %v184, %v184
      %v289 = vmul.f32 %v185, %v185
      %v290 = vmul.f32 %v186, %v186
      %v291 = vmul.f32 %v187, %v187
      %v292 = vmul.f32 %v188, %v188
      %v293 = vmul.f32 %v189, %v189
      %v294 = vmul.f32 %v190, %v190
      %v295 = vmul.f32 %v191, %v191
      %v296 = vmul.f32 %v192, %v192
      %v297 = vmul.f32 %v193, %v193
      %v298 = vsel %vm194, %v266, 0.0
      %v299 = vsel %vm194, %v268, 0.0
      %v300 = vadd.f32 %v298, %v299
      %v301 = vsel %vm194, %v270, 0.0
      %v302 = vadd.f32 %v300, %v301
      %v303 = vsel %vm194, %v272, 0.0
      %v304 = vadd.f32 %v302, %v303
      %v305 = vsel %vm194, %v274, 0.0
      %v306 = vadd.f32 %v304, %v305
      %v307 = vsel %vm194, %v276, 0.0
      %v308 = vadd.f32 %v306, %v307
      %v309 = vsel %vm194, %v278, 0.0
      %v310 = vadd.f32 %v308, %v309
      %v311 = vsel %vm194, %v280, 0.0
      %v312 = vadd.f32 %v310, %v311
      %v313 = vsel %vm194, %v282, 0.0
      %v314 = vadd.f32 %v312, %v313
      %v315 = vsel %vm194, %v284, 0.0
      %v316 = vadd.f32 %v314, %v315
      %v317 = vsel %vm194, %v286, 0.0
      %v318 = vadd.f32 %v316, %v317
      %v319 = vsel %vm194, %v288, 0.0
      %v320 = vadd.f32 %v318, %v319
      %v321 = vsel %vm194, %v290, 0.0
      %v322 = vadd.f32 %v320, %v321
      %v323 = vsel %vm194, %v292, 0.0
      %v324 = vadd.f32 %v322, %v323
      %v325 = vsel %vm194, %v294, 0.0
      %v326 = vadd.f32 %v324, %v325
      %v327 = vsel %vm194, %v296, 0.0
      %v328 = vadd.f32 %v326, %v327
      %v329 = vsel %vm194, %v267, 0.0
      %v330 = vsel %vm194, %v269, 0.0
      %v331 = vadd.f32 %v329, %v330
      %v332 = vsel %vm194, %v271, 0.0
      %v333 = vadd.f32 %v331, %v332
      %v334 = vsel %vm194, %v273, 0.0
      %v335 = vadd.f32 %v333, %v334
      %v336 = vsel %vm194, %v275, 0.0
      %v337 = vadd.f32 %v335, %v336
      %v338 = vsel %vm194, %v277, 0.0
      %v339 = vadd.f32 %v337, %v338
      %v340 = vsel %vm194, %v279, 0.0
      %v341 = vadd.f32 %v339, %v340
      %v342 = vsel %vm194, %v281, 0.0
      %v343 = vadd.f32 %v341, %v342
      %v344 = vsel %vm194, %v283, 0.0
      %v345 = vadd.f32 %v343, %v344
      %v346 = vsel %vm194, %v285, 0.0
      %v347 = vadd.f32 %v345, %v346
      %v348 = vsel %vm194, %v287, 0.0
      %v349 = vadd.f32 %v347, %v348
      %v350 = vsel %vm194, %v289, 0.0
      %v351 = vadd.f32 %v349, %v350
      %v352 = vsel %vm194, %v291, 0.0
      %v353 = vadd.f32 %v351, %v352
      %v354 = vsel %vm194, %v293, 0.0
      %v355 = vadd.f32 %v353, %v354
      %v356 = vsel %vm194, %v295, 0.0
      %v357 = vadd.f32 %v355, %v356
      %v358 = vsel %vm194, %v297, 0.0
      %v359 = vadd.f32 %v357, %v358
      %v360 = vsel %vm194, %v328, 0.0
      %v361 = vsel %vm194, %v359, 0.0
      %v362 = vadd.f32 %v360, %v361
      %v363 = vrot.slane %v362, 4
      %v364 = vadd.f32 %v362, %v363
      %v365 = vrot.slane %v364, 2
      %v366 = vadd.f32 %v364, %v365
      %v367 = vrot.slane %v366, 1
      %v368 = vadd.f32 %v366, %v367
      %v369 = vld [vmem:[#allocation2] sm:$0x1]
      %v370 = vadd.f32 %v369, %v265
      %vm371 = vcmask 24576
      %372 = vst.msk [vmem:[#allocation2] sm:$0x1] %vm371, %v370
      %v373 = vld [vmem:[#allocation2 + $0x1] sm:$0x1]
      %v374 = vadd.f32 %v373, %v368
      %375 = vst.msk [vmem:[#allocation2 + $0x1] sm:$0x1] %vm371, %v374
      %p376 = scmp.eq.s32.totalorder %s14, 1
      // Predicated region
      $region37: #{preact_block_forward.4} parent=31 // pred_check
        %p377 = pneg %p376
      $region38: #{preact_block_forward.4} parent=31 // pred_check_branch
        %379 = sbr.rel (%p377) target = $region40
      $region39: #{preact_block_forward.4} parent=31 // pred_region
        %v380 = vld [vmem:[#allocation2] sm:$0x1]
        %v381 = vmul.f32 %v380, 0.001953125
        %v382 = vld [vmem:[#allocation2 + $0x1] sm:$0x1]
        %v383 = vmul.f32 %v382, 0.001953125
        %v384 = vmul.f32 %v381, %v381
        %v385 = vsub.f32 %v383, %v384
        %v386 = vld [vmem:[%s1] sm:$0x1]
        %v387 = vadd.f32 %v385, 1e-05
        %v388 = vrsqrt.pop %v387
        %v389 = vmul.f32 %v386, %v388
        %390 = vst.msk [vmem:[%s3] sm:$0x1] %vm371, %v389
        %v391 = vld [vmem:[%s2] sm:$0x1]
        %v392 = vmul.f32 %v381, %v389
        %v393 = vsub.f32 %v391, %v392
        %394 = vst.msk [vmem:[%s3 + $0x1] sm:$0x1] %vm371, %v393
      $region40: #{preact_block_forward.4} parent=31 // pred_fallthru
        _
      // Predicated region
      $region41: #{preact_block_forward.4} parent=31 // pred_check
        %p395 = pneg %p95
      $region42: #{preact_block_forward.4} parent=31 // pred_check_branch
        %397 = sbr.rel (%p395) target = $region44
      $region43: #{preact_block_forward.4} parent=31 // pred_region
        _
      $region44: #{preact_block_forward.4} parent=31 // pred_fallthru
        _
      // Predicated region
      $region45: #{preact_block_forward.4} parent=31 // pred_check
        %p398 = pneg %p95
      $region46: #{preact_block_forward.4} parent=31 // pred_check_branch
        %400 = sbr.rel (%p398) target = $region48
      $region47: #{preact_block_forward.4} parent=31 // pred_region
        _
      $region48: #{preact_block_forward.4} parent=31 // pred_fallthru
        _
    $region32: #{preact_block_forward.4} parent=5 // pred_fallthru
      _
    %p401 = scmp.le.s32.totalorder 2, %s9
    // Predicated region
    $region49: #{preact_block_forward.4} parent=5 // pred_check
      %p402 = pneg %p401
    $region50: #{preact_block_forward.4} parent=5 // pred_check_branch
      %404 = sbr.rel (%p402) target = $region52
    $region51: #{preact_block_forward.4} parent=5 // pred_region
      %s405 = ssub.s32 %s9, 2
    $region52: #{preact_block_forward.4} parent=5 // pred_fallthru
      _
  $region6: #{preact_block_forward.4} parent=0 // loop_footer
    %s13 = sadd.s32 1, %s9
  $region7: #{preact_block_forward.4} parent=0 // loop_footer_branch
    %8 = sbr.rel target = $region3
  $region8: #{preact_block_forward.4} parent=0 // loop_exit
    _

// kernel: preact_block_forward.5
$region0: #{preact_block_forward.5}
  #allocation0 [shape = 'u32[]', space=smem, size = 0x4, offset = 0x4, fixed_abs, tag = 'smem constant byte address 0x4 - core index']
  #allocation1 [shape = 'u32[144,128]{1,0:T(1,128)}', space=vmem, size = 0x12000, scoped, tag = 'internal scratch']
  %s0 = inlined_call_operand.vmem [shape: f32[2,4,9,9,4], index: 0, kind: input, shape index: {}]
  %s1 = inlined_call_operand.vmem [shape: f32[2,4], index: 1, kind: input, shape index: {}]
  %s2 = inlined_call_operand.vmem [shape: bf16[3,3,4,8], index: 2, kind: input, shape index: {}]
  %s3 = inlined_call_operand.vmem [shape: bf16[4,8], index: 3, kind: input, shape index: {}]
  %s4 = inlined_call_operand.vmem [shape: f32[2,8,8,8], index: 4, kind: output, shape index: {0}]
  %s5 = inlined_call_operand.vmem [shape: f32[2,8,8,8], index: 5, kind: output, shape index: {1}]
  %6 = xla_tuple %s4, %s5
  %s7 = sld [smem:[#allocation0]]
  $region57: #{preact_block_forward.5} parent=0
    _
  %s9 = ssub.s32 1, %s7
  %s10 = scalar_select 0, %s9, %s7
  loop: start=0, step=1, limit=4
  $region2: #{preact_block_forward.5} parent=0 // loop_pre_header
    _
  $region3: #{preact_block_forward.5} parent=0 // loop_header
    %s12 = sphi 0, %s16
    %p13 = scmp.ge.s32.totalorder %s12, 4
    %s22 = sphi 0, %s24
    %s25 = sphi 0, %s22
    %s26 = sphi 0, %s25
    %s42 = sphi 0, %s26
    %s46 = sphi 0, %s46
    %s48 = sphi 0, %s46
    %s49 = sphi 0, %s48
    %s63 = sphi 0, %s49
    %s67 = sphi 0, %s67
    %s69 = sphi 0, %s67
    %s70 = sphi 0, %s69
    %s84 = sphi 0, %s70
    %s88 = sphi 0, %s88
    %s90 = sphi 0, %s88
    %s91 = sphi 0, %s90
    %s105 = sphi 0, %s91
    %s111 = sphi 0, %s113
    %s114 = sphi 0, %s111
    %s115 = sphi 0, %s114
    %s131 = sphi 0, %s115
    %s137 = sphi 0, %s139
    %s140 = sphi 0, %s137
    %s141 = sphi 0, %s140
    %s157 = sphi 0, %s141
  $region4: #{preact_block_forward.5} parent=0 // loop_header_branch
    %15 = sbr.rel (%p13) target = $region8
  $region5: #{preact_block_forward.5} parent=0 // loop_body
    %s17 = ssub.s32 %s12, 1
    %s18 = ssub.s32 %s12, 2
    %s19 = sadd.s32 %s12, 1
    %s20 = ssub.s32 %s12, %s19
    %p21 = scmp.eq.s32.totalorder %s20, 0
    %s23 = sadd.s32 %s22, 1
    %s24 = scalar_select %p21, %s22, %s23
    %p27 = pneg %p21
    %p28 = scmp.eq.s32.totalorder %s12, 1
    %p29 = por %p27, %p28
    %p30 = scmp.ne.s32.totalorder %s22, %s25
    %p31 = scmp.eq.s32.totalorder %s12, 0
    %p32 = por %p30, %p31
    %p33 = scmp.ne.s32.totalorder %s22, %s25
    %p34 = scmp.eq.s32.totalorder %s17, 1
    %p35 = por %p33, %p34
    %p36 = scmp.ne.s32.totalorder %s25, %s26
    %p37 = scmp.eq.s32.totalorder %s17, 0
    %p38 = por %p36, %p37
    %p39 = scmp.ne.s32.totalorder %s25, %s26
    %p40 = scmp.eq.s32.totalorder %s18, 1
    %p41 = por %p39, %p40
    %p43 = scmp.ne.s32.totalorder %s26, %s42
    %p44 = scmp.eq.s32.totalorder %s18, 0
    %p45 = por %p43, %p44
    %s47 = sadd.s32 %s46, 1
    %p50 = scmp.eq.s32.totalorder %s12, 1
    %p51 = scmp.ne.s32.totalorder %s46, %s48
    %p52 = scmp.eq.s32.totalorder %s12, 0
    %p53 = por %p51, %p52
    %p54 = scmp.ne.s32.totalorder %s46, %s48
    %p55 = scmp.eq.s32.totalorder %s17, 1
    %p56 = por %p54, %p55
    %p57 = scmp.ne.s32.totalorder %s48, %s49
    %p58 = scmp.eq.s32.totalorder %s17, 0
    %p59 = por %p57, %p58
    %p60 = scmp.ne.s32.totalorder %s48, %s49
    %p61 = scmp.eq.s32.totalorder %s18, 1
    %p62 = por %p60, %p61
    %p64 = scmp.ne.s32.totalorder %s49, %s63
    %p65 = scmp.eq.s32.totalorder %s18, 0
    %p66 = por %p64, %p65
    %s68 = sadd.s32 %s67, 1
    %p71 = scmp.eq.s32.totalorder %s12, 1
    %p72 = scmp.ne.s32.totalorder %s67, %s69
    %p73 = scmp.eq.s32.totalorder %s12, 0
    %p74 = por %p72, %p73
    %p75 = scmp.ne.s32.totalorder %s67, %s69
    %p76 = scmp.eq.s32.totalorder %s17, 1
    %p77 = por %p75, %p76
    %p78 = scmp.ne.s32.totalorder %s69, %s70
    %p79 = scmp.eq.s32.totalorder %s17, 0
    %p80 = por %p78, %p79
    %p81 = scmp.ne.s32.totalorder %s69, %s70
    %p82 = scmp.eq.s32.totalorder %s18, 1
    %p83 = por %p81, %p82
    %p85 = scmp.ne.s32.totalorder %s70, %s84
    %p86 = scmp.eq.s32.totalorder %s18, 0
    %p87 = por %p85, %p86
    %s89 = sadd.s32 %s88, 1
    %p92 = scmp.eq.s32.totalorder %s12, 1
    %p93 = scmp.ne.s32.totalorder %s88, %s90
    %p94 = scmp.eq.s32.totalorder %s12, 0
    %p95 = por %p93, %p94
    %p96 = scmp.ne.s32.totalorder %s88, %s90
    %p97 = scmp.eq.s32.totalorder %s17, 1
    %p98 = por %p96, %p97
    %p99 = scmp.ne.s32.totalorder %s90, %s91
    %p100 = scmp.eq.s32.totalorder %s17, 0
    %p101 = por %p99, %p100
    %p102 = scmp.ne.s32.totalorder %s90, %s91
    %p103 = scmp.eq.s32.totalorder %s18, 1
    %p104 = por %p102, %p103
    %p106 = scmp.ne.s32.totalorder %s91, %s105
    %p107 = scmp.eq.s32.totalorder %s18, 0
    %p108 = por %p106, %p107
    %s109 = ssub.s32 %s12, %s19
    %p110 = scmp.eq.s32.totalorder %s109, 0
    %s112 = sadd.s32 %s111, 1
    %s113 = scalar_select %p110, %s111, %s112
    %p116 = pneg %p110
    %p117 = scmp.eq.s32.totalorder %s12, 1
    %p118 = por %p116, %p117
    %p119 = scmp.ne.s32.totalorder %s111, %s114
    %p120 = scmp.eq.s32.totalorder %s12, 0
    %p121 = por %p119, %p120
    %p122 = scmp.ne.s32.totalorder %s111, %s114
    %p123 = scmp.eq.s32.totalorder %s17, 1
    %p124 = por %p122, %p123
    %p125 = scmp.ne.s32.totalorder %s114, %s115
    %p126 = scmp.eq.s32.totalorder %s17, 0
    %p127 = por %p125, %p126
    %p128 = scmp.ne.s32.totalorder %s114, %s115
    %p129 = scmp.eq.s32.totalorder %s18, 1
    %p130 = por %p128, %p129
    %p132 = scmp.ne.s32.totalorder %s115, %s131
    %p133 = scmp.eq.s32.totalorder %s18, 0
    %p134 = por %p132, %p133
    %s135 = ssub.s32 %s12, %s19
    %p136 = scmp.eq.s32.totalorder %s135, 0
    %s138 = sadd.s32 %s137, 1
    %s139 = scalar_select %p136, %s137, %s138
    %p142 = pneg %p136
    %p143 = scmp.eq.s32.totalorder %s12, 1
    %p144 = por %p142, %p143
    %p145 = scmp.ne.s32.totalorder %s137, %s140
    %p146 = scmp.eq.s32.totalorder %s12, 0
    %p147 = por %p145, %p146
    %p148 = scmp.ne.s32.totalorder %s137, %s140
    %p149 = scmp.eq.s32.totalorder %s17, 1
    %p150 = por %p148, %p149
    %p151 = scmp.ne.s32.totalorder %s140, %s141
    %p152 = scmp.eq.s32.totalorder %s17, 0
    %p153 = por %p151, %p152
    %p154 = scmp.ne.s32.totalorder %s140, %s141
    %p155 = scmp.eq.s32.totalorder %s18, 1
    %p156 = por %p154, %p155
    %p158 = scmp.ne.s32.totalorder %s141, %s157
    %p159 = scmp.eq.s32.totalorder %s18, 0
    %p160 = por %p158, %p159
    %p161 = scmp.le.s32.totalorder 1, %s12
    %p162 = scmp.lt.s32.totalorder %s12, 3
    %p163 = pnand %p161, %p162
    %p164 = pneg %p163
    // Predicated region
    $region9: #{preact_block_forward.5} parent=5 // pred_check
      _
    $region10: #{preact_block_forward.5} parent=5 // pred_check_branch
      %166 = sbr.rel (%p163) target = $region12
    $region11: #{preact_block_forward.5} parent=5 // pred_region
      %s167 = ssub.s32 %s12, 1
      // Predicated region
      $region13: #{preact_block_forward.5} parent=11 // pred_check
        %p168 = pneg %p59
      $region14: #{preact_block_forward.5} parent=11 // pred_check_branch
        %170 = sbr.rel (%p168) target = $region16
      $region15: #{preact_block_forward.5} parent=11 // pred_region
        _
      $region16: #{preact_block_forward.5} parent=11 // pred_fallthru
        _
      // Predicated region
      $region17: #{preact_block_forward.5} parent=11 // pred_check
        %p171 = pneg %p80
      $region18: #{preact_block_forward.5} parent=11 // pred_check_branch
        %173 = sbr.rel (%p171) target = $region20
      $region19: #{preact_block_forward.5} parent=11 // pred_region
        _
      $region20: #{preact_block_forward.5} parent=11 // pred_fallthru
        _
      // Predicated region
      $region21: #{preact_block_forward.5} parent=11 // pred_check
        %p174 = pneg %p101
      $region22: #{preact_block_forward.5} parent=11 // pred_check_branch
        %176 = sbr.rel (%p174) target = $region24
      $region23: #{preact_block_forward.5} parent=11 // pred_region
        _
      $region24: #{preact_block_forward.5} parent=11 // pred_fallthru
        _
    $region12: #{preact_block_forward.5} parent=5 // pred_fallthru
      _
    %p177 = scmp.lt.s32.totalorder %s12, 2
    // Predicated region
    $region25: #{preact_block_forward.5} parent=5 // pred_check
      %p178 = pneg %p177
    $region26: #{preact_block_forward.5} parent=5 // pred_check_branch
      %180 = sbr.rel (%p178) target = $region28
    $region27: #{preact_block_forward.5} parent=5 // pred_region
      // Predicated region
      $region29: #{preact_block_forward.5} parent=27 // pred_check
        %p181 = pneg %p32
      $region30: #{preact_block_forward.5} parent=27 // pred_check_branch
        %183 = sbr.rel (%p181) target = $region32
      $region31: #{preact_block_forward.5} parent=27 // pred_region
        %p184 = scmp.lt.s32.totalorder %s12, 1
        %s185 = scalar_select %p184, %s12, 1
        %s186 = smul.addr %s185, 72
        %s187 = smul.addr %s186, 8
        %s188 = scalar_lea.vmem %s0, %s187
      $region32: #{preact_block_forward.5} parent=27 // pred_fallthru
        _
    $region28: #{preact_block_forward.5} parent=5 // pred_fallthru
      _
    %p189 = scmp.le.s32.totalorder 1, %s12
    %p190 = scmp.lt.s32.totalorder %s12, 3
    %p191 = pnand %p189, %p190
    %p192 = pneg %p191
    // Predicated region
    $region33: #{preact_block_forward.5} parent=5 // pred_check
      _
    $region34: #{preact_block_forward.5} parent=5 // pred_check_branch
      %194 = sbr.rel (%p191) target = $region36
    $region35: #{preact_block_forward.5} parent=5 // pred_region
      %s195 = ssub.s32 %s12, 1
      %p196 = scmp.lt.s32.totalorder %s17, 1
      %s197 = scalar_select %p196, %s17, 1
      %s198 = smul.addr %s197, 72
      %s199 = smul.addr %s198, 8
      %s200 = scalar_lea.vmem %s0, %s199
      %p201 = pneg %p38
      %p202 = pneg %p35
      %p203 = pneg %p59
      %p204 = pneg %p56
      %p205 = pneg %p80
      %p206 = pneg %p77
      %p207 = pneg %p101
      %p208 = pneg %p98
      %p209 = pneg %p127
      %p210 = pneg %p124
      %p211 = scmp.lt.s32.totalorder %s17, 1
      %s212 = scalar_select %p211, %s17, 1
      %s213 = smul.addr %s212, 8
      %s214 = smul.addr %s213, 8
      %s215 = scalar_lea.vmem %s4, %s214
      %p216 = pneg %p153
      %p217 = pneg %p150
      %p218 = scmp.lt.s32.totalorder %s17, 1
      %s219 = scalar_select %p218, %s17, 1
      %s220 = smul.addr %s219, 8
      %s221 = smul.addr %s220, 8
      %s222 = scalar_lea.vmem %s5, %s221
      %p223 = scmp.lt.s32.totalorder %s17, 1
      %s224 = scalar_select %p223, %s17, 1
      %s225 = smul.addr %s224, 72
      %s226 = smul.addr %s225, 8
      %s227 = scalar_lea.vmem %s0, %s226
      %p228 = scmp.lt.s32.totalorder %s17, 1
      %s229 = scalar_select %p228, %s17, 1
      %s230 = smul.addr %s229, 8
      %s231 = smul.addr %s230, 8
      %s232 = scalar_lea.vmem %s4, %s231
      %p233 = scmp.lt.s32.totalorder %s17, 1
      %s234 = scalar_select %p233, %s17, 1
      %s235 = smul.addr %s234, 8
      %s236 = smul.addr %s235, 8
      %s237 = scalar_lea.vmem %s5, %s236
      %v239 = vld [vmem:[%s1] sm:$0x3]
      %v240 = vld [vmem:[%s227] sm:$0xff]
      %v241 = vld [vmem:[%s227 + $0x10] sm:$0xff]
      %v242 = vld [vmem:[%s227 + $0x20] sm:$0xff]
      %v243 = vld [vmem:[%s227 + $0x30] sm:$0xff]
      %v244 = vld [vmem:[%s227 + $0x40] sm:$0xff]
      %v245 = vld [vmem:[%s227 + $0x50] sm:$0xff]
      %v246 = vld [vmem:[%s227 + $0x60] sm:$0xff]
      %v247 = vld [vmem:[%s227 + $0x70] sm:$0xff]
      %v248 = vlaneseq
      %v249 = vshrl.u32 %v248, 7
      %v250 = vsub.s32 0, %v249
      %v251 = vrot.slane %v239, %v250
      %v252 = vmul.f32 %v240, %v251
      %v253 = vmul.f32 %v241, %v251
      %v254 = vmul.f32 %v242, %v251
      %v255 = vmul.f32 %v243, %v251
      %v256 = vmul.f32 %v244, %v251
      %v257 = vmul.f32 %v245, %v251
      %v258 = vmul.f32 %v246, %v251
      %v259 = vmul.f32 %v247, %v251
      %v260 = vlaneseq
      %v261 = vshrl.u32 %v260, 7
      %v262 = vsub.s32 1, %v261
      %v263 = vrot.slane %v239, %v262
      %v264 = vadd.f32 %v252, %v263
      %v265 = vadd.f32 %v253, %v263
      %v266 = vadd.f32 %v254, %v263
      %v267 = vadd.f32 %v255, %v263
      %v268 = vadd.f32 %v256, %v263
      %v269 = vadd.f32 %v257, %v263
      %v270 = vadd.f32 %v258, %v263
      %v271 = vadd.f32 %v259, %v263
      %v272 = vmax.f32 %v264, 0.0
      %v273 = vmax.f32 %v265, 0.0
      %v274 = vmax.f32 %v266, 0.0
      %v275 = vmax.f32 %v267, 0.0
      %v276 = vmax.f32 %v268, 0.0
      %v277 = vmax.f32 %v269, 0.0
      %v278 = vmax.f32 %v270, 0.0
      %v279 = vmax.f32 %v271, 0.0
      %v280 = vlaneseq
      %v281 = vshrl.u32 %v280, 7
      %v282 = vmul.u32 %v281, 2
      %vm283 = vcmp.eq.s32.totalorder %v282, 0
      %vm284 = vmor 1, %vm283
      %vm285 = vmor 0, %vm283
      %vm286 = vcmp.eq.s32.totalorder %v282, 17
      %vm287 = vmor %vm284, %vm286
      %vm288 = vmor %vm285, %vm286
      %v289 = vsel %vm287, 1, 0
      %v290 = vsel %vm288, 1, 0
      %vm291 = vcmp.eq.s32.totalorder %v289, 1
      %vm292 = vcmp.eq.s32.totalorder %v290, 1
      %v293 = vsel %vm291, 0.0, %v272
      %v294 = vsel %vm292, 0.0, %v273
      %v295 = vsel %vm292, 0.0, %v274
      %v296 = vsel %vm292, 0.0, %v275
      %v297 = vsel %vm292, 0.0, %v276
      %v298 = vsel %vm292, 0.0, %v277
      %v299 = vsel %vm292, 0.0, %v278
      %v300 = vsel %vm292, 0.0, %v279
      %v301 = vpack.c.bf16 %v294, %v293
      %v302 = vpack.c.bf16 %v296, %v295
      %v303 = vpack.c.bf16 %v298, %v297
      %v304 = vpack.c.bf16 %v300, %v299
      %v305 = vld [vmem:[%s2] sm:$0x3]
      %s306 = scalar_lea.vmem %s227, 144
      %v307 = vld [vmem:[%s306] sm:$0xff]
      %v308 = vld [vmem:[%s306 + $0x10] sm:$0xff]
      %v309 = vld [vmem:[%s306 + $0x20] sm:$0xff]
      %v310 = vld [vmem:[%s306 + $0x30] sm:$0xff]
      %v311 = vld [vmem:[%s306 + $0x40] sm:$0xff]
      %v312 = vld [vmem:[%s306 + $0x50] sm:$0xff]
      %v313 = vld [vmem:[%s306 + $0x60] sm:$0xff]
      %v314 = vld [vmem:[%s306 + $0x70] sm:$0xff]
      %v315 = vmul.f32 %v307, %v251
      %v316 = vmul.f32 %v308, %v251
      %v317 = vmul.f32 %v309, %v251
      %v318 = vmul.f32 %v310, %v251
      %v319 = vmul.f32 %v311, %v251
      %v320 = vmul.f32 %v312, %v251
      %v321 = vmul.f32 %v313, %v251
      %v322 = vmul.f32 %v314, %v251
      %v323 = vadd.f32 %v315, %v263
      %v324 = vadd.f32 %v316, %v263
      %v325 = vadd.f32 %v317, %v263
      %v326 = vadd.f32 %v318, %v263
      %v327 = vadd.f32 %v319, %v263
      %v328 = vadd.f32 %v320, %v263
      %v329 = vadd.f32 %v321, %v263
      %v330 = vadd.f32 %v322, %v263
      %v331 = vmax.f32 %v323, 0.0
      %v332 = vmax.f32 %v324, 0.0
      %v333 = vmax.f32 %v325, 0.0
      %v334 = vmax.f32 %v326, 0.0
      %v335 = vmax.f32 %v327, 0.0
      %v336 = vmax.f32 %v328, 0.0
      %v337 = vmax.f32 %v329, 0.0
      %v338 = vmax.f32 %v330, 0.0
      %v339 = vadd.s32 %v282, 1
      %vm340 = vcmp.eq.s32.totalorder %v339, 0
      %vm341 = vmor 1, %vm340
      %vm342 = vmor 0, %vm340
      %vm343 = vcmp.eq.s32.totalorder %v339, 17
      %vm344 = vmor %vm341, %vm343
      %vm345 = vmor %vm342, %vm343
      %v346 = vsel %vm344, 1, 0
      %v347 = vsel %vm345, 1, 0
      %vm348 = vcmp.eq.s32.totalorder %v346, 1
      %vm349 = vcmp.eq.s32.totalorder %v347, 1
      %v350 = vsel %vm348, 0.0, %v331
      %v351 = vsel %vm349, 0.0, %v332
      %v352 = vsel %vm349, 0.0, %v333
      %v353 = vsel %vm349, 0.0, %v334
      %v354 = vsel %vm349, 0.0, %v335
      %v355 = vsel %vm349, 0.0, %v336
      %v356 = vsel %vm349, 0.0, %v337
      %v357 = vsel %vm349, 0.0, %v338
      %v358 = vpack.c.bf16 %v351, %v350
      %v359 = vpack.c.bf16 %v353, %v352
      %v360 = vpack.c.bf16 %v355, %v354
      %v361 = vpack.c.bf16 %v357, %v356
      %s362 = scalar_lea.vmem %s2, 2
      %v363 = vld [vmem:[%s362] sm:$0x3]
      %vm364 = vcmask 31744
      %v366 = vsel %vm364, %v358, 0
      %v369 = vsel %vm364, %v359, 0
      %v372 = vsel %vm364, %v360, 0
      %v375 = vsel %vm364, %v361, 0
      %vm377 = vcmask 1041408
      %v379 = vsel %vm377, %v363, 0
      %381 = vmatprep.subr.bf16.mxu0 0
      %382 = vmatpush1.bf16.msra.mxu0 %v379
      %383 = vmatprep.subr.bf16.mxu0 0
      %384 = vmatpush1.bf16.msra.mxu0 0
      %385 = vmatprep.subr.bf16.mxu0 0
      %386 = vmatpush1.bf16.msra.mxu0 0
      %387 = vmatprep.subr.bf16.mxu0 0
      %388 = vmatpush1.bf16.msra.mxu0 0
      %389 = vmatprep.subr.bf16.mxu0 0
      %390 = vmatpush1.bf16.msra.mxu0 0
      %391 = vmatprep.subr.bf16.mxu0 0
      %392 = vmatpush1.bf16.msra.mxu0 0
      %393 = vmatprep.subr.bf16.mxu0 0
      %394 = vmatpush1.bf16.msra.mxu0 0
      %395 = vmatprep.subr.bf16.mxu0 0
      %396 = vmatpush1.bf16.msra.mxu0 0
      %397 = vmatprep.subr.bf16.mxu0 0
      %398 = vmatpush1.bf16.msra.mxu0 0
      %399 = vmatprep.subr.bf16.mxu0 0
      %400 = vmatpush1.bf16.msra.mxu0 0
      %401 = vmatprep.subr.bf16.mxu0 0
      %402 = vmatpush1.bf16.msra.mxu0 0
      %403 = vmatprep.subr.bf16.mxu0 0
      %404 = vmatpush1.bf16.msra.mxu0 0
      %405 = vmatprep.subr.bf16.mxu0 0
      %406 = vmatpush1.bf16.msra.mxu0 0
      %407 = vmatprep.subr.bf16.mxu0 0
      %408 = vmatpush1.bf16.msra.mxu0 0
      %409 = vmatprep.subr.bf16.mxu0 0
      %410 = vmatpush1.bf16.msra.mxu0 0
      %411 = vmatprep.subr.bf16.mxu0 0
      %412 = vmatpush1.bf16.msra.mxu0 0
      %413 = vmatprep.mubr.bf16.mxu0 0
      %414 = vmatmul.mubr.bf16.gmra.mrb[0].mxu0 %v366
      %v415 = vpop.f32.mrb[0].mxu0
      %v416 = vadd.f32 0.0, %v415
      %v417 = vpop.f32.mrb[0].mxu0
      %v418 = vpop.f32.mrb[0].mxu0
      %v419 = vadd.f32 0.0, %v418
      %v420 = vpop.f32.mrb[0].mxu0
      %421 = vmatprep.mubr.bf16.mxu0 0
      %422 = vmatmul.mubr.bf16.gmra.mrb[0].mxu0 %v369
      %v423 = vpop.f32.mrb[0].mxu0
      %v424 = vadd.f32 0.0, %v423
      %v425 = vpop.f32.mrb[0].mxu0
      %v426 = vpop.f32.mrb[0].mxu0
      %v427 = vadd.f32 0.0, %v426
      %v428 = vpop.f32.mrb[0].mxu0
      %429 = vmatprep.mubr.bf16.mxu0 0
      %430 = vmatmul.mubr.bf16.gmra.mrb[0].mxu0 %v372
      %v431 = vpop.f32.mrb[0].mxu0
      %v432 = vadd.f32 0.0, %v431
      %v433 = vpop.f32.mrb[0].mxu0
      %v434 = vpop.f32.mrb[0].mxu0
      %v435 = vadd.f32 0.0, %v434
      %v436 = vpop.f32.mrb[0].mxu0
      %437 = vmatprep.mubr.bf16.mxu0 0
      %438 = vmatmul.mubr.bf16.gmra.mrb[0].mxu0 %v375
      %v439 = vpop.f32.mrb[0].mxu0
      %v440 = vadd.f32 0.0, %v439
      %v441 = vpop.f32.mrb[0].mxu0
      %v442 = vpop.f32.mrb[0].mxu0
      %v443 = vadd.f32 0.0, %v442
      %v444 = vpop.f32.mrb[0].mxu0
      %445 = vdwg.mxu0
      %v447 = vsel %vm364, %v301, 0
      %v450 = vsel %vm364, %v302, 0
      %v453 = vsel %vm364, %v303, 0
      %v456 = vsel %vm364, %v304, 0
      %v459 = vsel %vm377, %v305, 0
      %461 = vmatprep.subr.bf16.mxu0 0
      %462 = vmatpush1.bf16.msra.mxu0 %v459
      %463 = vmatprep.subr.bf16.mxu0 0
      %464 = vmatpush1.bf16.msra.mxu0 0
      %465 = vmatprep.subr.bf16.mxu0 0
      %466 = vmatpush1.bf16.msra.mxu0 0
      %467 = vmatprep.subr.bf16.mxu0 0
      %468 = vmatpush1.bf16.msra.mxu0 0
      %469 = vmatprep.subr.bf16.mxu0 0
      %470 = vmatpush1.bf16.msra.mxu0 0
      %471 = vmatprep.subr.bf16.mxu0 0
      %472 = vmatpush1.bf16.msra.mxu0 0
      %473 = vmatprep.subr.bf16.mxu0 0
      %474 = vmatpush1.bf16.msra.mxu0 0
      %475 = vmatprep.subr.bf16.mxu0 0
      %476 = vmatpush1.bf16.msra.mxu0 0
      %477 = vmatprep.subr.bf16.mxu0 0
      %478 = vmatpush1.bf16.msra.mxu0 0
      %479 = vmatprep.subr.bf16.mxu0 0
      %480 = vmatpush1.bf16.msra.mxu0 0
      %481 = vmatprep.subr.bf16.mxu0 0
      %482 = vmatpush1.bf16.msra.mxu0 0
      %483 = vmatprep.subr.bf16.mxu0 0
      %484 = vmatpush1.bf16.msra.mxu0 0
      %485 = vmatprep.subr.bf16.mxu0 0
      %486 = vmatpush1.bf16.msra.mxu0 0
      %487 = vmatprep.subr.bf16.mxu0 0
      %488 = vmatpush1.bf16.msra.mxu0 0
      %489 = vmatprep.subr.bf16.mxu0 0
      %490 = vmatpush1.bf16.msra.mxu0 0
      %491 = vmatprep.subr.bf16.mxu0 0
      %492 = vmatpush1.bf16.msra.mxu0 0
      %493 = vmatprep.mubr.bf16.mxu0 0
      %494 = vmatmul.mubr.bf16.gmra.mrb[0].mxu0 %v447
      %v495 = vpop.f32.mrb[0].mxu0
      %v496 = vadd.f32 %v416, %v495
      %v497 = vpop.f32.mrb[0].mxu0
      %v498 = vpop.f32.mrb[0].mxu0
      %v499 = vadd.f32 %v419, %v498
      %v500 = vpop.f32.mrb[0].mxu0
      %501 = vmatprep.mubr.bf16.mxu0 0
      %502 = vmatmul.mubr.bf16.gmra.mrb[0].mxu0 %v450
      %v503 = vpop.f32.mrb[0].mxu0
      %v504 = vadd.f32 %v424, %v503
      %v505 = vpop.f32.mrb[0].mxu0
      %v506 = vpop.f32.mrb[0].mxu0
      %v507 = vadd.f32 %v427, %v506
      %v508 = vpop.f32.mrb[0].mxu0
      %509 = vmatprep.mubr.bf16.mxu0 0
      %510 = vmatmul.mubr.bf16.gmra.mrb[0].mxu0 %v453
      %v511 = vpop.f32.mrb[0].mxu0
      %v512 = vadd.f32 %v432, %v511
      %v513 = vpop.f32.mrb[0].mxu0
      %v514 = vpop.f32.mrb[0].mxu0
      %v515 = vadd.f32 %v435, %v514
      %v516 = vpop.f32.mrb[0].mxu0
      %517 = vmatprep.mubr.bf16.mxu0 0
      %518 = vmatmul.mubr.bf16.gmra.mrb[0].mxu0 %v456
      %v519 = vpop.f32.mrb[0].mxu0
      %v520 = vadd.f32 %v440, %v519
      %v521 = vpop.f32.mrb[0].mxu0
      %v522 = vpop.f32.mrb[0].mxu0
      %v523 = vadd.f32 %v443, %v522
      %v524 = vpop.f32.mrb[0].mxu0
      %525 = vdwg.mxu0
      %v526 = vld [vmem:[%s227 + $0x1] sm:$0xff]
      %v527 = vld [vmem:[%s227 + $0x11] sm:$0xff]
      %v528 = vld [vmem:[%s227 + $0x21] sm:$0xff]
      %v529 = vld [vmem:[%s227 + $0x31] sm:$0xff]
      %v530 = vld [vmem:[%s227 + $0x41] sm:$0xff]
      %v531 = vld [vmem:[%s227 + $0x51] sm:$0xff]
      %v532 = vld [vmem:[%s227 + $0x61] sm:$0xff]
      %v533 = vld [vmem:[%s227 + $0x71] sm:$0xff]
      %v534 = vmul.f32 %v526, %v251
      %v535 = vmul.f32 %v527, %v251
      %v536 = vmul.f32 %v528, %v251
      %v537 = vmul.f32 %v529, %v251
      %v538 = vmul.f32 %v530, %v251
      %v539 = vmul.f32 %v531, %v251
      %v540 = vmul.f32 %v532, %v251
      %v541 = vmul.f32 %v533, %v251
      %v542 = vadd.f32 %v534, %v263
      %v543 = vadd.f32 %v535, %v263
      %v544 = vadd.f32 %v536, %v263
      %v545 = vadd.f32 %v537, %v263
      %v546 = vadd.f32 %v538, %v263
      %v547 = vadd.f32 %v539, %v263
      %v548 = vadd.f32 %v540, %v263
      %v549 = vadd.f32 %v541, %v263
      %v550 = vmax.f32 %v542, 0.0
      %v551 = vmax.f32 %v543, 0.0
      %v552 = vmax.f32 %v544, 0.0
      %v553 = vmax.f32 %v545, 0.0
      %v554 = vmax.f32 %v546, 0.0
      %v555 = vmax.f32 %v547, 0.0
      %v556 = vmax.f32 %v548, 0.0
      %v557 = vmax.f32 %v549, 0.0
      %v558 = vadd.s32 %v282, 2
      %vm559 = vcmp.eq.s32.totalorder %v558, 0
      %vm560 = vmor 1, %vm559
      %vm561 = vmor 0, %vm559
      %vm562 = vcmp.eq.s32.totalorder %v558, 17
      %vm563 = vmor %vm560, %vm562
      %vm564 = vmor %vm561, %vm562
      %v565 = vsel %vm563, 1, 0
      %v566 = vsel %vm564, 1, 0
      %vm567 = vcmp.eq.s32.totalorder %v565, 1
      %vm568 = vcmp.eq.s32.totalorder %v566, 1
      %v569 = vsel %vm567, 0.0, %v550
      %v570 = vsel %vm568, 0.0, %v551
      %v571 = vsel %vm568, 0.0, %v552
      %v572 = vsel %vm568, 0.0, %v553
      %v573 = vsel %vm568, 0.0, %v554
      %v574 = vsel %vm568, 0.0, %v555
      %v575 = vsel %vm568, 0.0, %v556
      %v576 = vsel %vm568, 0.0, %v557
      %v577 = vpack.c.bf16 %v570, %v569
      %v578 = vpack.c.bf16 %v572, %v571
      %v579 = vpack.c.bf16 %v574, %v573
      %v580 = vpack.c.bf16 %v576, %v575
      %s581 = scalar_lea.vmem %s2, 4
      %v582 = vld [vmem:[%s581] sm:$0x3]
      %v584 = vsel %vm364, %v577, 0
      %v587 = vsel %vm364, %v578, 0
      %v590 = vsel %vm364, %v579, 0
      %v593 = vsel %vm364, %v580, 0
      %v596 = vsel %vm377, %v582, 0
      %598 = vmatprep.subr.bf16.mxu0 0
      %599 = vmatpush1.bf16.msra.mxu0 %v596
      %600 = vmatprep.subr.bf16.mxu0 0
      %601 = vmatpush1.bf16.msra.mxu0 0
      %602 = vmatprep.subr.bf16.mxu0 0
      %603 = vmatpush1.bf16.msra.mxu0 0
      %604 = vmatprep.subr.bf16.mxu0 0
      %605 = vmatpush1.bf16.msra.mxu0 0
      %606 = vmatprep.subr.bf16.mxu0 0
      %607 = vmatpush1.bf16.msra.mxu0 0
      %608 = vmatprep.subr.bf16.mxu0 0
      %609 = vmatpush1.bf16.msra.mxu0 0
      %610 = vmatprep.subr.bf16.mxu0 0
      %611 = vmatpush1.bf16.msra.mxu0 0
      %612 = vmatprep.subr.bf16.mxu0 0
      %613 = vmatpush1.bf16.msra.mxu0 0
      %614 = vmatprep.subr.bf16.mxu0 0
      %615 = vmatpush1.bf16.msra.mxu0 0
      %616 = vmatprep.subr.bf16.mxu0 0
      %617 = vmatpush1.bf16.msra.mxu0 0
      %618 = vmatprep.subr.bf16.mxu0 0
      %619 = vmatpush1.bf16.msra.mxu0 0
      %620 = vmatprep.subr.bf16.mxu0 0
      %621 = vmatpush1.bf16.msra.mxu0 0
      %622 = vmatprep.subr.bf16.mxu0 0
      %623 = vmatpush1.bf16.msra.mxu0 0
      %624 = vmatprep.subr.bf16.mxu0 0
      %625 = vmatpush1.bf16.msra.mxu0 0
      %626 = vmatprep.subr.bf16.mxu0 0
      %627 = vmatpush1.bf16.msra.mxu0 0
      %628 = vmatprep.subr.bf16.mxu0 0
      %629 = vmatpush1.bf16.msra.mxu0 0
      %630 = vmatprep.mubr.bf16.mxu0 0
      %631 = vmatmul.mubr.bf16.gmra.mrb[0].mxu0 %v584
      %v632 = vpop.f32.mrb[0].mxu0
      %v633 = vadd.f32 0.0, %v632
      %v634 = vpop.f32.mrb[0].mxu0
      %v635 = vpop.f32.mrb[0].mxu0
      %v636 = vadd.f32 0.0, %v635
      %v637 = vpop.f32.mrb[0].mxu0
      %638 = vmatprep.mubr.bf16.mxu0 0
      %639 = vmatmul.mubr.bf16.gmra.mrb[0].mxu0 %v587
      %v640 = vpop.f32.mrb[0].mxu0
      %v641 = vadd.f32 0.0, %v640
      %v642 = vpop.f32.mrb[0].mxu0
      %v643 = vpop.f32.mrb[0].mxu0
      %v644 = vadd.f32 0.0, %v643
      %v645 = vpop.f32.mrb[0].mxu0
      %646 = vmatprep.mubr.bf16.mxu0 0
      %647 = vmatmul.mubr.bf16.gmra.mrb[0].mxu0 %v590
      %v648 = vpop.f32.mrb[0].mxu0
      %v649 = vadd.f32 0.0, %v648
      %v650 = vpop.f32.mrb[0].mxu0
      %v651 = vpop.f32.mrb[0].mxu0
      %v652 = vadd.f32 0.0, %v651
      %v653 = vpop.f32.mrb[0].mxu0
      %654 = vmatprep.mubr.bf16.mxu0 0
      %655 = vmatmul.mubr.bf16.gmra.mrb[0].mxu0 %v593
      %v656 = vpop.f32.mrb[0].mxu0
      %v657 = vadd.f32 0.0, %v656
      %v658 = vpop.f32.mrb[0].mxu0
      %v659 = vpop.f32.mrb[0].mxu0
      %v660 = vadd.f32 0.0, %v659
      %v661 = vpop.f32.mrb[0].mxu0
      %662 = vdwg.mxu0
      %v663 = vadd.f32 %v496, %v633
      %v664 = vadd.f32 %v499, %v636
      %v665 = vadd.f32 %v504, %v641
      %v666 = vadd.f32 %v507, %v644
      %v667 = vadd.f32 %v512, %v649
      %v668 = vadd.f32 %v515, %v652
      %v669 = vadd.f32 %v520, %v657
      %v670 = vadd.f32 %v523, %v660
      %s671 = scalar_lea.vmem %s227, 288
      %v672 = vld [vmem:[%s671] sm:$0xff]
      %v673 = vld [vmem:[%s671 + $0x10] sm:$0xff]
      %v674 = vld [vmem:[%s671 + $0x20] sm:$0xff]
      %v675 = vld [vmem:[%s671 + $0x30] sm:$0xff]
      %v676 = vld [vmem:[%s671 + $0x40] sm:$0xff]
      %v677 = vld [vmem:[%s671 + $0x50] sm:$0xff]
      %v678 = vld [vmem:[%s671 + $0x60] sm:$0xff]
      %v679 = vld [vmem:[%s671 + $0x70] sm:$0xff]
      %v680 = vmul.f32 %v672, %v251
      %v681 = vmul.f32 %v673, %v251
      %v682 = vmul.f32 %v674, %v251
      %v683 = vmul.f32 %v675, %v251
      %v684 = vmul.f32 %v676, %v251
      %v685 = vmul.f32 %v677, %v251
      %v686 = vmul.f32 %v678, %v251
      %v687 = vmul.f32 %v679, %v251
      %v688 = vadd.f32 %v680, %v263
      %v689 = vadd.f32 %v681, %v263
      %v690 = vadd.f32 %v682, %v263
      %v691 = vadd.f32 %v683, %v263
      %v692 = vadd.f32 %v684, %v263
      %v693 = vadd.f32 %v685, %v263
      %v694 = vadd.f32 %v686, %v263
      %v695 = vadd.f32 %v687, %v263
      %v696 = vmax.f32 %v688, 0.0
      %v697 = vmax.f32 %v689, 0.0
      %v698 = vmax.f32 %v690, 0.0
      %v699 = vmax.f32 %v691, 0.0
      %v700 = vmax.f32 %v692, 0.0
      %v701 = vmax.f32 %v693, 0.0
      %v702 = vmax.f32 %v694, 0.0
      %v703 = vmax.f32 %v695, 0.0
      %v704 = vsel %vm292, 0.0, %v696
      %v705 = vsel %vm292, 0.0, %v697
      %v706 = vsel %vm292, 0.0, %v698
      %v707 = vsel %vm292, 0.0, %v699
      %v708 = vsel %vm292, 0.0, %v700
      %v709 = vsel %vm292, 0.0, %v701
      %v710 = vsel %vm292, 0.0, %v702
      %v711 = vsel %vm292, 0.0, %v703
      %v712 = vpack.c.bf16 %v705, %v704
      %v713 = vpack.c.bf16 %v707, %v706
      %v714 = vpack.c.bf16 %v709, %v708
      %v715 = vpack.c.bf16 %v711, %v710
      %s716 = scalar_lea.vmem %s2, 6
      %v717 = vld [vmem:[%s716] sm:$0x3]
      %v719 = vsel %vm364, %v712, 0
      %v722 = vsel %vm364, %v713, 0
      %v725 = vsel %vm364, %v714, 0
      %v728 = vsel %vm364, %v715, 0
      %v731 = vsel %vm377, %v717, 0
      %733 = vmatprep.subr.bf16.mxu0 0
      %734 = vmatpush1.bf16.msra.mxu0 %v731
      %735 = vmatprep.subr.bf16.mxu0 0
      %736 = vmatpush1.bf16.msra.mxu0 0
      %737 = vmatprep.subr.bf16.mxu0 0
      %738 = vmatpush1.bf16.msra.mxu0 0
      %739 = vmatprep.subr.bf16.mxu0 0
      %740 = vmatpush1.bf16.msra.mxu0 0
      %741 = vmatprep.subr.bf16.mxu0 0
      %742 = vmatpush1.bf16.msra.mxu0 0
      %743 = vmatprep.subr.bf16.mxu0 0
      %744 = vmatpush1.bf16.msra.mxu0 0
      %745 = vmatprep.subr.bf16.mxu0 0
      %746 = vmatpush1.bf16.msra.mxu0 0
      %747 = vmatprep.subr.bf16.mxu0 0
      %748 = vmatpush1.bf16.msra.mxu0 0
      %749 = vmatprep.subr.bf16.mxu0 0
      %750 = vmatpush1.bf16.msra.mxu0 0
      %751 = vmatprep.subr.bf16.mxu0 0
      %752 = vmatpush1.bf16.msra.mxu0 0
      %753 = vmatprep.subr.bf16.mxu0 0
      %754 = vmatpush1.bf16.msra.mxu0 0
      %755 = vmatprep.subr.bf16.mxu0 0
      %756 = vmatpush1.bf16.msra.mxu0 0
      %757 = vmatprep.subr.bf16.mxu0 0
      %758 = vmatpush1.bf16.msra.mxu0 0
      %759 = vmatprep.subr.bf16.mxu0 0
      %760 = vmatpush1.bf16.msra.mxu0 0
      %761 = vmatprep.subr.bf16.mxu0 0
      %762 = vmatpush1.bf16.msra.mxu0 0
      %763 = vmatprep.subr.bf16.mxu0 0
      %764 = vmatpush1.bf16.msra.mxu0 0
      %765 = vmatprep.mubr.bf16.mxu0 0
      %766 = vmatmul.mubr.bf16.gmra.mrb[0].mxu0 %v719
      %v767 = vpop.f32.mrb[0].mxu0
      %v768 = vadd.f32 0.0, %v767
      %v769 = vpop.f32.mrb[0].mxu0
      %v770 = vpop.f32.mrb[0].mxu0
      %v771 = vadd.f32 0.0, %v770
      %v772 = vpop.f32.mrb[0].mxu0
      %773 = vmatprep.mubr.bf16.mxu0 0
      %774 = vmatmul.mubr.bf16.gmra.mrb[0].mxu0 %v722
      %v775 = vpop.f32.mrb[0].mxu0
      %v776 = vadd.f32 0.0, %v775
      %v777 = vpop.f32.mrb[0].mxu0
      %v778 = vpop.f32.mrb[0].mxu0
      %v779 = vadd.f32 0.0, %v778
      %v780 = vpop.f32.mrb[0].mxu0
      %781 = vmatprep.mubr.bf16.mxu0 0
      %782 = vmatmul.mubr.bf16.gmra.mrb[0].mxu0 %v725
      %v783 = vpop.f32.mrb[0].mxu0
      %v784 = vadd.f32 0.0, %v783
      %v785 = vpop.f32.mrb[0].mxu0
      %v786 = vpop.f32.mrb[0].mxu0
      %v787 = vadd.f32 0.0, %v786
      %v788 = vpop.f32.mrb[0].mxu0
      %789 = vmatprep.mubr.bf16.mxu0 0
      %790 = vmatmul.mubr.bf16.gmra.mrb[0].mxu0 %v728
      %v791 = vpop.f32.mrb[0].mxu0
      %v792 = vadd.f32 0.0, %v791
      %v793 = vpop.f32.mrb[0].mxu0
      %v794 = vpop.f32.mrb[0].mxu0
      %v795 = vadd.f32 0.0, %v794
      %v796 = vpop.f32.mrb[0].mxu0
      %797 = vdwg.mxu0
      %v798 = vadd.f32 %v663, %v768
      %v799 = vadd.f32 %v664, %v771
      %v800 = vadd.f32 %v665, %v776
      %v801 = vadd.f32 %v666, %v779
      %v802 = vadd.f32 %v667, %v784
      %v803 = vadd.f32 %v668, %v787
      %v804 = vadd.f32 %v669, %v792
      %v805 = vadd.f32 %v670, %v795
      %s806 = scalar_lea.vmem %s227, 432
      %v807 = vld [vmem:[%s806] sm:$0xff]
      %v808 = vld [vmem:[%s806 + $0x10] sm:$0xff]
      %v809 = vld [vmem:[%s806 + $0x20] sm:$0xff]
      %v810 = vld [vmem:[%s806 + $0x30] sm:$0xff]
      %v811 = vld [vmem:[%s806 + $0x40] sm:$0xff]
      %v812 = vld [vmem:[%s806 + $0x50] sm:$0xff]
      %v813 = vld [vmem:[%s806 + $0x60] sm:$0xff]
      %v814 = vld [vmem:[%s806 + $0x70] sm:$0xff]
      %v815 = vmul.f32 %v807, %v251
      %v816 = vmul.f32 %v808, %v251
      %v817 = vmul.f32 %v809, %v251
      %v818 = vmul.f32 %v810, %v251
      %v819 = vmul.f32 %v811, %v251
      %v820 = vmul.f32 %v812, %v251
      %v821 = vmul.f32 %v813, %v251
      %v822 = vmul.f32 %v814, %v251
      %v823 = vadd.f32 %v815, %v263
      %v824 = vadd.f32 %v816, %v263
      %v825 = vadd.f32 %v817, %v263
      %v826 = vadd.f32 %v818, %v263
      %v827 = vadd.f32 %v819, %v263
      %v828 = vadd.f32 %v820, %v263
      %v829 = vadd.f32 %v821, %v263
      %v830 = vadd.f32 %v822, %v263
      %v831 = vmax.f32 %v823, 0.0
      %v832 = vmax.f32 %v824, 0.0
      %v833 = vmax.f32 %v825, 0.0
      %v834 = vmax.f32 %v826, 0.0
      %v835 = vmax.f32 %v827, 0.0
      %v836 = vmax.f32 %v828, 0.0
      %v837 = vmax.f32 %v829, 0.0
      %v838 = vmax.f32 %v830, 0.0
      %v839 = vpack.c.bf16 %v832, %v831
      %v840 = vpack.c.bf16 %v834, %v833
      %v841 = vpack.c.bf16 %v836, %v835
      %v842 = vpack.c.bf16 %v838, %v837
      %s843 = scalar_lea.vmem %s2, 8
      %v844 = vld [vmem:[%s843] sm:$0x3]
      %v846 = vsel %vm364, %v839, 0
      %v849 = vsel %vm364, %v840, 0
      %v852 = vsel %vm364, %v841, 0
      %v855 = vsel %vm364, %v842, 0
      %v858 = vsel %vm377, %v844, 0
      %860 = vmatprep.subr.bf16.mxu0 0
      %861 = vmatpush1.bf16.msra.mxu0 %v858
      %862 = vmatprep.subr.bf16.mxu0 0
      %863 = vmatpush1.bf16.msra.mxu0 0
      %864 = vmatprep.subr.bf16.mxu0 0
      %865 = vmatpush1.bf16.msra.mxu0 0
      %866 = vmatprep.subr.bf16.mxu0 0
      %867 = vmatpush1.bf16.msra.mxu0 0
      %868 = vmatprep.subr.bf16.mxu0 0
      %869 = vmatpush1.bf16.msra.mxu0 0
      %870 = vmatprep.subr.bf16.mxu0 0
      %871 = vmatpush1.bf16.msra.mxu0 0
      %872 = vmatprep.subr.bf16.mxu0 0
      %873 = vmatpush1.bf16.msra.mxu0 0
      %874 = vmatprep.subr.bf16.mxu0 0
      %875 = vmatpush1.bf16.msra.mxu0 0
      %876 = vmatprep.subr.bf16.mxu0 0
      %877 = vmatpush1.bf16.msra.mxu0 0
      %878 = vmatprep.subr.bf16.mxu0 0
      %879 = vmatpush1.bf16.msra.mxu0 0
      %880 = vmatprep.subr.bf16.mxu0 0
      %881 = vmatpush1.bf16.msra.mxu0 0
      %882 = vmatprep.subr.bf16.mxu0 0
      %883 = vmatpush1.bf16.msra.mxu0 0
      %884 = vmatprep.subr.bf16.mxu0 0
      %885 = vmatpush1.bf16.msra.mxu0 0
      %886 = vmatprep.subr.bf16.mxu0 0
      %887 = vmatpush1.bf16.msra.mxu0 0
      %888 = vmatprep.subr.bf16.mxu0 0
      %889 = vmatpush1.bf16.msra.mxu0 0
      %890 = vmatprep.subr.bf16.mxu0 0
      %891 = vmatpush1.bf16.msra.mxu0 0
      %892 = vmatprep.mubr.bf16.mxu0 0
      %893 = vmatmul.mubr.bf16.gmra.mrb[0].mxu0 %v846
      %v894 = vpop.f32.mrb[0].mxu0
      %v895 = vadd.f32 0.0, %v894
      %v896 = vpop.f32.mrb[0].mxu0
      %v897 = vpop.f32.mrb[0].mxu0
      %v898 = vadd.f32 0.0, %v897
      %v899 = vpop.f32.mrb[0].mxu0
      %900 = vmatprep.mubr.bf16.mxu0 0
      %901 = vmatmul.mubr.bf16.gmra.mrb[0].mxu0 %v849
      %v902 = vpop.f32.mrb[0].mxu0
      %v903 = vadd.f32 0.0, %v902
      %v904 = vpop.f32.mrb[0].mxu0
      %v905 = vpop.f32.mrb[0].mxu0
      %v906 = vadd.f32 0.0, %v905
      %v907 = vpop.f32.mrb[0].mxu0
      %908 = vmatprep.mubr.bf16.mxu0 0
      %909 = vmatmul.mubr.bf16.gmra.mrb[0].mxu0 %v852
      %v910 = vpop.f32.mrb[0].mxu0
      %v911 = vadd.f32 0.0, %v910
      %v912 = vpop.f32.mrb[0].mxu0
      %v913 = vpop.f32.mrb[0].mxu0
      %v914 = vadd.f32 0.0, %v913
      %v915 = vpop.f32.mrb[0].mxu0
      %916 = vmatprep.mubr.bf16.mxu0 0
      %917 = vmatmul.mubr.bf16.gmra.mrb[0].mxu0 %v855
      %v918 = vpop.f32.mrb[0].mxu0
      %v919 = vadd.f32 0.0, %v918
      %v920 = vpop.f32.mrb[0].mxu0
      %v921 = vpop.f32.mrb[0].mxu0
      %v922 = vadd.f32 0.0, %v921
      %v923 = vpop.f32.mrb[0].mxu0
      %924 = vdwg.mxu0
      %v925 = vadd.f32 %v798, %v895
      %v926 = vadd.f32 %v799, %v898
      %v927 = vadd.f32 %v800, %v903
      %v928 = vadd.f32 %v801, %v906
      %v929 = vadd.f32 %v802, %v911
      %v930 = vadd.f32 %v803, %v914
      %v931 = vadd.f32 %v804, %v919
      %v932 = vadd.f32 %v805, %v922
      %v933 = vld [vmem:[%s3] sm:$0x3]
      %v935 = vsel %vm377, %v933, 0
      %937 = vmatprep.subr.bf16.mxu0 0
      %938 = vmatpush1.bf16.msra.mxu0 %v935
      %939 = vmatprep.subr.bf16.mxu0 0
      %940 = vmatpush1.bf16.msra.mxu0 0
      %941 = vmatprep.subr.bf16.mxu0 0
      %942 = vmatpush1.bf16.msra.mxu0 0
      %943 = vmatprep.subr.bf16.mxu0 0
      %944 = vmatpush1.bf16.msra.mxu0 0
      %945 = vmatprep.subr.bf16.mxu0 0
      %946 = vmatpush1.bf16.msra.mxu0 0
      %947 = vmatprep.subr.bf16.mxu0 0
      %948 = vmatpush1.bf16.msra.mxu0 0
      %949 = vmatprep.subr.bf16.mxu0 0
      %950 = vmatpush1.bf16.msra.mxu0 0
      %951 = vmatprep.subr.bf16.mxu0 0
      %952 = vmatpush1.bf16.msra.mxu0 0
      %953 = vmatprep.subr.bf16.mxu0 0
      %954 = vmatpush1.bf16.msra.mxu0 0
      %955 = vmatprep.subr.bf16.mxu0 0
      %956 = vmatpush1.bf16.msra.mxu0 0
      %957 = vmatprep.subr.bf16.mxu0 0
      %958 = vmatpush1.bf16.msra.mxu0 0
      %959 = vmatprep.subr.bf16.mxu0 0
      %960 = vmatpush1.bf16.msra.mxu0 0
      %961 = vmatprep.subr.bf16.mxu0 0
      %962 = vmatpush1.bf16.msra.mxu0 0
      %963 = vmatprep.subr.bf16.mxu0 0
      %964 = vmatpush1.bf16.msra.mxu0 0
      %965 = vmatprep.subr.bf16.mxu0 0
      %966 = vmatpush1.bf16.msra.mxu0 0
      %967 = vmatprep.subr.bf16.mxu0 0
      %968 = vmatpush1.bf16.msra.mxu0 0
      %969 = vmatprep.mubr.bf16.mxu0 0
      %970 = vmatmul.mubr.bf16.gmra.mrb[0].mxu0 %v846
      %v971 = vpop.f32.mrb[0].mxu0
      %v972 = vadd.f32 0.0, %v971
      %v973 = vpop.f32.mrb[0].mxu0
      %v974 = vpop.f32.mrb[0].mxu0
      %v975 = vadd.f32 0.0, %v974
      %v976 = vpop.f32.mrb[0].mxu0
      %977 = vmatprep.mubr.bf16.mxu0 0
      %978 = vmatmul.mubr.bf16.gmra.mrb[0].mxu0 %v849
      %v979 = vpop.f32.mrb[0].mxu0
      %v980 = vadd.f32 0.0, %v979
      %v981 = vpop.f32.mrb[0].mxu0
      %v982 = vpop.f32.mrb[0].mxu0
      %v983 = vadd.f32 0.0, %v982
      %v984 = vpop.f32.mrb[0].mxu0
      %985 = vmatprep.mubr.bf16.mxu0 0
      %986 = vmatmul.mubr.bf16.gmra.mrb[0].mxu0 %v852
      %v987 = vpop.f32.mrb[0].mxu0
      %v988 = vadd.f32 0.0, %v987
      %v989 = vpop.f32.mrb[0].mxu0
      %v990 = vpop.f32.mrb[0].mxu0
      %v991 = vadd.f32 0.0, %v990
      %v992 = vpop.f32.mrb[0].mxu0
      %993 = vmatprep.mubr.bf16.mxu0 0
      %994 = vmatmul.mubr.bf16.gmra.mrb[0].mxu0 %v855
      %v995 = vpop.f32.mrb[0].mxu0
      %v996 = vadd.f32 0.0, %v995
      %v997 = vpop.f32.mrb[0].mxu0
      %v998 = vpop.f32.mrb[0].mxu0
      %v999 = vadd.f32 0.0, %v998
      %v1000 = vpop.f32.mrb[0].mxu0
      %1001 = vdwg.mxu0
      %vm1002 = vcmask 64512
      %1003 = vst.msk [vmem:[%s237] sm:$0xff] %vm1002, %v972
      %1004 = vst.msk [vmem:[%s237 + $0x8] sm:$0xff] %vm1002, %v975
      %1005 = vst.msk [vmem:[%s237 + $0x10] sm:$0xff] %vm1002, %v980
      %1006 = vst.msk [vmem:[%s237 + $0x18] sm:$0xff] %vm1002, %v983
      %1007 = vst.msk [vmem:[%s237 + $0x20] sm:$0xff] %vm1002, %v988
      %1008 = vst.msk [vmem:[%s237 + $0x28] sm:$0xff] %vm1002, %v991
      %1009 = vst.msk [vmem:[%s237 + $0x30] sm:$0xff] %vm1002, %v996
      %1010 = vst.msk [vmem:[%s237 + $0x38] sm:$0xff] %vm1002, %v999
      %v1011 = vld [vmem:[%s671 + $0x1] sm:$0xff]
      %v1012 = vld [vmem:[%s671 + $0x11] sm:$0xff]
      %v1013 = vld [vmem:[%s671 + $0x21] sm:$0xff]
      %v1014 = vld [vmem:[%s671 + $0x31] sm:$0xff]
      %v1015 = vld [vmem:[%s671 + $0x41] sm:$0xff]
      %v1016 = vld [vmem:[%s671 + $0x51] sm:$0xff]
      %v1017 = vld [vmem:[%s671 + $0x61] sm:$0xff]
      %v1018 = vld [vmem:[%s671 + $0x71] sm:$0xff]
      %v1019 = vmul.f32 %v1011, %v251
      %v1020 = vmul.f32 %v1012, %v251
      %v1021 = vmul.f32 %v1013, %v251
      %v1022 = vmul.f32 %v1014, %v251
      %v1023 = vmul.f32 %v1015, %v251
      %v1024 = vmul.f32 %v1016, %v251
      %v1025 = vmul.f32 %v1017, %v251
      %v1026 = vmul.f32 %v1018, %v251
      %v1027 = vadd.f32 %v1019, %v263
      %v1028 = vadd.f32 %v1020, %v263
      %v1029 = vadd.f32 %v1021, %v263
      %v1030 = vadd.f32 %v1022, %v263
      %v1031 = vadd.f32 %v1023, %v263
      %v1032 = vadd.f32 %v1024, %v263
      %v1033 = vadd.f32 %v1025, %v263
      %v1034 = vadd.f32 %v1026, %v263
      %v1035 = vmax.f32 %v1027, 0.0
      %v1036 = vmax.f32 %v1028, 0.0
      %v1037 = vmax.f32 %v1029, 0.0
      %v1038 = vmax.f32 %v1030, 0.0
      %v1039 = vmax.f32 %v1031, 0.0
      %v1040 = vmax.f32 %v1032, 0.0
      %v1041 = vmax.f32 %v1033, 0.0
      %v1042 = vmax.f32 %v1034, 0.0
      %v1043 = vpack.c.bf16 %v1036, %v1035
      %v1044 = vpack.c.bf16 %v1038, %v1037
      %v1045 = vpack.c.bf16 %v1040, %v1039
      %v1046 = vpack.c.bf16 %v1042, %v1041
      %s1047 = scalar_lea.vmem %s2, 10
      %v1048 = vld [vmem:[%s1047] sm:$0x3]
      %v1050 = vsel %vm364, %v1043, 0
      %v1053 = vsel %vm364, %v1044, 0
      %v1056 = vsel %vm364, %v1045, 0
      %v1059 = vsel %vm364, %v1046, 0
      %v1062 = vsel %vm377, %v1048, 0
      %1064 = vmatprep.subr.bf16.mxu0 0
      %1065 = vmatpush1.bf16.msra.mxu0 %v1062
      %1066 = vmatprep.subr.bf16.mxu0 0
      %1067 = vmatpush1.bf16.msra.mxu0 0
      %1068 = vmatprep.subr.bf16.mxu0 0
      %1069 = vmatpush1.bf16.msra.mxu0 0
      %1070 = vmatprep.subr.bf16.mxu0 0
      %1071 = vmatpush1.bf16.msra.mxu0 0
      %1072 = vmatprep.subr.bf16.mxu0 0
      %1073 = vmatpush1.bf16.msra.mxu0 0
      %1074 = vmatprep.subr.bf16.mxu0 0
      %1075 = vmatpush1.bf16.msra.mxu0 0
      %1076 = vmatprep.subr.bf16.mxu0 0
      %1077 = vmatpush1.bf16.msra.mxu0 0
      %1078 = vmatprep.subr.bf16.mxu0 0
      %1079 = vmatpush1.bf16.msra.mxu0 0
      %1080 = vmatprep.subr.bf16.mxu0 0
      %1081 = vmatpush1.bf16.msra.mxu0 0
      %1082 = vmatprep.subr.bf16.mxu0 0
      %1083 = vmatpush1.bf16.msra.mxu0 0
      %1084 = vmatprep.subr.bf16.mxu0 0
      %1085 = vmatpush1.bf16.msra.mxu0 0
      %1086 = vmatprep.subr.bf16.mxu0 0
      %1087 = vmatpush1.bf16.msra.mxu0 0
      %1088 = vmatprep.subr.bf16.mxu0 0
      %1089 = vmatpush1.bf16.msra.mxu0 0
      %1090 = vmatprep.subr.bf16.mxu0 0
      %1091 = vmatpush1.bf16.msra.mxu0 0
      %1092 = vmatprep.subr.bf16.mxu0 0
      %1093 = vmatpush1.bf16.msra.mxu0 0
      %1094 = vmatprep.subr.bf16.mxu0 0
      %1095 = vmatpush1.bf16.msra.mxu0 0
      %1096 = vmatprep.mubr.bf16.mxu0 0
      %1097 = vmatmul.mubr.bf16.gmra.mrb[0].mxu0 %v1050
      %v1098 = vpop.f32.mrb[0].mxu0
      %v1099 = vadd.f32 0.0, %v1098
      %v1100 = vpop.f32.mrb[0].mxu0
      %v1101 = vpop.f32.mrb[0].mxu0
      %v1102 = vadd.f32 0.0, %v1101
      %v1103 = vpop.f32.mrb[0].mxu0
      %1104 = vmatprep.mubr.bf16.mxu0 0
      %1105 = vmatmul.mubr.bf16.gmra.mrb[0].mxu0 %v1053
      %v1106 = vpop.f32.mrb[0].mxu0
      %v1107 = vadd.f32 0.0, %v1106
      %v1108 = vpop.f32.mrb[0].mxu0
      %v1109 = vpop.f32.mrb[0].mxu0
      %v1110 = vadd.f32 0.0, %v1109
      %v1111 = vpop.f32.mrb[0].mxu0
      %1112 = vmatprep.mubr.bf16.mxu0 0
      %1113 = vmatmul.mubr.bf16.gmra.mrb[0].mxu0 %v1056
      %v1114 = vpop.f32.mrb[0].mxu0
      %v1115 = vadd.f32 0.0, %v1114
      %v1116 = vpop.f32.mrb[0].mxu0
      %v1117 = vpop.f32.mrb[0].mxu0
      %v1118 = vadd.f32 0.0, %v1117
      %v1119 = vpop.f32.mrb[0].mxu0
      %1120 = vmatprep.mubr.bf16.mxu0 0
      %1121 = vmatmul.mubr.bf16.gmra.mrb[0].mxu0 %v1059
      %v1122 = vpop.f32.mrb[0].mxu0
      %v1123 = vadd.f32 0.0, %v1122
      %v1124 = vpop.f32.mrb[0].mxu0
      %v1125 = vpop.f32.mrb[0].mxu0
      %v1126 = vadd.f32 0.0, %v1125
      %v1127 = vpop.f32.mrb[0].mxu0
      %1128 = vdwg.mxu0
      %v1129 = vadd.f32 %v925, %v1099
      %v1130 = vadd.f32 %v926, %v1102
      %v1131 = vadd.f32 %v927, %v1107
      %v1132 = vadd.f32 %v928, %v1110
      %v1133 = vadd.f32 %v929, %v1115
      %v1134 = vadd.f32 %v930, %v1118
      %v1135 = vadd.f32 %v931, %v1123
      %v1136 = vadd.f32 %v932, %v1126
      %s1137 = scalar_lea.vmem %s227, 16
      %v1138 = vld [vmem:[%s1137] sm:$0xff]
      %v1139 = vld [vmem:[%s1137 + $0x10] sm:$0xff]
      %v1140 = vld [vmem:[%s1137 + $0x20] sm:$0xff]
      %v1141 = vld [vmem:[%s1137 + $0x30] sm:$0xff]
      %v1142 = vld [vmem:[%s1137 + $0x40] sm:$0xff]
      %v1143 = vld [vmem:[%s1137 + $0x50] sm:$0xff]
      %v1144 = vld [vmem:[%s1137 + $0x60] sm:$0xff]
      %v1145 = vld [vmem:[%s1137 + $0x70] sm:$0xff]
      %v1146 = vmul.f32 %v1138, %v251
      %v1147 = vmul.f32 %v1139, %v251
      %v1148 = vmul.f32 %v1140, %v251
      %v1149 = vmul.f32 %v1141, %v251
      %v1150 = vmul.f32 %v1142, %v251
      %v1151 = vmul.f32 %v1143, %v251
      %v1152 = vmul.f32 %v1144, %v251
      %v1153 = vmul.f32 %v1145, %v251
      %v1154 = vadd.f32 %v1146, %v263
      %v1155 = vadd.f32 %v1147, %v263
      %v1156 = vadd.f32 %v1148, %v263
      %v1157 = vadd.f32 %v1149, %v263
      %v1158 = vadd.f32 %v1150, %v263
      %v1159 = vadd.f32 %v1151, %v263
      %v1160 = vadd.f32 %v1152, %v263
      %v1161 = vadd.f32 %v1153, %v263
      %v1162 = vmax.f32 %v1154, 0.0
      %v1163 = vmax.f32 %v1155, 0.0
      %v1164 = vmax.f32 %v1156, 0.0
      %v1165 = vmax.f32 %v1157, 0.0
      %v1166 = vmax.f32 %v1158, 0.0
      %v1167 = vmax.f32 %v1159, 0.0
      %v1168 = vmax.f32 %v1160, 0.0
      %v1169 = vmax.f32 %v1161, 0.0
      %v1170 = vsel %vm292, 0.0, %v1162
      %v1171 = vsel %vm292, 0.0, %v1163
      %v1172 = vsel %vm292, 0.0, %v1164
      %v1173 = vsel %vm292, 0.0, %v1165
      %v1174 = vsel %vm292, 0.0, %v1166
      %v1175 = vsel %vm292, 0.0, %v1167
      %v1176 = vsel %vm292, 0.0, %v1168
      %v1177 = vsel %vm292, 0.0, %v1169
      %v1178 = vpack.c.bf16 %v1171, %v1170
      %v1179 = vpack.c.bf16 %v1173, %v1172
      %v1180 = vpack.c.bf16 %v1175, %v1174
      %v1181 = vpack.c.bf16 %v1177, %v1176
      %s1182 = scalar_lea.vmem %s2, 12
      %v1183 = vld [vmem:[%s1182] sm:$0x3]
      %v1185 = vsel %vm364, %v1178, 0
      %v1188 = vsel %vm364, %v1179, 0
      %v1191 = vsel %vm364, %v1180, 0
      %v1194 = vsel %vm364, %v1181, 0
      %v1197 = vsel %vm377, %v1183, 0
      %1199 = vmatprep.subr.bf16.mxu0 0
      %1200 = vmatpush1.bf16.msra.mxu0 %v1197
      %1201 = vmatprep.subr.bf16.mxu0 0
      %1202 = vmatpush1.bf16.msra.mxu0 0
      %1203 = vmatprep.subr.bf16.mxu0 0
      %1204 = vmatpush1.bf16.msra.mxu0 0
      %1205 = vmatprep.subr.bf16.mxu0 0
      %1206 = vmatpush1.bf16.msra.mxu0 0
      %1207 = vmatprep.subr.bf16.mxu0 0
      %1208 = vmatpush1.bf16.msra.mxu0 0
      %1209 = vmatprep.subr.bf16.mxu0 0
      %1210 = vmatpush1.bf16.msra.mxu0 0
      %1211 = vmatprep.subr.bf16.mxu0 0
      %1212 = vmatpush1.bf16.msra.mxu0 0
      %1213 = vmatprep.subr.bf16.mxu0 0
      %1214 = vmatpush1.bf16.msra.mxu0 0
      %1215 = vmatprep.subr.bf16.mxu0 0
      %1216 = vmatpush1.bf16.msra.mxu0 0
      %1217 = vmatprep.subr.bf16.mxu0 0
      %1218 = vmatpush1.bf16.msra.mxu0 0
      %1219 = vmatprep.subr.bf16.mxu0 0
      %1220 = vmatpush1.bf16.msra.mxu0 0
      %1221 = vmatprep.subr.bf16.mxu0 0
      %1222 = vmatpush1.bf16.msra.mxu0 0
      %1223 = vmatprep.subr.bf16.mxu0 0
      %1224 = vmatpush1.bf16.msra.mxu0 0
      %1225 = vmatprep.subr.bf16.mxu0 0
      %1226 = vmatpush1.bf16.msra.mxu0 0
      %1227 = vmatprep.subr.bf16.mxu0 0
      %1228 = vmatpush1.bf16.msra.mxu0 0
      %1229 = vmatprep.subr.bf16.mxu0 0
      %1230 = vmatpush1.bf16.msra.mxu0 0
      %1231 = vmatprep.mubr.bf16.mxu0 0
      %1232 = vmatmul.mubr.bf16.gmra.mrb[0].mxu0 %v1185
      %v1233 = vpop.f32.mrb[0].mxu0
      %v1234 = vadd.f32 0.0, %v1233
      %v1235 = vpop.f32.mrb[0].mxu0
      %v1236 = vpop.f32.mrb[0].mxu0
      %v1237 = vadd.f32 0.0, %v1236
      %v1238 = vpop.f32.mrb[0].mxu0
      %1239 = vmatprep.mubr.bf16.mxu0 0
      %1240 = vmatmul.mubr.bf16.gmra.mrb[0].mxu0 %v1188
      %v1241 = vpop.f32.mrb[0].mxu0
      %v1242 = vadd.f32 0.0, %v1241
      %v1243 = vpop.f32.mrb[0].mxu0
      %v1244 = vpop.f32.mrb[0].mxu0
      %v1245 = vadd.f32 0.0, %v1244
      %v1246 = vpop.f32.mrb[0].mxu0
      %1247 = vmatprep.mubr.bf16.mxu0 0
      %1248 = vmatmul.mubr.bf16.gmra.mrb[0].mxu0 %v1191
      %v1249 = vpop.f32.mrb[0].mxu0
      %v1250 = vadd.f32 0.0, %v1249
      %v1251 = vpop.f32.mrb[0].mxu0
      %v1252 = vpop.f32.mrb[0].mxu0
      %v1253 = vadd.f32 0.0, %v1252
      %v1254 = vpop.f32.mrb[0].mxu0
      %1255 = vmatprep.mubr.bf16.mxu0 0
      %1256 = vmatmul.mubr.bf16.gmra.mrb[0].mxu0 %v1194
      %v1257 = vpop.f32.mrb[0].mxu0
      %v1258 = vadd.f32 0.0, %v1257
      %v1259 = vpop.f32.mrb[0].mxu0
      %v1260 = vpop.f32.mrb[0].mxu0
      %v1261 = vadd.f32 0.0, %v1260
      %v1262 = vpop.f32.mrb[0].mxu0
      %1263 = vdwg.mxu0
      %v1264 = vadd.f32 %v1129, %v1234
      %v1265 = vadd.f32 %v1130, %v1237
      %v1266 = vadd.f32 %v1131, %v1242
      %v1267 = vadd.f32 %v1132, %v1245
      %v1268 = vadd.f32 %v1133, %v1250
      %v1269 = vadd.f32 %v1134, %v1253
      %v1270 = vadd.f32 %v1135, %v1258
      %v1271 = vadd.f32 %v1136, %v1261
      %s1272 = scalar_lea.vmem %s227, 160
      %v1273 = vld [vmem:[%s1272] sm:$0xff]
      %v1274 = vld [vmem:[%s1272 + $0x10] sm:$0xff]
      %v1275 = vld [vmem:[%s1272 + $0x20] sm:$0xff]
      %v1276 = vld [vmem:[%s1272 + $0x30] sm:$0xff]
      %v1277 = vld [vmem:[%s1272 + $0x40] sm:$0xff]
      %v1278 = vld [vmem:[%s1272 + $0x50] sm:$0xff]
      %v1279 = vld [vmem:[%s1272 + $0x60] sm:$0xff]
      %v1280 = vld [vmem:[%s1272 + $0x70] sm:$0xff]
      %v1281 = vmul.f32 %v1273, %v251
      %v1282 = vmul.f32 %v1274, %v251
      %v1283 = vmul.f32 %v1275, %v251
      %v1284 = vmul.f32 %v1276, %v251
      %v1285 = vmul.f32 %v1277, %v251
      %v1286 = vmul.f32 %v1278, %v251
      %v1287 = vmul.f32 %v1279, %v251
      %v1288 = vmul.f32 %v1280, %v251
      %v1289 = vadd.f32 %v1281, %v263
      %v1290 = vadd.f32 %v1282, %v263
      %v1291 = vadd.f32 %v1283, %v263
      %v1292 = vadd.f32 %v1284, %v263
      %v1293 = vadd.f32 %v1285, %v263
      %v1294 = vadd.f32 %v1286, %v263
      %v1295 = vadd.f32 %v1287, %v263
      %v1296 = vadd.f32 %v1288, %v263
      %v1297 = vmax.f32 %v1289, 0.0
      %v1298 = vmax.f32 %v1290, 0.0
      %v1299 = vmax.f32 %v1291, 0.0
      %v1300 = vmax.f32 %v1292, 0.0
      %v1301 = vmax.f32 %v1293, 0.0
      %v1302 = vmax.f32 %v1294, 0.0
      %v1303 = vmax.f32 %v1295, 0.0
      %v1304 = vmax.f32 %v1296, 0.0
      %v1305 = vpack.c.bf16 %v1298, %v1297
      %v1306 = vpack.c.bf16 %v1300, %v1299
      %v1307 = vpack.c.bf16 %v1302, %v1301
      %v1308 = vpack.c.bf16 %v1304, %v1303
      %s1309 = scalar_lea.vmem %s2, 14
      %v1310 = vld [vmem:[%s1309] sm:$0x3]
      %v1312 = vsel %vm364, %v1305, 0
      %v1315 = vsel %vm364, %v1306, 0
      %v1318 = vsel %vm364, %v1307, 0
      %v1321 = vsel %vm364, %v1308, 0
      %v1324 = vsel %vm377, %v1310, 0
      %1326 = vmatprep.subr.bf16.mxu0 0
      %1327 = vmatpush1.bf16.msra.mxu0 %v1324
      %1328 = vmatprep.subr.bf16.mxu0 0
      %1329 = vmatpush1.bf16.msra.mxu0 0
      %1330 = vmatprep.subr.bf16.mxu0 0
      %1331 = vmatpush1.bf16.msra.mxu0 0
      %1332 = vmatprep.subr.bf16.mxu0 0
      %1333 = vmatpush1.bf16.msra.mxu0 0
      %1334 = vmatprep.subr.bf16.mxu0 0
      %1335 = vmatpush1.bf16.msra.mxu0 0
      %1336 = vmatprep.subr.bf16.mxu0 0
      %1337 = vmatpush1.bf16.msra.mxu0 0
      %1338 = vmatprep.subr.bf16.mxu0 0
      %1339 = vmatpush1.bf16.msra.mxu0 0
      %1340 = vmatprep.subr.bf16.mxu0 0
      %1341 = vmatpush1.bf16.msra.mxu0 0
      %1342 = vmatprep.subr.bf16.mxu0 0
      %1343 = vmatpush1.bf16.msra.mxu0 0
      %1344 = vmatprep.subr.bf16.mxu0 0
      %1345 = vmatpush1.bf16.msra.mxu0 0
      %1346 = vmatprep.subr.bf16.mxu0 0
      %1347 = vmatpush1.bf16.msra.mxu0 0
      %1348 = vmatprep.subr.bf16.mxu0 0
      %1349 = vmatpush1.bf16.msra.mxu0 0
      %1350 = vmatprep.subr.bf16.mxu0 0
      %1351 = vmatpush1.bf16.msra.mxu0 0
      %1352 = vmatprep.subr.bf16.mxu0 0
      %1353 = vmatpush1.bf16.msra.mxu0 0
      %1354 = vmatprep.subr.bf16.mxu0 0
      %1355 = vmatpush1.bf16.msra.mxu0 0
      %1356 = vmatprep.subr.bf16.mxu0 0
      %1357 = vmatpush1.bf16.msra.mxu0 0
      %1358 = vmatprep.mubr.bf16.mxu0 0
      %1359 = vmatmul.mubr.bf16.gmra.mrb[0].mxu0 %v1312
      %v1360 = vpop.f32.mrb[0].mxu0
      %v1361 = vadd.f32 0.0, %v1360
      %v1362 = vpop.f32.mrb[0].mxu0
      %v1363 = vpop.f32.mrb[0].mxu0
      %v1364 = vadd.f32 0.0, %v1363
      %v1365 = vpop.f32.mrb[0].mxu0
      %1366 = vmatprep.mubr.bf16.mxu0 0
      %1367 = vmatmul.mubr.bf16.gmra.mrb[0].mxu0 %v1315
      %v1368 = vpop.f32.mrb[0].mxu0
      %v1369 = vadd.f32 0.0, %v1368
      %v1370 = vpop.f32.mrb[0].mxu0
      %v1371 = vpop.f32.mrb[0].mxu0
      %v1372 = vadd.f32 0.0, %v1371
      %v1373 = vpop.f32.mrb[0].mxu0
      %1374 = vmatprep.mubr.bf16.mxu0 0
      %1375 = vmatmul.mubr.bf16.gmra.mrb[0].mxu0 %v1318
      %v1376 = vpop.f32.mrb[0].mxu0
      %v1377 = vadd.f32 0.0, %v1376
      %v1378 = vpop.f32.mrb[0].mxu0
      %v1379 = vpop.f32.mrb[0].mxu0
      %v1380 = vadd.f32 0.0, %v1379
      %v1381 = vpop.f32.mrb[0].mxu0
      %1382 = vmatprep.mubr.bf16.mxu0 0
      %1383 = vmatmul.mubr.bf16.gmra.mrb[0].mxu0 %v1321
      %v1384 = vpop.f32.mrb[0].mxu0
      %v1385 = vadd.f32 0.0, %v1384
      %v1386 = vpop.f32.mrb[0].mxu0
      %v1387 = vpop.f32.mrb[0].mxu0
      %v1388 = vadd.f32 0.0, %v1387
      %v1389 = vpop.f32.mrb[0].mxu0
      %1390 = vdwg.mxu0
      %v1391 = vadd.f32 %v1264, %v1361
      %v1392 = vadd.f32 %v1265, %v1364
      %v1393 = vadd.f32 %v1266, %v1369
      %v1394 = vadd.f32 %v1267, %v1372
      %v1395 = vadd.f32 %v1268, %v1377
      %v1396 = vadd.f32 %v1269, %v1380
      %v1397 = vadd.f32 %v1270, %v1385
      %v1398 = vadd.f32 %v1271, %v1388
      %v1399 = vld [vmem:[%s1137 + $0x1] sm:$0xff]
      %v1400 = vld [vmem:[%s1137 + $0x11] sm:$0xff]
      %v1401 = vld [vmem:[%s1137 + $0x21] sm:$0xff]
      %v1402 = vld [vmem:[%s1137 + $0x31] sm:$0xff]
      %v1403 = vld [vmem:[%s1137 + $0x41] sm:$0xff]
      %v1404 = vld [vmem:[%s1137 + $0x51] sm:$0xff]
      %v1405 = vld [vmem:[%s1137 + $0x61] sm:$0xff]
      %v1406 = vld [vmem:[%s1137 + $0x71] sm:$0xff]
      %v1407 = vmul.f32 %v1399, %v251
      %v1408 = vmul.f32 %v1400, %v251
      %v1409 = vmul.f32 %v1401, %v251
      %v1410 = vmul.f32 %v1402, %v251
      %v1411 = vmul.f32 %v1403, %v251
      %v1412 = vmul.f32 %v1404, %v251
      %v1413 = vmul.f32 %v1405, %v251
      %v1414 = vmul.f32 %v1406, %v251
      %v1415 = vadd.f32 %v1407, %v263
      %v1416 = vadd.f32 %v1408, %v263
      %v1417 = vadd.f32 %v1409, %v263
      %v1418 = vadd.f32 %v1410, %v263
      %v1419 = vadd.f32 %v1411, %v263
      %v1420 = vadd.f32 %v1412, %v263
      %v1421 = vadd.f32 %v1413, %v263
      %v1422 = vadd.f32 %v1414, %v263
      %v1423 = vmax.f32 %v1415, 0.0
      %v1424 = vmax.f32 %v1416, 0.0
      %v1425 = vmax.f32 %v1417, 0.0
      %v1426 = vmax.f32 %v1418, 0.0
      %v1427 = vmax.f32 %v1419, 0.0
      %v1428 = vmax.f32 %v1420, 0.0
      %v1429 = vmax.f32 %v1421, 0.0
      %v1430 = vmax.f32 %v1422, 0.0
      %v1431 = vpack.c.bf16 %v1424, %v1423
      %v1432 = vpack.c.bf16 %v1426, %v1425
      %v1433 = vpack.c.bf16 %v1428, %v1427
      %v1434 = vpack.c.bf16 %v1430, %v1429
      %s1435 = scalar_lea.vmem %s2, 16
      %v1436 = vld [vmem:[%s1435] sm:$0x3]
      %v1438 = vsel %vm364, %v1431, 0
      %v1441 = vsel %vm364, %v1432, 0
      %v1444 = vsel %vm364, %v1433, 0
      %v1447 = vsel %vm364, %v1434, 0
      %v1450 = vsel %vm377, %v1436, 0
      %1452 = vmatprep.subr.bf16.mxu0 0
      %1453 = vmatpush1.bf16.msra.mxu0 %v1450
      %1454 = vmatprep.subr.bf16.mxu0 0
      %1455 = vmatpush1.bf16.msra.mxu0 0
      %1456 = vmatprep.subr.bf16.mxu0 0
      %1457 = vmatpush1.bf16.msra.mxu0 0
      %1458 = vmatprep.subr.bf16.mxu0 0
      %1459 = vmatpush1.bf16.msra.mxu0 0
      %1460 = vmatprep.subr.bf16.mxu0 0
      %1461 = vmatpush1.bf16.msra.mxu0 0
      %1462 = vmatprep.subr.bf16.mxu0 0
      %1463 = vmatpush1.bf16.msra.mxu0 0
      %1464 = vmatprep.subr.bf16.mxu0 0
      %1465 = vmatpush1.bf16.msra.mxu0 0
      %1466 = vmatprep.subr.bf16.mxu0 0
      %1467 = vmatpush1.bf16.msra.mxu0 0
      %1468 = vmatprep.subr.bf16.mxu0 0
      %1469 = vmatpush1.bf16.msra.mxu0 0
      %1470 = vmatprep.subr.bf16.mxu0 0
      %1471 = vmatpush1.bf16.msra.mxu0 0
      %1472 = vmatprep.subr.bf16.mxu0 0
      %1473 = vmatpush1.bf16.msra.mxu0 0
      %1474 = vmatprep.subr.bf16.mxu0 0
      %1475 = vmatpush1.bf16.msra.mxu0 0
      %1476 = vmatprep.subr.bf16.mxu0 0
      %1477 = vmatpush1.bf16.msra.mxu0 0
      %1478 = vmatprep.subr.bf16.mxu0 0
      %1479 = vmatpush1.bf16.msra.mxu0 0
      %1480 = vmatprep.subr.bf16.mxu0 0
      %1481 = vmatpush1.bf16.msra.mxu0 0
      %1482 = vmatprep.subr.bf16.mxu0 0
      %1483 = vmatpush1.bf16.msra.mxu0 0
      %1484 = vmatprep.mubr.bf16.mxu0 0
      %1485 = vmatmul.mubr.bf16.gmra.mrb[0].mxu0 %v1438
      %v1486 = vpop.f32.mrb[0].mxu0
      %v1487 = vadd.f32 0.0, %v1486
      %v1488 = vpop.f32.mrb[0].mxu0
      %v1489 = vpop.f32.mrb[0].mxu0
      %v1490 = vadd.f32 0.0, %v1489
      %v1491 = vpop.f32.mrb[0].mxu0
      %1492 = vmatprep.mubr.bf16.mxu0 0
      %1493 = vmatmul.mubr.bf16.gmra.mrb[0].mxu0 %v1441
      %v1494 = vpop.f32.mrb[0].mxu0
      %v1495 = vadd.f32 0.0, %v1494
      %v1496 = vpop.f32.mrb[0].mxu0
      %v1497 = vpop.f32.mrb[0].mxu0
      %v1498 = vadd.f32 0.0, %v1497
      %v1499 = vpop.f32.mrb[0].mxu0
      %1500 = vmatprep.mubr.bf16.mxu0 0
      %1501 = vmatmul.mubr.bf16.gmra.mrb[0].mxu0 %v1444
      %v1502 = vpop.f32.mrb[0].mxu0
      %v1503 = vadd.f32 0.0, %v1502
      %v1504 = vpop.f32.mrb[0].mxu0
      %v1505 = vpop.f32.mrb[0].mxu0
      %v1506 = vadd.f32 0.0, %v1505
      %v1507 = vpop.f32.mrb[0].mxu0
      %1508 = vmatprep.mubr.bf16.mxu0 0
      %1509 = vmatmul.mubr.bf16.gmra.mrb[0].mxu0 %v1447
      %v1510 = vpop.f32.mrb[0].mxu0
      %v1511 = vadd.f32 0.0, %v1510
      %v1512 = vpop.f32.mrb[0].mxu0
      %v1513 = vpop.f32.mrb[0].mxu0
      %v1514 = vadd.f32 0.0, %v1513
      %v1515 = vpop.f32.mrb[0].mxu0
      %1516 = vdwg.mxu0
      %v1517 = vadd.f32 %v1391, %v1487
      %v1518 = vadd.f32 %v1392, %v1490
      %v1519 = vadd.f32 %v1393, %v1495
      %v1520 = vadd.f32 %v1394, %v1498
      %v1521 = vadd.f32 %v1395, %v1503
      %v1522 = vadd.f32 %v1396, %v1506
      %v1523 = vadd.f32 %v1397, %v1511
      %v1524 = vadd.f32 %v1398, %v1514
      %1525 = vst.msk [vmem:[%s232] sm:$0xff] %vm1002, %v1517
      %1526 = vst.msk [vmem:[%s232 + $0x8] sm:$0xff] %vm1002, %v1518
      %1527 = vst.msk [vmem:[%s232 + $0x10] sm:$0xff] %vm1002, %v1519
      %1528 = vst.msk [vmem:[%s232 + $0x18] sm:$0xff] %vm1002, %v1520
      %1529 = vst.msk [vmem:[%s232 + $0x20] sm:$0xff] %vm1002, %v1521
      %1530 = vst.msk [vmem:[%s232 + $0x28] sm:$0xff] %vm1002, %v1522
      %1531 = vst.msk [vmem:[%s232 + $0x30] sm:$0xff] %vm1002, %v1523
      %1532 = vst.msk [vmem:[%s232 + $0x38] sm:$0xff] %vm1002, %v1524
      %p1533 = scmp.lt.s32.totalorder %s17, 1
      %s1534 = scalar_select %p1533, %s17, 1
      %s1535 = smul.addr %s1534, 8
      %s1536 = smul.addr %s1535, 8
      %s1537 = scalar_lea.vmem %s4, %s1536
      %p1538 = scmp.lt.s32.totalorder %s17, 1
      %s1539 = scalar_select %p1538, %s17, 1
      %s1540 = smul.addr %s1539, 8
      %s1541 = smul.addr %s1540, 8
      %s1542 = scalar_lea.vmem %s5, %s1541
      // Predicated region
      $region37: #{preact_block_forward.5} parent=35 // pred_check
        %p1543 = pneg %p124
      $region38: #{preact_block_forward.5} parent=35 // pred_check_branch
        %1545 = sbr.rel (%p1543) target = $region40
      $region39: #{preact_block_forward.5} parent=35 // pred_region
        _
      $region40: #{preact_block_forward.5} parent=35 // pred_fallthru
        _
      // Predicated region
      $region41: #{preact_block_forward.5} parent=35 // pred_check
        %p1546 = pneg %p150
      $region42: #{preact_block_forward.5} parent=35 // pred_check_branch
        %1548 = sbr.rel (%p1546) target = $region44
      $region43: #{preact_block_forward.5} parent=35 // pred_region
        _
      $region44: #{preact_block_forward.5} parent=35 // pred_fallthru
        _
    $region36: #{preact_block_forward.5} parent=5 // pred_fallthru
      _
    %p1549 = scmp.le.s32.totalorder 2, %s12
    // Predicated region
    $region45: #{preact_block_forward.5} parent=5 // pred_check
      %p1550 = pneg %p1549
    $region46: #{preact_block_forward.5} parent=5 // pred_check_branch
      %1552 = sbr.rel (%p1550) target = $region48
    $region47: #{preact_block_forward.5} parent=5 // pred_region
      %s1553 = ssub.s32 %s12, 2
      // Predicated region
      $region49: #{preact_block_forward.5} parent=47 // pred_check
        %p1554 = pneg %p130
      $region50: #{preact_block_forward.5} parent=47 // pred_check_branch
        %1556 = sbr.rel (%p1554) target = $region52
      $region51: #{preact_block_forward.5} parent=47 // pred_region
        %p1557 = scmp.lt.s32.totalorder %s18, 1
        %s1558 = scalar_select %p1557, %s18, 1
        %s1559 = smul.addr %s1558, 8
        %s1560 = smul.addr %s1559, 8
        %s1561 = scalar_lea.vmem %s4, %s1560
      $region52: #{preact_block_forward.5} parent=47 // pred_fallthru
        _
      // Predicated region
      $region53: #{preact_block_forward.5} parent=47 // pred_check
        %p1562 = pneg %p156
      $region54: #{preact_block_forward.5} parent=47 // pred_check_branch
        %1564 = sbr.rel (%p1562) target = $region56
      $region55: #{preact_block_forward.5} parent=47 // pred_region
        %p1565 = scmp.lt.s32.totalorder %s18, 1
        %s1566 = scalar_select %p1565, %s18, 1
        %s1567 = smul.addr %s1566, 8
        %s1568 = smul.addr %s1567, 8
        %s1569 = scalar_lea.vmem %s5, %s1568
      $region56: #{preact_block_forward.5} parent=47 // pred_fallthru
        _
    $region48: #{preact_block_forward.5} parent=5 // pred_fallthru
      _
  $region6: #{preact_block_forward.5} parent=0 // loop_footer
    %s16 = sadd.s32 1, %s12
  $region7: #{preact_block_forward.5} parent=0 // loop_footer_branch
    %11 = sbr.rel target = $region3
  $region8: #{preact_block_forward.5} parent=0 // loop_exit
    _

// kernel: preact_block_forward.7
$region0: #{preact_block_forward.7}
  #allocation0 [shape = 'u32[]', space=smem, size = 0x4, offset = 0x4, fixed_abs, tag = 'smem constant byte address 0x4 - core index']
  #allocation1 [shape = 'u32[144,128]{1,0:T(1,128)}', space=vmem, size = 0x12000, scoped, tag = 'internal scratch']
  %s0 = inlined_call_operand.vmem [shape: f32[2,1,10,10,8], index: 0, kind: input, shape index: {}]
  %s1 = inlined_call_operand.vmem [shape: f32[2,8], index: 1, kind: input, shape index: {}]
  %s2 = inlined_call_operand.vmem [shape: bf16[3,3,8,8], index: 2, kind: input, shape index: {}]
  %s3 = inlined_call_operand.vmem [shape: f32[2,8,8,8], index: 3, kind: input, shape index: {}]
  %s4 = inlined_call_operand.vmem [shape: f32[2,8,8,8], index: 4, kind: output, shape index: {}]
  %s5 = sld [smem:[#allocation0]]
  $region49: #{preact_block_forward.7} parent=0
    _
  %s7 = ssub.s32 1, %s5
  %s8 = scalar_select 0, %s7, %s5
  loop: start=0, step=1, limit=4
  $region2: #{preact_block_forward.7} parent=0 // loop_pre_header
    _
  $region3: #{preact_block_forward.7} parent=0 // loop_header
    %s10 = sphi 0, %s14
    %p11 = scmp.ge.s32.totalorder %s10, 4
    %s20 = sphi 0, %s22
    %s23 = sphi 0, %s20
    %s24 = sphi 0, %s23
    %s40 = sphi 0, %s24
    %s44 = sphi 0, %s44
    %s46 = sphi 0, %s44
    %s47 = sphi 0, %s46
    %s61 = sphi 0, %s47
    %s65 = sphi 0, %s65
    %s67 = sphi 0, %s65
    %s68 = sphi 0, %s67
    %s82 = sphi 0, %s68
    %s88 = sphi 0, %s90
    %s91 = sphi 0, %s88
    %s92 = sphi 0, %s91
    %s108 = sphi 0, %s92
    %s114 = sphi 0, %s116
    %s117 = sphi 0, %s114
    %s118 = sphi 0, %s117
    %s134 = sphi 0, %s118
  $region4: #{preact_block_forward.7} parent=0 // loop_header_branch
    %13 = sbr.rel (%p11) target = $region8
  $region5: #{preact_block_forward.7} parent=0 // loop_body
    %s15 = ssub.s32 %s10, 1
    %s16 = ssub.s32 %s10, 2
    %s17 = sadd.s32 %s10, 1
    %s18 = ssub.s32 %s10, %s17
    %p19 = scmp.eq.s32.totalorder %s18, 0
    %s21 = sadd.s32 %s20, 1
    %s22 = scalar_select %p19, %s20, %s21
    %p25 = pneg %p19
    %p26 = scmp.eq.s32.totalorder %s10, 1
    %p27 = por %p25, %p26
    %p28 = scmp.ne.s32.totalorder %s20, %s23
    %p29 = scmp.eq.s32.totalorder %s10, 0
    %p30 = por %p28, %p29
    %p31 = scmp.ne.s32.totalorder %s20, %s23
    %p32 = scmp.eq.s32.totalorder %s15, 1
    %p33 = por %p31, %p32
    %p34 = scmp.ne.s32.totalorder %s23, %s24
    %p35 = scmp.eq.s32.totalorder %s15, 0
    %p36 = por %p34, %p35
    %p37 = scmp.ne.s32.totalorder %s23, %s24
    %p38 = scmp.eq.s32.totalorder %s16, 1
    %p39 = por %p37, %p38
    %p41 = scmp.ne.s32.totalorder %s24, %s40
    %p42 = scmp.eq.s32.totalorder %s16, 0
    %p43 = por %p41, %p42
    %s45 = sadd.s32 %s44, 1
    %p48 = scmp.eq.s32.totalorder %s10, 1
    %p49 = scmp.ne.s32.totalorder %s44, %s46
    %p50 = scmp.eq.s32.totalorder %s10, 0
    %p51 = por %p49, %p50
    %p52 = scmp.ne.s32.totalorder %s44, %s46
    %p53 = scmp.eq.s32.totalorder %s15, 1
    %p54 = por %p52, %p53
    %p55 = scmp.ne.s32.totalorder %s46, %s47
    %p56 = scmp.eq.s32.totalorder %s15, 0
    %p57 = por %p55, %p56
    %p58 = scmp.ne.s32.totalorder %s46, %s47
    %p59 = scmp.eq.s32.totalorder %s16, 1
    %p60 = por %p58, %p59
    %p62 = scmp.ne.s32.totalorder %s47, %s61
    %p63 = scmp.eq.s32.totalorder %s16, 0
    %p64 = por %p62, %p63
    %s66 = sadd.s32 %s65, 1
    %p69 = scmp.eq.s32.totalorder %s10, 1
    %p70 = scmp.ne.s32.totalorder %s65, %s67
    %p71 = scmp.eq.s32.totalorder %s10, 0
    %p72 = por %p70, %p71
    %p73 = scmp.ne.s32.totalorder %s65, %s67
    %p74 = scmp.eq.s32.totalorder %s15, 1
    %p75 = por %p73, %p74
    %p76 = scmp.ne.s32.totalorder %s67, %s68
    %p77 = scmp.eq.s32.totalorder %s15, 0
    %p78 = por %p76, %p77
    %p79 = scmp.ne.s32.totalorder %s67, %s68
    %p80 = scmp.eq.s32.totalorder %s16, 1
    %p81 = por %p79, %p80
    %p83 = scmp.ne.s32.totalorder %s68, %s82
    %p84 = scmp.eq.s32.totalorder %s16, 0
    %p85 = por %p83, %p84
    %s86 = ssub.s32 %s10, %s17
    %p87 = scmp.eq.s32.totalorder %s86, 0
    %s89 = sadd.s32 %s88, 1
    %s90 = scalar_select %p87, %s88, %s89
    %p93 = pneg %p87
    %p94 = scmp.eq.s32.totalorder %s10, 1
    %p95 = por %p93, %p94
    %p96 = scmp.ne.s32.totalorder %s88, %s91
    %p97 = scmp.eq.s32.totalorder %s10, 0
    %p98 = por %p96, %p97
    %p99 = scmp.ne.s32.totalorder %s88, %s91
    %p100 = scmp.eq.s32.totalorder %s15, 1
    %p101 = por %p99, %p100
    %p102 = scmp.ne.s32.totalorder %s91, %s92
    %p103 = scmp.eq.s32.totalorder %s15, 0
    %p104 = por %p102, %p103
    %p105 = scmp.ne.s32.totalorder %s91, %s92
    %p106 = scmp.eq.s32.totalorder %s16, 1
    %p107 = por %p105, %p106
    %p109 = scmp.ne.s32.totalorder %s92, %s108
    %p110 = scmp.eq.s32.totalorder %s16, 0
    %p111 = por %p109, %p110
    %s112 = ssub.s32 %s10, %s17
    %p113 = scmp.eq.s32.totalorder %s112, 0
    %s115 = sadd.s32 %s114, 1
    %s116 = scalar_select %p113, %s114, %s115
    %p119 = pneg %p113
    %p120 = scmp.eq.s32.totalorder %s10, 1
    %p121 = por %p119, %p120
    %p122 = scmp.ne.s32.totalorder %s114, %s117
    %p123 = scmp.eq.s32.totalorder %s10, 0
    %p124 = por %p122, %p123
    %p125 = scmp.ne.s32.totalorder %s114, %s117
    %p126 = scmp.eq.s32.totalorder %s15, 1
    %p127 = por %p125, %p126
    %p128 = scmp.ne.s32.totalorder %s117, %s118
    %p129 = scmp.eq.s32.totalorder %s15, 0
    %p130 = por %p128, %p129
    %p131 = scmp.ne.s32.totalorder %s117, %s118
    %p132 = scmp.eq.s32.totalorder %s16, 1
    %p133 = por %p131, %p132
    %p135 = scmp.ne.s32.totalorder %s118, %s134
    %p136 = scmp.eq.s32.totalorder %s16, 0
    %p137 = por %p135, %p136
    %p138 = scmp.le.s32.totalorder 1, %s10
    %p139 = scmp.lt.s32.totalorder %s10, 3
    %p140 = pnand %p138, %p139
    %p141 = pneg %p140
    // Predicated region
    $region9: #{preact_block_forward.7} parent=5 // pred_check
      _
    $region10: #{preact_block_forward.7} parent=5 // pred_check_branch
      %143 = sbr.rel (%p140) target = $region12
    $region11: #{preact_block_forward.7} parent=5 // pred_region
      %s144 = ssub.s32 %s10, 1
      // Predicated region
      $region13: #{preact_block_forward.7} parent=11 // pred_check
        %p145 = pneg %p57
      $region14: #{preact_block_forward.7} parent=11 // pred_check_branch
        %147 = sbr.rel (%p145) target = $region16
      $region15: #{preact_block_forward.7} parent=11 // pred_region
        _
      $region16: #{preact_block_forward.7} parent=11 // pred_fallthru
        _
      // Predicated region
      $region17: #{preact_block_forward.7} parent=11 // pred_check
        %p148 = pneg %p78
      $region18: #{preact_block_forward.7} parent=11 // pred_check_branch
        %150 = sbr.rel (%p148) target = $region20
      $region19: #{preact_block_forward.7} parent=11 // pred_region
        _
      $region20: #{preact_block_forward.7} parent=11 // pred_fallthru
        _
    $region12: #{preact_block_forward.7} parent=5 // pred_fallthru
      _
    %p151 = scmp.lt.s32.totalorder %s10, 2
    // Predicated region
    $region21: #{preact_block_forward.7} parent=5 // pred_check
      %p152 = pneg %p151
    $region22: #{preact_block_forward.7} parent=5 // pred_check_branch
      %154 = sbr.rel (%p152) target = $region24
    $region23: #{preact_block_forward.7} parent=5 // pred_region
      // Predicated region
      $region25: #{preact_block_forward.7} parent=23 // pred_check
        %p155 = pneg %p30
      $region26: #{preact_block_forward.7} parent=23 // pred_check_branch
        %157 = sbr.rel (%p155) target = $region28
      $region27: #{preact_block_forward.7} parent=23 // pred_region
        %p158 = scmp.lt.s32.totalorder %s10, 1
        %s159 = scalar_select %p158, %s10, 1
        %s160 = smul.addr %s159, 20
        %s161 = smul.addr %s160, 8
        %s162 = scalar_lea.vmem %s0, %s161
      $region28: #{preact_block_forward.7} parent=23 // pred_fallthru
        _
      // Predicated region
      $region29: #{preact_block_forward.7} parent=23 // pred_check
        %p163 = pneg %p98
      $region30: #{preact_block_forward.7} parent=23 // pred_check_branch
        %165 = sbr.rel (%p163) target = $region32
      $region31: #{preact_block_forward.7} parent=23 // pred_region
        %p166 = scmp.lt.s32.totalorder %s10, 1
        %s167 = scalar_select %p166, %s10, 1
        %s168 = smul.addr %s167, 8
        %s169 = smul.addr %s168, 8
        %s170 = scalar_lea.vmem %s3, %s169
      $region32: #{preact_block_forward.7} parent=23 // pred_fallthru
        _
    $region24: #{preact_block_forward.7} parent=5 // pred_fallthru
      _
    %p171 = scmp.le.s32.totalorder 1, %s10
    %p172 = scmp.lt.s32.totalorder %s10, 3
    %p173 = pnand %p171, %p172
    %p174 = pneg %p173
    // Predicated region
    $region33: #{preact_block_forward.7} parent=5 // pred_check
      _
    $region34: #{preact_block_forward.7} parent=5 // pred_check_branch
      %176 = sbr.rel (%p173) target = $region36
    $region35: #{preact_block_forward.7} parent=5 // pred_region
      %s177 = ssub.s32 %s10, 1
      %p178 = scmp.lt.s32.totalorder %s15, 1
      %s179 = scalar_select %p178, %s15, 1
      %s180 = smul.addr %s179, 20
      %s181 = smul.addr %s180, 8
      %s182 = scalar_lea.vmem %s0, %s181
      %p183 = pneg %p36
      %p184 = pneg %p33
      %p185 = pneg %p57
      %p186 = pneg %p54
      %p187 = pneg %p78
      %p188 = pneg %p75
      %p189 = scmp.lt.s32.totalorder %s15, 1
      %s190 = scalar_select %p189, %s15, 1
      %s191 = smul.addr %s190, 8
      %s192 = smul.addr %s191, 8
      %s193 = scalar_lea.vmem %s3, %s192
      %p194 = pneg %p104
      %p195 = pneg %p101
      %p196 = pneg %p130
      %p197 = pneg %p127
      %p198 = scmp.lt.s32.totalorder %s15, 1
      %s199 = scalar_select %p198, %s15, 1
      %s200 = smul.addr %s199, 8
      %s201 = smul.addr %s200, 8
      %s202 = scalar_lea.vmem %s4, %s201
      %p203 = scmp.lt.s32.totalorder %s15, 1
      %s204 = scalar_select %p203, %s15, 1
      %s205 = smul.addr %s204, 20
      %s206 = smul.addr %s205, 8
      %s207 = scalar_lea.vmem %s0, %s206
      %p208 = scmp.lt.s32.totalorder %s15, 1
      %s209 = scalar_select %p208, %s15, 1
      %s210 = smul.addr %s209, 8
      %s211 = smul.addr %s210, 8
      %s212 = scalar_lea.vmem %s3, %s211
      %p213 = scmp.lt.s32.totalorder %s15, 1
      %s214 = scalar_select %p213, %s15, 1
      %s215 = smul.addr %s214, 8
      %s216 = smul.addr %s215, 8
      %s217 = scalar_lea.vmem %s4, %s216
      %v219 = vld [vmem:[%s1] sm:$0x3]
      %v220 = vld [vmem:[%s207] sm:$0xff]
      %v221 = vld [vmem:[%s207 + $0x10] sm:$0xff]
      %v222 = vld [vmem:[%s207 + $0x20] sm:$0xff]
      %v223 = vld [vmem:[%s207 + $0x30] sm:$0xff]
      %v224 = vld [vmem:[%s207 + $0x40] sm:$0xff]
      %v225 = vld [vmem:[%s207 + $0x50] sm:$0xff]
      %v226 = vld [vmem:[%s207 + $0x60] sm:$0xff]
      %v227 = vld [vmem:[%s207 + $0x70] sm:$0xff]
      %v228 = vlaneseq
      %v229 = vshrl.u32 %v228, 7
      %v230 = vsub.s32 0, %v229
      %v231 = vrot.slane %v219, %v230
      %v232 = vmul.f32 %v220, %v231
      %v233 = vmul.f32 %v221, %v231
      %v234 = vmul.f32 %v222, %v231
      %v235 = vmul.f32 %v223, %v231
      %v236 = vmul.f32 %v224, %v231
      %v237 = vmul.f32 %v225, %v231
      %v238 = vmul.f32 %v226, %v231
      %v239 = vmul.f32 %v227, %v231
      %v240 = vlaneseq
      %v241 = vshrl.u32 %v240, 7
      %v242 = vsub.s32 1, %v241
      %v243 = vrot.slane %v219, %v242
      %v244 = vadd.f32 %v232, %v243
      %v245 = vadd.f32 %v233, %v243
      %v246 = vadd.f32 %v234, %v243
      %v247 = vadd.f32 %v235, %v243
      %v248 = vadd.f32 %v236, %v243
      %v249 = vadd.f32 %v237, %v243
      %v250 = vadd.f32 %v238, %v243
      %v251 = vadd.f32 %v239, %v243
      %v252 = vmax.f32 %v244, 0.0
      %v253 = vmax.f32 %v245, 0.0
      %v254 = vmax.f32 %v246, 0.0
      %v255 = vmax.f32 %v247, 0.0
      %v256 = vmax.f32 %v248, 0.0
      %v257 = vmax.f32 %v249, 0.0
      %v258 = vmax.f32 %v250, 0.0
      %v259 = vmax.f32 %v251, 0.0
      %v260 = vlaneseq
      %v261 = vshrl.u32 %v260, 7
      %vm262 = vcmp.eq.s32.totalorder %v261, 0
      %vm263 = vmor 1, %vm262
      %vm264 = vmor 0, %vm262
      %vm265 = vcmp.eq.s32.totalorder %v261, 9
      %vm266 = vmor %vm263, %vm265
      %vm267 = vmor %vm264, %vm265
      %v268 = vsel %vm266, 1, 0
      %v269 = vsel %vm267, 1, 0
      %vm270 = vcmp.eq.s32.totalorder %v268, 1
      %vm271 = vcmp.eq.s32.totalorder %v269, 1
      %v272 = vsel %vm270, 0.0, %v252
      %v273 = vsel %vm271, 0.0, %v253
      %v274 = vsel %vm271, 0.0, %v254
      %v275 = vsel %vm271, 0.0, %v255
      %v276 = vsel %vm271, 0.0, %v256
      %v277 = vsel %vm271, 0.0, %v257
      %v278 = vsel %vm271, 0.0, %v258
      %v279 = vsel %vm271, 0.0, %v259
      %v280 = vpack.c.bf16 %v273, %v272
      %v281 = vpack.c.bf16 %v275, %v274
      %v282 = vpack.c.bf16 %v277, %v276
      %v283 = vpack.c.bf16 %v279, %v278
      %v284 = vld [vmem:[%s2] sm:$0xf]
      %v285 = vld [vmem:[%s207 + $0x1] sm:$0xff]
      %v286 = vld [vmem:[%s207 + $0x11] sm:$0xff]
      %v287 = vld [vmem:[%s207 + $0x21] sm:$0xff]
      %v288 = vld [vmem:[%s207 + $0x31] sm:$0xff]
      %v289 = vld [vmem:[%s207 + $0x41] sm:$0xff]
      %v290 = vld [vmem:[%s207 + $0x51] sm:$0xff]
      %v291 = vld [vmem:[%s207 + $0x61] sm:$0xff]
      %v292 = vld [vmem:[%s207 + $0x71] sm:$0xff]
      %v293 = vmul.f32 %v285, %v231
      %v294 = vmul.f32 %v286, %v231
      %v295 = vmul.f32 %v287, %v231
      %v296 = vmul.f32 %v288, %v231
      %v297 = vmul.f32 %v289, %v231
      %v298 = vmul.f32 %v290, %v231
      %v299 = vmul.f32 %v291, %v231
      %v300 = vmul.f32 %v292, %v231
      %v301 = vadd.f32 %v293, %v243
      %v302 = vadd.f32 %v294, %v243
      %v303 = vadd.f32 %v295, %v243
      %v304 = vadd.f32 %v296, %v243
      %v305 = vadd.f32 %v297, %v243
      %v306 = vadd.f32 %v298, %v243
      %v307 = vadd.f32 %v299, %v243
      %v308 = vadd.f32 %v300, %v243
      %v309 = vmax.f32 %v301, 0.0
      %v310 = vmax.f32 %v302, 0.0
      %v311 = vmax.f32 %v303, 0.0
      %v312 = vmax.f32 %v304, 0.0
      %v313 = vmax.f32 %v305, 0.0
      %v314 = vmax.f32 %v306, 0.0
      %v315 = vmax.f32 %v307, 0.0
      %v316 = vmax.f32 %v308, 0.0
      %v317 = vadd.s32 %v261, 1
      %vm318 = vcmp.eq.s32.totalorder %v317, 0
      %vm319 = vmor 1, %vm318
      %vm320 = vmor 0, %vm318
      %vm321 = vcmp.eq.s32.totalorder %v317, 9
      %vm322 = vmor %vm319, %vm321
      %vm323 = vmor %vm320, %vm321
      %v324 = vsel %vm322, 1, 0
      %v325 = vsel %vm323, 1, 0
      %vm326 = vcmp.eq.s32.totalorder %v324, 1
      %vm327 = vcmp.eq.s32.totalorder %v325, 1
      %v328 = vsel %vm326, 0.0, %v309
      %v329 = vsel %vm327, 0.0, %v310
      %v330 = vsel %vm327, 0.0, %v311
      %v331 = vsel %vm327, 0.0, %v312
      %v332 = vsel %vm327, 0.0, %v313
      %v333 = vsel %vm327, 0.0, %v314
      %v334 = vsel %vm327, 0.0, %v315
      %v335 = vsel %vm327, 0.0, %v316
      %v336 = vpack.c.bf16 %v329, %v328
      %v337 = vpack.c.bf16 %v331, %v330
      %v338 = vpack.c.bf16 %v333, %v332
      %v339 = vpack.c.bf16 %v335, %v334
      %s340 = scalar_lea.vmem %s2, 4
      %v341 = vld [vmem:[%s340] sm:$0xf]
      %vm342 = vcmask 64512
      %v344 = vsel %vm342, %v336, 0
      %v347 = vsel %vm342, %v337, 0
      %v350 = vsel %vm342, %v338, 0
      %v353 = vsel %vm342, %v339, 0
      %vm355 = vcmask 1043456
      %v357 = vsel %vm355, %v341, 0
      %359 = vmatprep.subr.bf16.mxu0 0
      %360 = vmatpush1.bf16.msra.mxu0 %v357
      %361 = vmatprep.subr.bf16.mxu0 0
      %362 = vmatpush1.bf16.msra.mxu0 0
      %363 = vmatprep.subr.bf16.mxu0 0
      %364 = vmatpush1.bf16.msra.mxu0 0
      %365 = vmatprep.subr.bf16.mxu0 0
      %366 = vmatpush1.bf16.msra.mxu0 0
      %367 = vmatprep.subr.bf16.mxu0 0
      %368 = vmatpush1.bf16.msra.mxu0 0
      %369 = vmatprep.subr.bf16.mxu0 0
      %370 = vmatpush1.bf16.msra.mxu0 0
      %371 = vmatprep.subr.bf16.mxu0 0
      %372 = vmatpush1.bf16.msra.mxu0 0
      %373 = vmatprep.subr.bf16.mxu0 0
      %374 = vmatpush1.bf16.msra.mxu0 0
      %375 = vmatprep.subr.bf16.mxu0 0
      %376 = vmatpush1.bf16.msra.mxu0 0
      %377 = vmatprep.subr.bf16.mxu0 0
      %378 = vmatpush1.bf16.msra.mxu0 0
      %379 = vmatprep.subr.bf16.mxu0 0
      %380 = vmatpush1.bf16.msra.mxu0 0
      %381 = vmatprep.subr.bf16.mxu0 0
      %382 = vmatpush1.bf16.msra.mxu0 0
      %383 = vmatprep.subr.bf16.mxu0 0
      %384 = vmatpush1.bf16.msra.mxu0 0
      %385 = vmatprep.subr.bf16.mxu0 0
      %386 = vmatpush1.bf16.msra.mxu0 0
      %387 = vmatprep.subr.bf16.mxu0 0
      %388 = vmatpush1.bf16.msra.mxu0 0
      %389 = vmatprep.subr.bf16.mxu0 0
      %390 = vmatpush1.bf16.msra.mxu0 0
      %391 = vmatprep.mubr.bf16.mxu0 0
      %392 = vmatmul.mubr.bf16.gmra.mrb[0].mxu0 %v344
      %v393 = vpop.f32.mrb[0].mxu0
      %v394 = vadd.f32 0.0, %v393
      %v395 = vpop.f32.mrb[0].mxu0
      %v396 = vpop.f32.mrb[0].mxu0
      %v397 = vadd.f32 0.0, %v396
      %v398 = vpop.f32.mrb[0].mxu0
      %399 = vmatprep.mubr.bf16.mxu0 0
      %400 = vmatmul.mubr.bf16.gmra.mrb[0].mxu0 %v347
      %v401 = vpop.f32.mrb[0].mxu0
      %v402 = vadd.f32 0.0, %v401
      %v403 = vpop.f32.mrb[0].mxu0
      %v404 = vpop.f32.mrb[0].mxu0
      %v405 = vadd.f32 0.0, %v404
      %v406 = vpop.f32.mrb[0].mxu0
      %407 = vmatprep.mubr.bf16.mxu0 0
      %408 = vmatmul.mubr.bf16.gmra.mrb[0].mxu0 %v350
      %v409 = vpop.f32.mrb[0].mxu0
      %v410 = vadd.f32 0.0, %v409
      %v411 = vpop.f32.mrb[0].mxu0
      %v412 = vpop.f32.mrb[0].mxu0
      %v413 = vadd.f32 0.0, %v412
      %v414 = vpop.f32.mrb[0].mxu0
      %415 = vmatprep.mubr.bf16.mxu0 0
      %416 = vmatmul.mubr.bf16.gmra.mrb[0].mxu0 %v353
      %v417 = vpop.f32.mrb[0].mxu0
      %v418 = vadd.f32 0.0, %v417
      %v419 = vpop.f32.mrb[0].mxu0
      %v420 = vpop.f32.mrb[0].mxu0
      %v421 = vadd.f32 0.0, %v420
      %v422 = vpop.f32.mrb[0].mxu0
      %423 = vdwg.mxu0
      %v425 = vsel %vm342, %v280, 0
      %v428 = vsel %vm342, %v281, 0
      %v431 = vsel %vm342, %v282, 0
      %v434 = vsel %vm342, %v283, 0
      %v437 = vsel %vm355, %v284, 0
      %439 = vmatprep.subr.bf16.mxu0 0
      %440 = vmatpush1.bf16.msra.mxu0 %v437
      %441 = vmatprep.subr.bf16.mxu0 0
      %442 = vmatpush1.bf16.msra.mxu0 0
      %443 = vmatprep.subr.bf16.mxu0 0
      %444 = vmatpush1.bf16.msra.mxu0 0
      %445 = vmatprep.subr.bf16.mxu0 0
      %446 = vmatpush1.bf16.msra.mxu0 0
      %447 = vmatprep.subr.bf16.mxu0 0
      %448 = vmatpush1.bf16.msra.mxu0 0
      %449 = vmatprep.subr.bf16.mxu0 0
      %450 = vmatpush1.bf16.msra.mxu0 0
      %451 = vmatprep.subr.bf16.mxu0 0
      %452 = vmatpush1.bf16.msra.mxu0 0
      %453 = vmatprep.subr.bf16.mxu0 0
      %454 = vmatpush1.bf16.msra.mxu0 0
      %455 = vmatprep.subr.bf16.mxu0 0
      %456 = vmatpush1.bf16.msra.mxu0 0
      %457 = vmatprep.subr.bf16.mxu0 0
      %458 = vmatpush1.bf16.msra.mxu0 0
      %459 = vmatprep.subr.bf16.mxu0 0
      %460 = vmatpush1.bf16.msra.mxu0 0
      %461 = vmatprep.subr.bf16.mxu0 0
      %462 = vmatpush1.bf16.msra.mxu0 0
      %463 = vmatprep.subr.bf16.mxu0 0
      %464 = vmatpush1.bf16.msra.mxu0 0
      %465 = vmatprep.subr.bf16.mxu0 0
      %466 = vmatpush1.bf16.msra.mxu0 0
      %467 = vmatprep.subr.bf16.mxu0 0
      %468 = vmatpush1.bf16.msra.mxu0 0
      %469 = vmatprep.subr.bf16.mxu0 0
      %470 = vmatpush1.bf16.msra.mxu0 0
      %471 = vmatprep.mubr.bf16.mxu0 0
      %472 = vmatmul.mubr.bf16.gmra.mrb[0].mxu0 %v425
      %v473 = vpop.f32.mrb[0].mxu0
      %v474 = vadd.f32 %v394, %v473
      %v475 = vpop.f32.mrb[0].mxu0
      %v476 = vpop.f32.mrb[0].mxu0
      %v477 = vadd.f32 %v397, %v476
      %v478 = vpop.f32.mrb[0].mxu0
      %479 = vmatprep.mubr.bf16.mxu0 0
      %480 = vmatmul.mubr.bf16.gmra.mrb[0].mxu0 %v428
      %v481 = vpop.f32.mrb[0].mxu0
      %v482 = vadd.f32 %v402, %v481
      %v483 = vpop.f32.mrb[0].mxu0
      %v484 = vpop.f32.mrb[0].mxu0
      %v485 = vadd.f32 %v405, %v484
      %v486 = vpop.f32.mrb[0].mxu0
      %487 = vmatprep.mubr.bf16.mxu0 0
      %488 = vmatmul.mubr.bf16.gmra.mrb[0].mxu0 %v431
      %v489 = vpop.f32.mrb[0].mxu0
      %v490 = vadd.f32 %v410, %v489
      %v491 = vpop.f32.mrb[0].mxu0
      %v492 = vpop.f32.mrb[0].mxu0
      %v493 = vadd.f32 %v413, %v492
      %v494 = vpop.f32.mrb[0].mxu0
      %495 = vmatprep.mubr.bf16.mxu0 0
      %496 = vmatmul.mubr.bf16.gmra.mrb[0].mxu0 %v434
      %v497 = vpop.f32.mrb[0].mxu0
      %v498 = vadd.f32 %v418, %v497
      %v499 = vpop.f32.mrb[0].mxu0
      %v500 = vpop.f32.mrb[0].mxu0
      %v501 = vadd.f32 %v421, %v500
      %v502 = vpop.f32.mrb[0].mxu0
      %503 = vdwg.mxu0
      %v504 = vld [vmem:[%s207 + $0x2] sm:$0xff]
      %v505 = vld [vmem:[%s207 + $0x12] sm:$0xff]
      %v506 = vld [vmem:[%s207 + $0x22] sm:$0xff]
      %v507 = vld [vmem:[%s207 + $0x32] sm:$0xff]
      %v508 = vld [vmem:[%s207 + $0x42] sm:$0xff]
      %v509 = vld [vmem:[%s207 + $0x52] sm:$0xff]
      %v510 = vld [vmem:[%s207 + $0x62] sm:$0xff]
      %v511 = vld [vmem:[%s207 + $0x72] sm:$0xff]
      %v512 = vmul.f32 %v504, %v231
      %v513 = vmul.f32 %v505, %v231
      %v514 = vmul.f32 %v506, %v231
      %v515 = vmul.f32 %v507, %v231
      %v516 = vmul.f32 %v508, %v231
      %v517 = vmul.f32 %v509, %v231
      %v518 = vmul.f32 %v510, %v231
      %v519 = vmul.f32 %v511, %v231
      %v520 = vadd.f32 %v512, %v243
      %v521 = vadd.f32 %v513, %v243
      %v522 = vadd.f32 %v514, %v243
      %v523 = vadd.f32 %v515, %v243
      %v524 = vadd.f32 %v516, %v243
      %v525 = vadd.f32 %v517, %v243
      %v526 = vadd.f32 %v518, %v243
      %v527 = vadd.f32 %v519, %v243
      %v528 = vmax.f32 %v520, 0.0
      %v529 = vmax.f32 %v521, 0.0
      %v530 = vmax.f32 %v522, 0.0
      %v531 = vmax.f32 %v523, 0.0
      %v532 = vmax.f32 %v524, 0.0
      %v533 = vmax.f32 %v525, 0.0
      %v534 = vmax.f32 %v526, 0.0
      %v535 = vmax.f32 %v527, 0.0
      %v536 = vadd.s32 %v261, 2
      %vm537 = vcmp.eq.s32.totalorder %v536, 0
      %vm538 = vmor 1, %vm537
      %vm539 = vmor 0, %vm537
      %vm540 = vcmp.eq.s32.totalorder %v536, 9
      %vm541 = vmor %vm538, %vm540
      %vm542 = vmor %vm539, %vm540
      %v543 = vsel %vm541, 1, 0
      %v544 = vsel %vm542, 1, 0
      %vm545 = vcmp.eq.s32.totalorder %v543, 1
      %vm546 = vcmp.eq.s32.totalorder %v544, 1
      %v547 = vsel %vm545, 0.0, %v528
      %v548 = vsel %vm546, 0.0, %v529
      %v549 = vsel %vm546, 0.0, %v530
      %v550 = vsel %vm546, 0.0, %v531
      %v551 = vsel %vm546, 0.0, %v532
      %v552 = vsel %vm546, 0.0, %v533
      %v553 = vsel %vm546, 0.0, %v534
      %v554 = vsel %vm546, 0.0, %v535
      %v555 = vpack.c.bf16 %v548, %v547
      %v556 = vpack.c.bf16 %v550, %v549
      %v557 = vpack.c.bf16 %v552, %v551
      %v558 = vpack.c.bf16 %v554, %v553
      %s559 = scalar_lea.vmem %s2, 8
      %v560 = vld [vmem:[%s559] sm:$0xf]
      %v562 = vsel %vm342, %v555, 0
      %v565 = vsel %vm342, %v556, 0
      %v568 = vsel %vm342, %v557, 0
      %v571 = vsel %vm342, %v558, 0
      %v574 = vsel %vm355, %v560, 0
      %576 = vmatprep.subr.bf16.mxu0 0
      %577 = vmatpush1.bf16.msra.mxu0 %v574
      %578 = vmatprep.subr.bf16.mxu0 0
      %579 = vmatpush1.bf16.msra.mxu0 0
      %580 = vmatprep.subr.bf16.mxu0 0
      %581 = vmatpush1.bf16.msra.mxu0 0
      %582 = vmatprep.subr.bf16.mxu0 0
      %583 = vmatpush1.bf16.msra.mxu0 0
      %584 = vmatprep.subr.bf16.mxu0 0
      %585 = vmatpush1.bf16.msra.mxu0 0
      %586 = vmatprep.subr.bf16.mxu0 0
      %587 = vmatpush1.bf16.msra.mxu0 0
      %588 = vmatprep.subr.bf16.mxu0 0
      %589 = vmatpush1.bf16.msra.mxu0 0
      %590 = vmatprep.subr.bf16.mxu0 0
      %591 = vmatpush1.bf16.msra.mxu0 0
      %592 = vmatprep.subr.bf16.mxu0 0
      %593 = vmatpush1.bf16.msra.mxu0 0
      %594 = vmatprep.subr.bf16.mxu0 0
      %595 = vmatpush1.bf16.msra.mxu0 0
      %596 = vmatprep.subr.bf16.mxu0 0
      %597 = vmatpush1.bf16.msra.mxu0 0
      %598 = vmatprep.subr.bf16.mxu0 0
      %599 = vmatpush1.bf16.msra.mxu0 0
      %600 = vmatprep.subr.bf16.mxu0 0
      %601 = vmatpush1.bf16.msra.mxu0 0
      %602 = vmatprep.subr.bf16.mxu0 0
      %603 = vmatpush1.bf16.msra.mxu0 0
      %604 = vmatprep.subr.bf16.mxu0 0
      %605 = vmatpush1.bf16.msra.mxu0 0
      %606 = vmatprep.subr.bf16.mxu0 0
      %607 = vmatpush1.bf16.msra.mxu0 0
      %608 = vmatprep.mubr.bf16.mxu0 0
      %609 = vmatmul.mubr.bf16.gmra.mrb[0].mxu0 %v562
      %v610 = vpop.f32.mrb[0].mxu0
      %v611 = vadd.f32 0.0, %v610
      %v612 = vpop.f32.mrb[0].mxu0
      %v613 = vpop.f32.mrb[0].mxu0
      %v614 = vadd.f32 0.0, %v613
      %v615 = vpop.f32.mrb[0].mxu0
      %616 = vmatprep.mubr.bf16.mxu0 0
      %617 = vmatmul.mubr.bf16.gmra.mrb[0].mxu0 %v565
      %v618 = vpop.f32.mrb[0].mxu0
      %v619 = vadd.f32 0.0, %v618
      %v620 = vpop.f32.mrb[0].mxu0
      %v621 = vpop.f32.mrb[0].mxu0
      %v622 = vadd.f32 0.0, %v621
      %v623 = vpop.f32.mrb[0].mxu0
      %624 = vmatprep.mubr.bf16.mxu0 0
      %625 = vmatmul.mubr.bf16.gmra.mrb[0].mxu0 %v568
      %v626 = vpop.f32.mrb[0].mxu0
      %v627 = vadd.f32 0.0, %v626
      %v628 = vpop.f32.mrb[0].mxu0
      %v629 = vpop.f32.mrb[0].mxu0
      %v630 = vadd.f32 0.0, %v629
      %v631 = vpop.f32.mrb[0].mxu0
      %632 = vmatprep.mubr.bf16.mxu0 0
      %633 = vmatmul.mubr.bf16.gmra.mrb[0].mxu0 %v571
      %v634 = vpop.f32.mrb[0].mxu0
      %v635 = vadd.f32 0.0, %v634
      %v636 = vpop.f32.mrb[0].mxu0
      %v637 = vpop.f32.mrb[0].mxu0
      %v638 = vadd.f32 0.0, %v637
      %v639 = vpop.f32.mrb[0].mxu0
      %640 = vdwg.mxu0
      %v641 = vadd.f32 %v474, %v611
      %v642 = vadd.f32 %v477, %v614
      %v643 = vadd.f32 %v482, %v619
      %v644 = vadd.f32 %v485, %v622
      %v645 = vadd.f32 %v490, %v627
      %v646 = vadd.f32 %v493, %v630
      %v647 = vadd.f32 %v498, %v635
      %v648 = vadd.f32 %v501, %v638
      %s649 = scalar_lea.vmem %s207, 16
      %v650 = vld [vmem:[%s649] sm:$0xff]
      %v651 = vld [vmem:[%s649 + $0x10] sm:$0xff]
      %v652 = vld [vmem:[%s649 + $0x20] sm:$0xff]
      %v653 = vld [vmem:[%s649 + $0x30] sm:$0xff]
      %v654 = vld [vmem:[%s649 + $0x40] sm:$0xff]
      %v655 = vld [vmem:[%s649 + $0x50] sm:$0xff]
      %v656 = vld [vmem:[%s649 + $0x60] sm:$0xff]
      %v657 = vld [vmem:[%s649 + $0x70] sm:$0xff]
      %v658 = vmul.f32 %v650, %v231
      %v659 = vmul.f32 %v651, %v231
      %v660 = vmul.f32 %v652, %v231
      %v661 = vmul.f32 %v653, %v231
      %v662 = vmul.f32 %v654, %v231
      %v663 = vmul.f32 %v655, %v231
      %v664 = vmul.f32 %v656, %v231
      %v665 = vmul.f32 %v657, %v231
      %v666 = vadd.f32 %v658, %v243
      %v667 = vadd.f32 %v659, %v243
      %v668 = vadd.f32 %v660, %v243
      %v669 = vadd.f32 %v661, %v243
      %v670 = vadd.f32 %v662, %v243
      %v671 = vadd.f32 %v663, %v243
      %v672 = vadd.f32 %v664, %v243
      %v673 = vadd.f32 %v665, %v243
      %v674 = vmax.f32 %v666, 0.0
      %v675 = vmax.f32 %v667, 0.0
      %v676 = vmax.f32 %v668, 0.0
      %v677 = vmax.f32 %v669, 0.0
      %v678 = vmax.f32 %v670, 0.0
      %v679 = vmax.f32 %v671, 0.0
      %v680 = vmax.f32 %v672, 0.0
      %v681 = vmax.f32 %v673, 0.0
      %v682 = vsel %vm271, 0.0, %v674
      %v683 = vsel %vm271, 0.0, %v675
      %v684 = vsel %vm271, 0.0, %v676
      %v685 = vsel %vm271, 0.0, %v677
      %v686 = vsel %vm271, 0.0, %v678
      %v687 = vsel %vm271, 0.0, %v679
      %v688 = vsel %vm271, 0.0, %v680
      %v689 = vsel %vm271, 0.0, %v681
      %v690 = vpack.c.bf16 %v683, %v682
      %v691 = vpack.c.bf16 %v685, %v684
      %v692 = vpack.c.bf16 %v687, %v686
      %v693 = vpack.c.bf16 %v689, %v688
      %s694 = scalar_lea.vmem %s2, 12
      %v695 = vld [vmem:[%s694] sm:$0xf]
      %v697 = vsel %vm342, %v690, 0
      %v700 = vsel %vm342, %v691, 0
      %v703 = vsel %vm342, %v692, 0
      %v706 = vsel %vm342, %v693, 0
      %v709 = vsel %vm355, %v695, 0
      %711 = vmatprep.subr.bf16.mxu0 0
      %712 = vmatpush1.bf16.msra.mxu0 %v709
      %713 = vmatprep.subr.bf16.mxu0 0
      %714 = vmatpush1.bf16.msra.mxu0 0
      %715 = vmatprep.subr.bf16.mxu0 0
      %716 = vmatpush1.bf16.msra.mxu0 0
      %717 = vmatprep.subr.bf16.mxu0 0
      %718 = vmatpush1.bf16.msra.mxu0 0
      %719 = vmatprep.subr.bf16.mxu0 0
      %720 = vmatpush1.bf16.msra.mxu0 0
      %721 = vmatprep.subr.bf16.mxu0 0
      %722 = vmatpush1.bf16.msra.mxu0 0
      %723 = vmatprep.subr.bf16.mxu0 0
      %724 = vmatpush1.bf16.msra.mxu0 0
      %725 = vmatprep.subr.bf16.mxu0 0
      %726 = vmatpush1.bf16.msra.mxu0 0
      %727 = vmatprep.subr.bf16.mxu0 0
      %728 = vmatpush1.bf16.msra.mxu0 0
      %729 = vmatprep.subr.bf16.mxu0 0
      %730 = vmatpush1.bf16.msra.mxu0 0
      %731 = vmatprep.subr.bf16.mxu0 0
      %732 = vmatpush1.bf16.msra.mxu0 0
      %733 = vmatprep.subr.bf16.mxu0 0
      %734 = vmatpush1.bf16.msra.mxu0 0
      %735 = vmatprep.subr.bf16.mxu0 0
      %736 = vmatpush1.bf16.msra.mxu0 0
      %737 = vmatprep.subr.bf16.mxu0 0
      %738 = vmatpush1.bf16.msra.mxu0 0
      %739 = vmatprep.subr.bf16.mxu0 0
      %740 = vmatpush1.bf16.msra.mxu0 0
      %741 = vmatprep.subr.bf16.mxu0 0
      %742 = vmatpush1.bf16.msra.mxu0 0
      %743 = vmatprep.mubr.bf16.mxu0 0
      %744 = vmatmul.mubr.bf16.gmra.mrb[0].mxu0 %v697
      %v745 = vpop.f32.mrb[0].mxu0
      %v746 = vadd.f32 0.0, %v745
      %v747 = vpop.f32.mrb[0].mxu0
      %v748 = vpop.f32.mrb[0].mxu0
      %v749 = vadd.f32 0.0, %v748
      %v750 = vpop.f32.mrb[0].mxu0
      %751 = vmatprep.mubr.bf16.mxu0 0
      %752 = vmatmul.mubr.bf16.gmra.mrb[0].mxu0 %v700
      %v753 = vpop.f32.mrb[0].mxu0
      %v754 = vadd.f32 0.0, %v753
      %v755 = vpop.f32.mrb[0].mxu0
      %v756 = vpop.f32.mrb[0].mxu0
      %v757 = vadd.f32 0.0, %v756
      %v758 = vpop.f32.mrb[0].mxu0
      %759 = vmatprep.mubr.bf16.mxu0 0
      %760 = vmatmul.mubr.bf16.gmra.mrb[0].mxu0 %v703
      %v761 = vpop.f32.mrb[0].mxu0
      %v762 = vadd.f32 0.0, %v761
      %v763 = vpop.f32.mrb[0].mxu0
      %v764 = vpop.f32.mrb[0].mxu0
      %v765 = vadd.f32 0.0, %v764
      %v766 = vpop.f32.mrb[0].mxu0
      %767 = vmatprep.mubr.bf16.mxu0 0
      %768 = vmatmul.mubr.bf16.gmra.mrb[0].mxu0 %v706
      %v769 = vpop.f32.mrb[0].mxu0
      %v770 = vadd.f32 0.0, %v769
      %v771 = vpop.f32.mrb[0].mxu0
      %v772 = vpop.f32.mrb[0].mxu0
      %v773 = vadd.f32 0.0, %v772
      %v774 = vpop.f32.mrb[0].mxu0
      %775 = vdwg.mxu0
      %v776 = vadd.f32 %v641, %v746
      %v777 = vadd.f32 %v642, %v749
      %v778 = vadd.f32 %v643, %v754
      %v779 = vadd.f32 %v644, %v757
      %v780 = vadd.f32 %v645, %v762
      %v781 = vadd.f32 %v646, %v765
      %v782 = vadd.f32 %v647, %v770
      %v783 = vadd.f32 %v648, %v773
      %v784 = vld [vmem:[%s649 + $0x1] sm:$0xff]
      %v785 = vld [vmem:[%s649 + $0x11] sm:$0xff]
      %v786 = vld [vmem:[%s649 + $0x21] sm:$0xff]
      %v787 = vld [vmem:[%s649 + $0x31] sm:$0xff]
      %v788 = vld [vmem:[%s649 + $0x41] sm:$0xff]
      %v789 = vld [vmem:[%s649 + $0x51] sm:$0xff]
      %v790 = vld [vmem:[%s649 + $0x61] sm:$0xff]
      %v791 = vld [vmem:[%s649 + $0x71] sm:$0xff]
      %v792 = vmul.f32 %v784, %v231
      %v793 = vmul.f32 %v785, %v231
      %v794 = vmul.f32 %v786, %v231
      %v795 = vmul.f32 %v787, %v231
      %v796 = vmul.f32 %v788, %v231
      %v797 = vmul.f32 %v789, %v231
      %v798 = vmul.f32 %v790, %v231
      %v799 = vmul.f32 %v791, %v231
      %v800 = vadd.f32 %v792, %v243
      %v801 = vadd.f32 %v793, %v243
      %v802 = vadd.f32 %v794, %v243
      %v803 = vadd.f32 %v795, %v243
      %v804 = vadd.f32 %v796, %v243
      %v805 = vadd.f32 %v797, %v243
      %v806 = vadd.f32 %v798, %v243
      %v807 = vadd.f32 %v799, %v243
      %v808 = vmax.f32 %v800, 0.0
      %v809 = vmax.f32 %v801, 0.0
      %v810 = vmax.f32 %v802, 0.0
      %v811 = vmax.f32 %v803, 0.0
      %v812 = vmax.f32 %v804, 0.0
      %v813 = vmax.f32 %v805, 0.0
      %v814 = vmax.f32 %v806, 0.0
      %v815 = vmax.f32 %v807, 0.0
      %v816 = vpack.c.bf16 %v809, %v808
      %v817 = vpack.c.bf16 %v811, %v810
      %v818 = vpack.c.bf16 %v813, %v812
      %v819 = vpack.c.bf16 %v815, %v814
      %s820 = scalar_lea.vmem %s2, 16
      %v821 = vld [vmem:[%s820] sm:$0xf]
      %v823 = vsel %vm342, %v816, 0
      %v826 = vsel %vm342, %v817, 0
      %v829 = vsel %vm342, %v818, 0
      %v832 = vsel %vm342, %v819, 0
      %v835 = vsel %vm355, %v821, 0
      %837 = vmatprep.subr.bf16.mxu0 0
      %838 = vmatpush1.bf16.msra.mxu0 %v835
      %839 = vmatprep.subr.bf16.mxu0 0
      %840 = vmatpush1.bf16.msra.mxu0 0
      %841 = vmatprep.subr.bf16.mxu0 0
      %842 = vmatpush1.bf16.msra.mxu0 0
      %843 = vmatprep.subr.bf16.mxu0 0
      %844 = vmatpush1.bf16.msra.mxu0 0
      %845 = vmatprep.subr.bf16.mxu0 0
      %846 = vmatpush1.bf16.msra.mxu0 0
      %847 = vmatprep.subr.bf16.mxu0 0
      %848 = vmatpush1.bf16.msra.mxu0 0
      %849 = vmatprep.subr.bf16.mxu0 0
      %850 = vmatpush1.bf16.msra.mxu0 0
      %851 = vmatprep.subr.bf16.mxu0 0
      %852 = vmatpush1.bf16.msra.mxu0 0
      %853 = vmatprep.subr.bf16.mxu0 0
      %854 = vmatpush1.bf16.msra.mxu0 0
      %855 = vmatprep.subr.bf16.mxu0 0
      %856 = vmatpush1.bf16.msra.mxu0 0
      %857 = vmatprep.subr.bf16.mxu0 0
      %858 = vmatpush1.bf16.msra.mxu0 0
      %859 = vmatprep.subr.bf16.mxu0 0
      %860 = vmatpush1.bf16.msra.mxu0 0
      %861 = vmatprep.subr.bf16.mxu0 0
      %862 = vmatpush1.bf16.msra.mxu0 0
      %863 = vmatprep.subr.bf16.mxu0 0
      %864 = vmatpush1.bf16.msra.mxu0 0
      %865 = vmatprep.subr.bf16.mxu0 0
      %866 = vmatpush1.bf16.msra.mxu0 0
      %867 = vmatprep.subr.bf16.mxu0 0
      %868 = vmatpush1.bf16.msra.mxu0 0
      %869 = vmatprep.mubr.bf16.mxu0 0
      %870 = vmatmul.mubr.bf16.gmra.mrb[0].mxu0 %v823
      %v871 = vpop.f32.mrb[0].mxu0
      %v872 = vadd.f32 0.0, %v871
      %v873 = vpop.f32.mrb[0].mxu0
      %v874 = vpop.f32.mrb[0].mxu0
      %v875 = vadd.f32 0.0, %v874
      %v876 = vpop.f32.mrb[0].mxu0
      %877 = vmatprep.mubr.bf16.mxu0 0
      %878 = vmatmul.mubr.bf16.gmra.mrb[0].mxu0 %v826
      %v879 = vpop.f32.mrb[0].mxu0
      %v880 = vadd.f32 0.0, %v879
      %v881 = vpop.f32.mrb[0].mxu0
      %v882 = vpop.f32.mrb[0].mxu0
      %v883 = vadd.f32 0.0, %v882
      %v884 = vpop.f32.mrb[0].mxu0
      %885 = vmatprep.mubr.bf16.mxu0 0
      %886 = vmatmul.mubr.bf16.gmra.mrb[0].mxu0 %v829
      %v887 = vpop.f32.mrb[0].mxu0
      %v888 = vadd.f32 0.0, %v887
      %v889 = vpop.f32.mrb[0].mxu0
      %v890 = vpop.f32.mrb[0].mxu0
      %v891 = vadd.f32 0.0, %v890
      %v892 = vpop.f32.mrb[0].mxu0
      %893 = vmatprep.mubr.bf16.mxu0 0
      %894 = vmatmul.mubr.bf16.gmra.mrb[0].mxu0 %v832
      %v895 = vpop.f32.mrb[0].mxu0
      %v896 = vadd.f32 0.0, %v895
      %v897 = vpop.f32.mrb[0].mxu0
      %v898 = vpop.f32.mrb[0].mxu0
      %v899 = vadd.f32 0.0, %v898
      %v900 = vpop.f32.mrb[0].mxu0
      %901 = vdwg.mxu0
      %v902 = vadd.f32 %v776, %v872
      %v903 = vadd.f32 %v777, %v875
      %v904 = vadd.f32 %v778, %v880
      %v905 = vadd.f32 %v779, %v883
      %v906 = vadd.f32 %v780, %v888
      %v907 = vadd.f32 %v781, %v891
      %v908 = vadd.f32 %v782, %v896
      %v909 = vadd.f32 %v783, %v899
      %v910 = vld [vmem:[%s649 + $0x2] sm:$0xff]
      %v911 = vld [vmem:[%s649 + $0x12] sm:$0xff]
      %v912 = vld [vmem:[%s649 + $0x22] sm:$0xff]
      %v913 = vld [vmem:[%s649 + $0x32] sm:$0xff]
      %v914 = vld [vmem:[%s649 + $0x42] sm:$0xff]
      %v915 = vld [vmem:[%s649 + $0x52] sm:$0xff]
      %v916 = vld [vmem:[%s649 + $0x62] sm:$0xff]
      %v917 = vld [vmem:[%s649 + $0x72] sm:$0xff]
      %v918 = vmul.f32 %v910, %v231
      %v919 = vmul.f32 %v911, %v231
      %v920 = vmul.f32 %v912, %v231
      %v921 = vmul.f32 %v913, %v231
      %v922 = vmul.f32 %v914, %v231
      %v923 = vmul.f32 %v915, %v231
      %v924 = vmul.f32 %v916, %v231
      %v925 = vmul.f32 %v917, %v231
      %v926 = vadd.f32 %v918, %v243
      %v927 = vadd.f32 %v919, %v243
      %v928 = vadd.f32 %v920, %v243
      %v929 = vadd.f32 %v921, %v243
      %v930 = vadd.f32 %v922, %v243
      %v931 = vadd.f32 %v923, %v243
      %v932 = vadd.f32 %v924, %v243
      %v933 = vadd.f32 %v925, %v243
      %v934 = vmax.f32 %v926, 0.0
      %v935 = vmax.f32 %v927, 0.0
      %v936 = vmax.f32 %v928, 0.0
      %v937 = vmax.f32 %v929, 0.0
      %v938 = vmax.f32 %v930, 0.0
      %v939 = vmax.f32 %v931, 0.0
      %v940 = vmax.f32 %v932, 0.0
      %v941 = vmax.f32 %v933, 0.0
      %v942 = vsel %vm546, 0.0, %v934
      %v943 = vsel %vm546, 0.0, %v935
      %v944 = vsel %vm546, 0.0, %v936
      %v945 = vsel %vm546, 0.0, %v937
      %v946 = vsel %vm546, 0.0, %v938
      %v947 = vsel %vm546, 0.0, %v939
      %v948 = vsel %vm546, 0.0, %v940
      %v949 = vsel %vm546, 0.0, %v941
      %v950 = vpack.c.bf16 %v943, %v942
      %v951 = vpack.c.bf16 %v945, %v944
      %v952 = vpack.c.bf16 %v947, %v946
      %v953 = vpack.c.bf16 %v949, %v948
      %s954 = scalar_lea.vmem %s2, 20
      %v955 = vld [vmem:[%s954] sm:$0xf]
      %v957 = vsel %vm342, %v950, 0
      %v960 = vsel %vm342, %v951, 0
      %v963 = vsel %vm342, %v952, 0
      %v966 = vsel %vm342, %v953, 0
      %v969 = vsel %vm355, %v955, 0
      %971 = vmatprep.subr.bf16.mxu0 0
      %972 = vmatpush1.bf16.msra.mxu0 %v969
      %973 = vmatprep.subr.bf16.mxu0 0
      %974 = vmatpush1.bf16.msra.mxu0 0
      %975 = vmatprep.subr.bf16.mxu0 0
      %976 = vmatpush1.bf16.msra.mxu0 0
      %977 = vmatprep.subr.bf16.mxu0 0
      %978 = vmatpush1.bf16.msra.mxu0 0
      %979 = vmatprep.subr.bf16.mxu0 0
      %980 = vmatpush1.bf16.msra.mxu0 0
      %981 = vmatprep.subr.bf16.mxu0 0
      %982 = vmatpush1.bf16.msra.mxu0 0
      %983 = vmatprep.subr.bf16.mxu0 0
      %984 = vmatpush1.bf16.msra.mxu0 0
      %985 = vmatprep.subr.bf16.mxu0 0
      %986 = vmatpush1.bf16.msra.mxu0 0
      %987 = vmatprep.subr.bf16.mxu0 0
      %988 = vmatpush1.bf16.msra.mxu0 0
      %989 = vmatprep.subr.bf16.mxu0 0
      %990 = vmatpush1.bf16.msra.mxu0 0
      %991 = vmatprep.subr.bf16.mxu0 0
      %992 = vmatpush1.bf16.msra.mxu0 0
      %993 = vmatprep.subr.bf16.mxu0 0
      %994 = vmatpush1.bf16.msra.mxu0 0
      %995 = vmatprep.subr.bf16.mxu0 0
      %996 = vmatpush1.bf16.msra.mxu0 0
      %997 = vmatprep.subr.bf16.mxu0 0
      %998 = vmatpush1.bf16.msra.mxu0 0
      %999 = vmatprep.subr.bf16.mxu0 0
      %1000 = vmatpush1.bf16.msra.mxu0 0
      %1001 = vmatprep.subr.bf16.mxu0 0
      %1002 = vmatpush1.bf16.msra.mxu0 0
      %1003 = vmatprep.mubr.bf16.mxu0 0
      %1004 = vmatmul.mubr.bf16.gmra.mrb[0].mxu0 %v957
      %v1005 = vpop.f32.mrb[0].mxu0
      %v1006 = vadd.f32 0.0, %v1005
      %v1007 = vpop.f32.mrb[0].mxu0
      %v1008 = vpop.f32.mrb[0].mxu0
      %v1009 = vadd.f32 0.0, %v1008
      %v1010 = vpop.f32.mrb[0].mxu0
      %1011 = vmatprep.mubr.bf16.mxu0 0
      %1012 = vmatmul.mubr.bf16.gmra.mrb[0].mxu0 %v960
      %v1013 = vpop.f32.mrb[0].mxu0
      %v1014 = vadd.f32 0.0, %v1013
      %v1015 = vpop.f32.mrb[0].mxu0
      %v1016 = vpop.f32.mrb[0].mxu0
      %v1017 = vadd.f32 0.0, %v1016
      %v1018 = vpop.f32.mrb[0].mxu0
      %1019 = vmatprep.mubr.bf16.mxu0 0
      %1020 = vmatmul.mubr.bf16.gmra.mrb[0].mxu0 %v963
      %v1021 = vpop.f32.mrb[0].mxu0
      %v1022 = vadd.f32 0.0, %v1021
      %v1023 = vpop.f32.mrb[0].mxu0
      %v1024 = vpop.f32.mrb[0].mxu0
      %v1025 = vadd.f32 0.0, %v1024
      %v1026 = vpop.f32.mrb[0].mxu0
      %1027 = vmatprep.mubr.bf16.mxu0 0
      %1028 = vmatmul.mubr.bf16.gmra.mrb[0].mxu0 %v966
      %v1029 = vpop.f32.mrb[0].mxu0
      %v1030 = vadd.f32 0.0, %v1029
      %v1031 = vpop.f32.mrb[0].mxu0
      %v1032 = vpop.f32.mrb[0].mxu0
      %v1033 = vadd.f32 0.0, %v1032
      %v1034 = vpop.f32.mrb[0].mxu0
      %1035 = vdwg.mxu0
      %v1036 = vadd.f32 %v902, %v1006
      %v1037 = vadd.f32 %v903, %v1009
      %v1038 = vadd.f32 %v904, %v1014
      %v1039 = vadd.f32 %v905, %v1017
      %v1040 = vadd.f32 %v906, %v1022
      %v1041 = vadd.f32 %v907, %v1025
      %v1042 = vadd.f32 %v908, %v1030
      %v1043 = vadd.f32 %v909, %v1033
      %s1044 = scalar_lea.vmem %s207, 32
      %v1045 = vld [vmem:[%s1044] sm:$0xff]
      %v1046 = vld [vmem:[%s1044 + $0x10] sm:$0xff]
      %v1047 = vld [vmem:[%s1044 + $0x20] sm:$0xff]
      %v1048 = vld [vmem:[%s1044 + $0x30] sm:$0xff]
      %v1049 = vld [vmem:[%s1044 + $0x40] sm:$0xff]
      %v1050 = vld [vmem:[%s1044 + $0x50] sm:$0xff]
      %v1051 = vld [vmem:[%s1044 + $0x60] sm:$0xff]
      %v1052 = vld [vmem:[%s1044 + $0x70] sm:$0xff]
      %v1053 = vmul.f32 %v1045, %v231
      %v1054 = vmul.f32 %v1046, %v231
      %v1055 = vmul.f32 %v1047, %v231
      %v1056 = vmul.f32 %v1048, %v231
      %v1057 = vmul.f32 %v1049, %v231
      %v1058 = vmul.f32 %v1050, %v231
      %v1059 = vmul.f32 %v1051, %v231
      %v1060 = vmul.f32 %v1052, %v231
      %v1061 = vadd.f32 %v1053, %v243
      %v1062 = vadd.f32 %v1054, %v243
      %v1063 = vadd.f32 %v1055, %v243
      %v1064 = vadd.f32 %v1056, %v243
      %v1065 = vadd.f32 %v1057, %v243
      %v1066 = vadd.f32 %v1058, %v243
      %v1067 = vadd.f32 %v1059, %v243
      %v1068 = vadd.f32 %v1060, %v243
      %v1069 = vmax.f32 %v1061, 0.0
      %v1070 = vmax.f32 %v1062, 0.0
      %v1071 = vmax.f32 %v1063, 0.0
      %v1072 = vmax.f32 %v1064, 0.0
      %v1073 = vmax.f32 %v1065, 0.0
      %v1074 = vmax.f32 %v1066, 0.0
      %v1075 = vmax.f32 %v1067, 0.0
      %v1076 = vmax.f32 %v1068, 0.0
      %v1077 = vsel %vm271, 0.0, %v1069
      %v1078 = vsel %vm271, 0.0, %v1070
      %v1079 = vsel %vm271, 0.0, %v1071
      %v1080 = vsel %vm271, 0.0, %v1072
      %v1081 = vsel %vm271, 0.0, %v1073
      %v1082 = vsel %vm271, 0.0, %v1074
      %v1083 = vsel %vm271, 0.0, %v1075
      %v1084 = vsel %vm270, 0.0, %v1076
      %v1085 = vpack.c.bf16 %v1078, %v1077
      %v1086 = vpack.c.bf16 %v1080, %v1079
      %v1087 = vpack.c.bf16 %v1082, %v1081
      %v1088 = vpack.c.bf16 %v1084, %v1083
      %s1089 = scalar_lea.vmem %s2, 24
      %v1090 = vld [vmem:[%s1089] sm:$0xf]
      %v1092 = vsel %vm342, %v1085, 0
      %v1095 = vsel %vm342, %v1086, 0
      %v1098 = vsel %vm342, %v1087, 0
      %v1101 = vsel %vm342, %v1088, 0
      %v1104 = vsel %vm355, %v1090, 0
      %1106 = vmatprep.subr.bf16.mxu0 0
      %1107 = vmatpush1.bf16.msra.mxu0 %v1104
      %1108 = vmatprep.subr.bf16.mxu0 0
      %1109 = vmatpush1.bf16.msra.mxu0 0
      %1110 = vmatprep.subr.bf16.mxu0 0
      %1111 = vmatpush1.bf16.msra.mxu0 0
      %1112 = vmatprep.subr.bf16.mxu0 0
      %1113 = vmatpush1.bf16.msra.mxu0 0
      %1114 = vmatprep.subr.bf16.mxu0 0
      %1115 = vmatpush1.bf16.msra.mxu0 0
      %1116 = vmatprep.subr.bf16.mxu0 0
      %1117 = vmatpush1.bf16.msra.mxu0 0
      %1118 = vmatprep.subr.bf16.mxu0 0
      %1119 = vmatpush1.bf16.msra.mxu0 0
      %1120 = vmatprep.subr.bf16.mxu0 0
      %1121 = vmatpush1.bf16.msra.mxu0 0
      %1122 = vmatprep.subr.bf16.mxu0 0
      %1123 = vmatpush1.bf16.msra.mxu0 0
      %1124 = vmatprep.subr.bf16.mxu0 0
      %1125 = vmatpush1.bf16.msra.mxu0 0
      %1126 = vmatprep.subr.bf16.mxu0 0
      %1127 = vmatpush1.bf16.msra.mxu0 0
      %1128 = vmatprep.subr.bf16.mxu0 0
      %1129 = vmatpush1.bf16.msra.mxu0 0
      %1130 = vmatprep.subr.bf16.mxu0 0
      %1131 = vmatpush1.bf16.msra.mxu0 0
      %1132 = vmatprep.subr.bf16.mxu0 0
      %1133 = vmatpush1.bf16.msra.mxu0 0
      %1134 = vmatprep.subr.bf16.mxu0 0
      %1135 = vmatpush1.bf16.msra.mxu0 0
      %1136 = vmatprep.subr.bf16.mxu0 0
      %1137 = vmatpush1.bf16.msra.mxu0 0
      %1138 = vmatprep.mubr.bf16.mxu0 0
      %1139 = vmatmul.mubr.bf16.gmra.mrb[0].mxu0 %v1092
      %v1140 = vpop.f32.mrb[0].mxu0
      %v1141 = vadd.f32 0.0, %v1140
      %v1142 = vpop.f32.mrb[0].mxu0
      %v1143 = vpop.f32.mrb[0].mxu0
      %v1144 = vadd.f32 0.0, %v1143
      %v1145 = vpop.f32.mrb[0].mxu0
      %1146 = vmatprep.mubr.bf16.mxu0 0
      %1147 = vmatmul.mubr.bf16.gmra.mrb[0].mxu0 %v1095
      %v1148 = vpop.f32.mrb[0].mxu0
      %v1149 = vadd.f32 0.0, %v1148
      %v1150 = vpop.f32.mrb[0].mxu0
      %v1151 = vpop.f32.mrb[0].mxu0
      %v1152 = vadd.f32 0.0, %v1151
      %v1153 = vpop.f32.mrb[0].mxu0
      %1154 = vmatprep.mubr.bf16.mxu0 0
      %1155 = vmatmul.mubr.bf16.gmra.mrb[0].mxu0 %v1098
      %v1156 = vpop.f32.mrb[0].mxu0
      %v1157 = vadd.f32 0.0, %v1156
      %v1158 = vpop.f32.mrb[0].mxu0
      %v1159 = vpop.f32.mrb[0].mxu0
      %v1160 = vadd.f32 0.0, %v1159
      %v1161 = vpop.f32.mrb[0].mxu0
      %1162 = vmatprep.mubr.bf16.mxu0 0
      %1163 = vmatmul.mubr.bf16.gmra.mrb[0].mxu0 %v1101
      %v1164 = vpop.f32.mrb[0].mxu0
      %v1165 = vadd.f32 0.0, %v1164
      %v1166 = vpop.f32.mrb[0].mxu0
      %v1167 = vpop.f32.mrb[0].mxu0
      %v1168 = vadd.f32 0.0, %v1167
      %v1169 = vpop.f32.mrb[0].mxu0
      %1170 = vdwg.mxu0
      %v1171 = vadd.f32 %v1036, %v1141
      %v1172 = vadd.f32 %v1037, %v1144
      %v1173 = vadd.f32 %v1038, %v1149
      %v1174 = vadd.f32 %v1039, %v1152
      %v1175 = vadd.f32 %v1040, %v1157
      %v1176 = vadd.f32 %v1041, %v1160
      %v1177 = vadd.f32 %v1042, %v1165
      %v1178 = vadd.f32 %v1043, %v1168
      %v1179 = vld [vmem:[%s1044 + $0x1] sm:$0xff]
      %v1180 = vld [vmem:[%s1044 + $0x11] sm:$0xff]
      %v1181 = vld [vmem:[%s1044 + $0x21] sm:$0xff]
      %v1182 = vld [vmem:[%s1044 + $0x31] sm:$0xff]
      %v1183 = vld [vmem:[%s1044 + $0x41] sm:$0xff]
      %v1184 = vld [vmem:[%s1044 + $0x51] sm:$0xff]
      %v1185 = vld [vmem:[%s1044 + $0x61] sm:$0xff]
      %v1186 = vld [vmem:[%s1044 + $0x71] sm:$0xff]
      %v1187 = vmul.f32 %v1179, %v231
      %v1188 = vmul.f32 %v1180, %v231
      %v1189 = vmul.f32 %v1181, %v231
      %v1190 = vmul.f32 %v1182, %v231
      %v1191 = vmul.f32 %v1183, %v231
      %v1192 = vmul.f32 %v1184, %v231
      %v1193 = vmul.f32 %v1185, %v231
      %v1194 = vmul.f32 %v1186, %v231
      %v1195 = vadd.f32 %v1187, %v243
      %v1196 = vadd.f32 %v1188, %v243
      %v1197 = vadd.f32 %v1189, %v243
      %v1198 = vadd.f32 %v1190, %v243
      %v1199 = vadd.f32 %v1191, %v243
      %v1200 = vadd.f32 %v1192, %v243
      %v1201 = vadd.f32 %v1193, %v243
      %v1202 = vadd.f32 %v1194, %v243
      %v1203 = vmax.f32 %v1195, 0.0
      %v1204 = vmax.f32 %v1196, 0.0
      %v1205 = vmax.f32 %v1197, 0.0
      %v1206 = vmax.f32 %v1198, 0.0
      %v1207 = vmax.f32 %v1199, 0.0
      %v1208 = vmax.f32 %v1200, 0.0
      %v1209 = vmax.f32 %v1201, 0.0
      %v1210 = vmax.f32 %v1202, 0.0
      %v1211 = vsel %vm327, 0.0, %v1203
      %v1212 = vsel %vm327, 0.0, %v1204
      %v1213 = vsel %vm327, 0.0, %v1205
      %v1214 = vsel %vm327, 0.0, %v1206
      %v1215 = vsel %vm327, 0.0, %v1207
      %v1216 = vsel %vm327, 0.0, %v1208
      %v1217 = vsel %vm327, 0.0, %v1209
      %v1218 = vsel %vm326, 0.0, %v1210
      %v1219 = vpack.c.bf16 %v1212, %v1211
      %v1220 = vpack.c.bf16 %v1214, %v1213
      %v1221 = vpack.c.bf16 %v1216, %v1215
      %v1222 = vpack.c.bf16 %v1218, %v1217
      %s1223 = scalar_lea.vmem %s2, 28
      %v1224 = vld [vmem:[%s1223] sm:$0xf]
      %v1226 = vsel %vm342, %v1219, 0
      %v1229 = vsel %vm342, %v1220, 0
      %v1232 = vsel %vm342, %v1221, 0
      %v1235 = vsel %vm342, %v1222, 0
      %v1238 = vsel %vm355, %v1224, 0
      %1240 = vmatprep.subr.bf16.mxu0 0
      %1241 = vmatpush1.bf16.msra.mxu0 %v1238
      %1242 = vmatprep.subr.bf16.mxu0 0
      %1243 = vmatpush1.bf16.msra.mxu0 0
      %1244 = vmatprep.subr.bf16.mxu0 0
      %1245 = vmatpush1.bf16.msra.mxu0 0
      %1246 = vmatprep.subr.bf16.mxu0 0
      %1247 = vmatpush1.bf16.msra.mxu0 0
      %1248 = vmatprep.subr.bf16.mxu0 0
      %1249 = vmatpush1.bf16.msra.mxu0 0
      %1250 = vmatprep.subr.bf16.mxu0 0
      %1251 = vmatpush1.bf16.msra.mxu0 0
      %1252 = vmatprep.subr.bf16.mxu0 0
      %1253 = vmatpush1.bf16.msra.mxu0 0
      %1254 = vmatprep.subr.bf16.mxu0 0
      %1255 = vmatpush1.bf16.msra.mxu0 0
      %1256 = vmatprep.subr.bf16.mxu0 0
      %1257 = vmatpush1.bf16.msra.mxu0 0
      %1258 = vmatprep.subr.bf16.mxu0 0
      %1259 = vmatpush1.bf16.msra.mxu0 0
      %1260 = vmatprep.subr.bf16.mxu0 0
      %1261 = vmatpush1.bf16.msra.mxu0 0
      %1262 = vmatprep.subr.bf16.mxu0 0
      %1263 = vmatpush1.bf16.msra.mxu0 0
      %1264 = vmatprep.subr.bf16.mxu0 0
      %1265 = vmatpush1.bf16.msra.mxu0 0
      %1266 = vmatprep.subr.bf16.mxu0 0
      %1267 = vmatpush1.bf16.msra.mxu0 0
      %1268 = vmatprep.subr.bf16.mxu0 0
      %1269 = vmatpush1.bf16.msra.mxu0 0
      %1270 = vmatprep.subr.bf16.mxu0 0
      %1271 = vmatpush1.bf16.msra.mxu0 0
      %1272 = vmatprep.mubr.bf16.mxu0 0
      %1273 = vmatmul.mubr.bf16.gmra.mrb[0].mxu0 %v1226
      %v1274 = vpop.f32.mrb[0].mxu0
      %v1275 = vadd.f32 0.0, %v1274
      %v1276 = vpop.f32.mrb[0].mxu0
      %v1277 = vpop.f32.mrb[0].mxu0
      %v1278 = vadd.f32 0.0, %v1277
      %v1279 = vpop.f32.mrb[0].mxu0
      %1280 = vmatprep.mubr.bf16.mxu0 0
      %1281 = vmatmul.mubr.bf16.gmra.mrb[0].mxu0 %v1229
      %v1282 = vpop.f32.mrb[0].mxu0
      %v1283 = vadd.f32 0.0, %v1282
      %v1284 = vpop.f32.mrb[0].mxu0
      %v1285 = vpop.f32.mrb[0].mxu0
      %v1286 = vadd.f32 0.0, %v1285
      %v1287 = vpop.f32.mrb[0].mxu0
      %1288 = vmatprep.mubr.bf16.mxu0 0
      %1289 = vmatmul.mubr.bf16.gmra.mrb[0].mxu0 %v1232
      %v1290 = vpop.f32.mrb[0].mxu0
      %v1291 = vadd.f32 0.0, %v1290
      %v1292 = vpop.f32.mrb[0].mxu0
      %v1293 = vpop.f32.mrb[0].mxu0
      %v1294 = vadd.f32 0.0, %v1293
      %v1295 = vpop.f32.mrb[0].mxu0
      %1296 = vmatprep.mubr.bf16.mxu0 0
      %1297 = vmatmul.mubr.bf16.gmra.mrb[0].mxu0 %v1235
      %v1298 = vpop.f32.mrb[0].mxu0
      %v1299 = vadd.f32 0.0, %v1298
      %v1300 = vpop.f32.mrb[0].mxu0
      %v1301 = vpop.f32.mrb[0].mxu0
      %v1302 = vadd.f32 0.0, %v1301
      %v1303 = vpop.f32.mrb[0].mxu0
      %1304 = vdwg.mxu0
      %v1305 = vadd.f32 %v1171, %v1275
      %v1306 = vadd.f32 %v1172, %v1278
      %v1307 = vadd.f32 %v1173, %v1283
      %v1308 = vadd.f32 %v1174, %v1286
      %v1309 = vadd.f32 %v1175, %v1291
      %v1310 = vadd.f32 %v1176, %v1294
      %v1311 = vadd.f32 %v1177, %v1299
      %v1312 = vadd.f32 %v1178, %v1302
      %v1313 = vld [vmem:[%s1044 + $0x2] sm:$0xff]
      %v1314 = vld [vmem:[%s1044 + $0x12] sm:$0xff]
      %v1315 = vld [vmem:[%s1044 + $0x22] sm:$0xff]
      %v1316 = vld [vmem:[%s1044 + $0x32] sm:$0xff]
      %v1317 = vld [vmem:[%s1044 + $0x42] sm:$0xff]
      %v1318 = vld [vmem:[%s1044 + $0x52] sm:$0xff]
      %v1319 = vld [vmem:[%s1044 + $0x62] sm:$0xff]
      %v1320 = vld [vmem:[%s1044 + $0x72] sm:$0xff]
      %v1321 = vmul.f32 %v1313, %v231
      %v1322 = vmul.f32 %v1314, %v231
      %v1323 = vmul.f32 %v1315, %v231
      %v1324 = vmul.f32 %v1316, %v231
      %v1325 = vmul.f32 %v1317, %v231
      %v1326 = vmul.f32 %v1318, %v231
      %v1327 = vmul.f32 %v1319, %v231
      %v1328 = vmul.f32 %v1320, %v231
      %v1329 = vadd.f32 %v1321, %v243
      %v1330 = vadd.f32 %v1322, %v243
      %v1331 = vadd.f32 %v1323, %v243
      %v1332 = vadd.f32 %v1324, %v243
      %v1333 = vadd.f32 %v1325, %v243
      %v1334 = vadd.f32 %v1326, %v243
      %v1335 = vadd.f32 %v1327, %v243
      %v1336 = vadd.f32 %v1328, %v243
      %v1337 = vmax.f32 %v1329, 0.0
      %v1338 = vmax.f32 %v1330, 0.0
      %v1339 = vmax.f32 %v1331, 0.0
      %v1340 = vmax.f32 %v1332, 0.0
      %v1341 = vmax.f32 %v1333, 0.0
      %v1342 = vmax.f32 %v1334, 0.0
      %v1343 = vmax.f32 %v1335, 0.0
      %v1344 = vmax.f32 %v1336, 0.0
      %v1345 = vsel %vm546, 0.0, %v1337
      %v1346 = vsel %vm546, 0.0, %v1338
      %v1347 = vsel %vm546, 0.0, %v1339
      %v1348 = vsel %vm546, 0.0, %v1340
      %v1349 = vsel %vm546, 0.0, %v1341
      %v1350 = vsel %vm546, 0.0, %v1342
      %v1351 = vsel %vm546, 0.0, %v1343
      %v1352 = vsel %vm545, 0.0, %v1344
      %v1353 = vpack.c.bf16 %v1346, %v1345
      %v1354 = vpack.c.bf16 %v1348, %v1347
      %v1355 = vpack.c.bf16 %v1350, %v1349
      %v1356 = vpack.c.bf16 %v1352, %v1351
      %s1357 = scalar_lea.vmem %s2, 32
      %v1358 = vld [vmem:[%s1357] sm:$0xf]
      %v1360 = vsel %vm342, %v1353, 0
      %v1363 = vsel %vm342, %v1354, 0
      %v1366 = vsel %vm342, %v1355, 0
      %v1369 = vsel %vm342, %v1356, 0
      %v1372 = vsel %vm355, %v1358, 0
      %1374 = vmatprep.subr.bf16.mxu0 0
      %1375 = vmatpush1.bf16.msra.mxu0 %v1372
      %1376 = vmatprep.subr.bf16.mxu0 0
      %1377 = vmatpush1.bf16.msra.mxu0 0
      %1378 = vmatprep.subr.bf16.mxu0 0
      %1379 = vmatpush1.bf16.msra.mxu0 0
      %1380 = vmatprep.subr.bf16.mxu0 0
      %1381 = vmatpush1.bf16.msra.mxu0 0
      %1382 = vmatprep.subr.bf16.mxu0 0
      %1383 = vmatpush1.bf16.msra.mxu0 0
      %1384 = vmatprep.subr.bf16.mxu0 0
      %1385 = vmatpush1.bf16.msra.mxu0 0
      %1386 = vmatprep.subr.bf16.mxu0 0
      %1387 = vmatpush1.bf16.msra.mxu0 0
      %1388 = vmatprep.subr.bf16.mxu0 0
      %1389 = vmatpush1.bf16.msra.mxu0 0
      %1390 = vmatprep.subr.bf16.mxu0 0
      %1391 = vmatpush1.bf16.msra.mxu0 0
      %1392 = vmatprep.subr.bf16.mxu0 0
      %1393 = vmatpush1.bf16.msra.mxu0 0
      %1394 = vmatprep.subr.bf16.mxu0 0
      %1395 = vmatpush1.bf16.msra.mxu0 0
      %1396 = vmatprep.subr.bf16.mxu0 0
      %1397 = vmatpush1.bf16.msra.mxu0 0
      %1398 = vmatprep.subr.bf16.mxu0 0
      %1399 = vmatpush1.bf16.msra.mxu0 0
      %1400 = vmatprep.subr.bf16.mxu0 0
      %1401 = vmatpush1.bf16.msra.mxu0 0
      %1402 = vmatprep.subr.bf16.mxu0 0
      %1403 = vmatpush1.bf16.msra.mxu0 0
      %1404 = vmatprep.subr.bf16.mxu0 0
      %1405 = vmatpush1.bf16.msra.mxu0 0
      %1406 = vmatprep.mubr.bf16.mxu0 0
      %1407 = vmatmul.mubr.bf16.gmra.mrb[0].mxu0 %v1360
      %v1408 = vpop.f32.mrb[0].mxu0
      %v1409 = vadd.f32 0.0, %v1408
      %v1410 = vpop.f32.mrb[0].mxu0
      %v1411 = vpop.f32.mrb[0].mxu0
      %v1412 = vadd.f32 0.0, %v1411
      %v1413 = vpop.f32.mrb[0].mxu0
      %1414 = vmatprep.mubr.bf16.mxu0 0
      %1415 = vmatmul.mubr.bf16.gmra.mrb[0].mxu0 %v1363
      %v1416 = vpop.f32.mrb[0].mxu0
      %v1417 = vadd.f32 0.0, %v1416
      %v1418 = vpop.f32.mrb[0].mxu0
      %v1419 = vpop.f32.mrb[0].mxu0
      %v1420 = vadd.f32 0.0, %v1419
      %v1421 = vpop.f32.mrb[0].mxu0
      %1422 = vmatprep.mubr.bf16.mxu0 0
      %1423 = vmatmul.mubr.bf16.gmra.mrb[0].mxu0 %v1366
      %v1424 = vpop.f32.mrb[0].mxu0
      %v1425 = vadd.f32 0.0, %v1424
      %v1426 = vpop.f32.mrb[0].mxu0
      %v1427 = vpop.f32.mrb[0].mxu0
      %v1428 = vadd.f32 0.0, %v1427
      %v1429 = vpop.f32.mrb[0].mxu0
      %1430 = vmatprep.mubr.bf16.mxu0 0
      %1431 = vmatmul.mubr.bf16.gmra.mrb[0].mxu0 %v1369
      %v1432 = vpop.f32.mrb[0].mxu0
      %v1433 = vadd.f32 0.0, %v1432
      %v1434 = vpop.f32.mrb[0].mxu0
      %v1435 = vpop.f32.mrb[0].mxu0
      %v1436 = vadd.f32 0.0, %v1435
      %v1437 = vpop.f32.mrb[0].mxu0
      %1438 = vdwg.mxu0
      %v1439 = vadd.f32 %v1305, %v1409
      %v1440 = vadd.f32 %v1306, %v1412
      %v1441 = vadd.f32 %v1307, %v1417
      %v1442 = vadd.f32 %v1308, %v1420
      %v1443 = vadd.f32 %v1309, %v1425
      %v1444 = vadd.f32 %v1310, %v1428
      %v1445 = vadd.f32 %v1311, %v1433
      %v1446 = vadd.f32 %v1312, %v1436
      %v1447 = vld [vmem:[%s212] sm:$0xff]
      %v1448 = vld [vmem:[%s212 + $0x8] sm:$0xff]
      %v1449 = vld [vmem:[%s212 + $0x10] sm:$0xff]
      %v1450 = vld [vmem:[%s212 + $0x18] sm:$0xff]
      %v1451 = vld [vmem:[%s212 + $0x20] sm:$0xff]
      %v1452 = vld [vmem:[%s212 + $0x28] sm:$0xff]
      %v1453 = vld [vmem:[%s212 + $0x30] sm:$0xff]
      %v1454 = vld [vmem:[%s212 + $0x38] sm:$0xff]
      %v1455 = vadd.f32 %v1439, %v1447
      %v1456 = vadd.f32 %v1440, %v1448
      %v1457 = vadd.f32 %v1441, %v1449
      %v1458 = vadd.f32 %v1442, %v1450
      %v1459 = vadd.f32 %v1443, %v1451
      %v1460 = vadd.f32 %v1444, %v1452
      %v1461 = vadd.f32 %v1445, %v1453
      %v1462 = vadd.f32 %v1446, %v1454
      %1463 = vst.msk [vmem:[%s217] sm:$0xff] %vm342, %v1455
      %1464 = vst.msk [vmem:[%s217 + $0x8] sm:$0xff] %vm342, %v1456
      %1465 = vst.msk [vmem:[%s217 + $0x10] sm:$0xff] %vm342, %v1457
      %1466 = vst.msk [vmem:[%s217 + $0x18] sm:$0xff] %vm342, %v1458
      %1467 = vst.msk [vmem:[%s217 + $0x20] sm:$0xff] %vm342, %v1459
      %1468 = vst.msk [vmem:[%s217 + $0x28] sm:$0xff] %vm342, %v1460
      %1469 = vst.msk [vmem:[%s217 + $0x30] sm:$0xff] %vm342, %v1461
      %1470 = vst.msk [vmem:[%s217 + $0x38] sm:$0xff] %vm342, %v1462
      %p1471 = scmp.lt.s32.totalorder %s15, 1
      %s1472 = scalar_select %p1471, %s15, 1
      %s1473 = smul.addr %s1472, 8
      %s1474 = smul.addr %s1473, 8
      %s1475 = scalar_lea.vmem %s4, %s1474
      // Predicated region
      $region37: #{preact_block_forward.7} parent=35 // pred_check
        %p1476 = pneg %p127
      $region38: #{preact_block_forward.7} parent=35 // pred_check_branch
        %1478 = sbr.rel (%p1476) target = $region40
      $region39: #{preact_block_forward.7} parent=35 // pred_region
        _
      $region40: #{preact_block_forward.7} parent=35 // pred_fallthru
        _
    $region36: #{preact_block_forward.7} parent=5 // pred_fallthru
      _
    %p1479 = scmp.le.s32.totalorder 2, %s10
    // Predicated region
    $region41: #{preact_block_forward.7} parent=5 // pred_check
      %p1480 = pneg %p1479
    $region42: #{preact_block_forward.7} parent=5 // pred_check_branch
      %1482 = sbr.rel (%p1480) target = $region44
    $region43: #{preact_block_forward.7} parent=5 // pred_region
      %s1483 = ssub.s32 %s10, 2
      // Predicated region
      $region45: #{preact_block_forward.7} parent=43 // pred_check
        %p1484 = pneg %p133
      $region46: #{preact_block_forward.7} parent=43 // pred_check_branch
        %1486 = sbr.rel (%p1484) target = $region48
      $region47: #{preact_block_forward.7} parent=43 // pred_region
        %p1487 = scmp.lt.s32.totalorder %s16, 1
        %s1488 = scalar_select %p1487, %s16, 1
        %s1489 = smul.addr %s1488, 8
        %s1490 = smul.addr %s1489, 8
        %s1491 = scalar_lea.vmem %s4, %s1490
      $region48: #{preact_block_forward.7} parent=43 // pred_fallthru
        _
    $region44: #{preact_block_forward.7} parent=5 // pred_fallthru
      _
  $region6: #{preact_block_forward.7} parent=0 // loop_footer
    %s14 = sadd.s32 1, %s10
  $region7: #{preact_block_forward.7} parent=0 // loop_footer_branch
    %9 = sbr.rel target = $region3
  $region8: #{preact_block_forward.7} parent=0 // loop_exit
    _

</llo_original>
